<compile_context>
chip_gen: v6e
topology: v6e:2x2x1
jax: 0.10.0
libtpu: 0.0.40
codegen_flags: <defaults>
</compile_context>

<pallas_src>
import functools

import jax
import jax.numpy as jnp
from jax import lax
from jax.experimental import pallas as pl
from jax.experimental.pallas import tpu as pltpu


# ----------------------------------------------------------------------------
# Pallas kernel: multi-layer GRU over time + length masking + output Linear.
# Time-major (S, TB, H) per batch tile.  Weights are fused per layer as
# (H, 3H) [r|z|n] and pre-transposed in the wrapper (bf16 operands).
# ----------------------------------------------------------------------------
def _recovery_kernel(x_ref,        # (S, TB, H)   time-major hidden sequence (f32)
                     len_ref,      # (TB, 1)      int32 valid lengths
                     w_ih_ref,     # (L, H, 3H)   input->gates, transposed, bf16
                     w_hh_ref,     # (L, H, 3H)   hidden->gates, transposed, bf16
                     b_ih_ref,     # (L, 1, 3H)   f32
                     b_hh_ref,     # (L, 1, 3H)   f32
                     w_lin_ref,    # (H, F)       output Linear, transposed, bf16
                     b_lin_ref,    # (1, F)       f32
                     out_ref,      # (S, TB, F)
                     gx_ref,       # (S, TB, 3H)  scratch: layer-0 input gates;
                                   #              lanes [0:H) reused as h-stash
                     *,
                     padding_value: float,
                     num_layers: int,
                     time_unroll):
    S, TB, Hd = x_ref.shape
    F = out_ref.shape[-1]
    L = num_layers
    H3 = 3 * Hd

    # Hoist only the small bias rows.  The (H, 3H) weight matrices are indexed
    # from their VMEM Refs inside the loop (re-vld is ~free, spilling is not).
    b_ih = [b_ih_ref[l] for l in range(L)]            # (1, 3H) each
    b_hh = [b_hh_ref[l] for l in range(L)]

    # Layer-0 input projection: no recurrent dependency -> one fused
    # (S*TB, H) x (H, 3H) bf16 MXU matmul for all (t, b) rows and all 3 gates.
    x_bf = x_ref[...].astype(jnp.bfloat16).reshape(S * TB, Hd)
    gi0 = jnp.dot(x_bf, w_ih_ref[0], preferred_element_type=jnp.float32) + b_ih[0]
    gx_ref[...] = gi0.reshape(S, TB, H3)

    def gru_cell(gi, h_prev, w_hh_l, b_hh_l):
        # Single fused (TB, H) x (H, 3H) matmul for the hidden path.
        gh = jnp.dot(h_prev.astype(jnp.bfloat16), w_hh_l,
                     preferred_element_type=jnp.float32) + b_hh_l
        pre_r = gi[:, 0:Hd] + gh[:, 0:Hd]
        pre_z = gi[:, Hd:2 * Hd] + gh[:, Hd:2 * Hd]
        # sigmoid with the divide routed to the EUP (approx reciprocal).
        r = pl.reciprocal(1.0 + jnp.exp(-pre_r), approx=True)
        z = pl.reciprocal(1.0 + jnp.exp(-pre_z), approx=True)
        n = jnp.tanh(gi[:, 2 * Hd:H3] + r * gh[:, 2 * Hd:H3])
        return (1.0 - z) * n + z * h_prev              # f32 carried state

    def step(t, hs):
        hs = list(hs)
        gi = gx_ref[t]                                  # (TB, 3H) precomputed
        h_new = gru_cell(gi, hs[0], w_hh_ref[0], b_hh[0])
        hs[0] = h_new
        inp = h_new
        for l in range(1, L):
            gi_l = jnp.dot(inp.astype(jnp.bfloat16), w_ih_ref[l],
                           preferred_element_type=jnp.float32) + b_ih[l]
            h_new = gru_cell(gi_l, hs[l], w_hh_ref[l], b_hh[l])
            hs[l] = h_new
            inp = h_new
        # Stash the raw top-layer hidden state by reusing the consumed r-gate
        # lanes of this step's gate scratch: no extra VMEM buffer and no
        # per-step mask/select on the serial critical path.
        gx_ref[t, :, 0:Hd] = inp
        return tuple(hs)

    h0 = tuple(jnp.zeros((TB, Hd), jnp.float32) for _ in range(L))
    lax.fori_loop(0, S, step, h0, unroll=time_unroll)

    # pad_packed_sequence semantics: one bulk mask over the whole stash (VPU
    # work that overlaps the Linear's MXU time), then one fused Linear and a
    # single block store.
    lengths = len_ref[...]                              # (TB, 1) int32
    t_idx = lax.broadcasted_iota(jnp.int32, (S, TB, 1), 0)
    h_all = jnp.where(t_idx < lengths[None, :, :], gx_ref[:, :, 0:Hd],
                      jnp.float32(padding_value))
    y = (jnp.dot(h_all.reshape(S * TB, Hd).astype(jnp.bfloat16), w_lin_ref[...],
                 preferred_element_type=jnp.float32) + b_lin_ref[...])
    # TODO(synk): output last dim F << 128 -> masked vst; only worth a
    # lane-dense epilogue restructure if F grows or the store slot saturates.
    out_ref[...] = y.reshape(S, TB, F).astype(out_ref.dtype)


# ----------------------------------------------------------------------------
# Wrapper: fused/transposed bf16 weights, batch padding/tiling, grid +
# BlockSpecs, generation-aware VMEM budget, compiler params.
# ----------------------------------------------------------------------------
def recovery_network_forward(H, T, params, *, padding_value, max_seq_len):
    """H: (B, S, hidden) float32, T: (B,) int32 lengths. Returns (B, max_seq_len, F)."""
    B, S_in, Hd = H.shape
    L = params["w_ih"].shape[0]
    F = params["w_lin"].shape[0]
    S = int(max_seq_len)

    # Pad / truncate the time axis to max_seq_len (total_length semantics).
    if S_in < S:
        H = jnp.pad(H, ((0, 0), (0, S - S_in), (0, 0)))
    H = H[:, :S]

    # Fused per-layer (H, 3H) [r|z|n] weights, bf16 matmul operands
    # (accumulation stays f32 inside the kernel via preferred_element_type).
    w_ih_t = jnp.transpose(params["w_ih"], (0, 2, 1)).astype(jnp.bfloat16)   # (L,H,3H)
    w_hh_t = jnp.transpose(params["w_hh"], (0, 2, 1)).astype(jnp.bfloat16)   # (L,H,3H)
    b_ih_k = params["b_ih"].reshape(L, 1, 3 * Hd).astype(jnp.float32)
    b_hh_k = params["b_hh"].reshape(L, 1, 3 * Hd).astype(jnp.float32)
    w_lin_t = jnp.transpose(params["w_lin"], (1, 0)).astype(jnp.bfloat16)    # (H, F)
    b_lin_k = params["b_lin"][None, :].astype(jnp.float32)                   # (1, F)

    weight_bytes = int(2 * (w_ih_t.size + w_hh_t.size + w_lin_t.size)
                       + 4 * (b_ih_k.size + b_hh_k.size + b_lin_k.size))

    def est_vmem(tb):
        blocks = 4 * S * tb * (Hd + F)          # f32 input block + output block
        scratch = 4 * S * tb * 3 * Hd           # fused gate / stash scratch (f32)
        return 2 * blocks + 2 * weight_bytes + scratch + (2 << 20)

    # Generation-aware VMEM budget (v5e/v6e: 128 MiB, v7x: 64 MiB per TC),
    # leaving headroom for compiler-internal scratch.
    try:
        vmem_cap = int(pltpu.get_tpu_info().vmem_capacity_bytes)
    except Exception:
        vmem_cap = 64 << 20                     # assume the tightest (v7x)
    vmem_usable = int(vmem_cap * 0.85)

    # Batch tiling: >=8 rows per tile (f32 sublane), <=128 rows per grid step,
    # and >=2 grid steps whenever B can fill two >=8-row tiles so the
    # "parallel" batch axis shards across both v7x TensorCores.
    if B > 8:
        TB = min(128, ((pl.cdiv(B, 2) + 7) // 8) * 8)
    else:
        TB = ((max(B, 1) + 7) // 8) * 8
    while TB > 8 and est_vmem(TB) > vmem_usable:
        TB = max(8, ((TB // 2) // 8) * 8)
    Bp = pl.cdiv(B, TB) * TB

    if Bp > B:
        H = jnp.pad(H, ((0, Bp - B), (0, 0), (0, 0)))
    lengths = jnp.pad(T.astype(jnp.int32), (0, Bp - B)).reshape(Bp, 1)

    # TODO(synk): v5e could avoid this wrapper-side HBM transpose by taking
    # (B,S,H) blocks and restaging time-major in-kernel; kept as-is since the
    # serial recurrence (not HBM) dominates and the layout is known-good.
    x_tm = jnp.transpose(H, (1, 0, 2)).astype(jnp.float32)       # (S, Bp, Hd)

    vmem_limit = int(min(vmem_usable, max(32 << 20, est_vmem(TB))))
    time_unroll = True if S <= 32 else 2

    kernel = functools.partial(
        _recovery_kernel,
        padding_value=float(padding_value),
        num_layers=int(L),
        time_unroll=time_unroll,
    )

    def full(a):  # full-array block for weights/biases (constant index map)
        return pl.BlockSpec(a.shape, lambda b, nd=a.ndim: (0,) * nd)

    cost = pl.CostEstimate(
        flops=int(Bp * S * (L * 12 * Hd * Hd + 2 * Hd * F)),
        transcendentals=int(Bp * S * L * 3 * Hd),
        bytes_accessed=int(4 * (x_tm.size + S * Bp * F) + weight_bytes),
    )

    out_tm = pl.pallas_call(
        kernel,
        out_shape=jax.ShapeDtypeStruct((S, Bp, F), jnp.float32),
        grid=(Bp // TB,),
        in_specs=[
            pl.BlockSpec((S, TB, Hd), lambda b: (0, b, 0)),
            pl.BlockSpec((TB, 1), lambda b: (b, 0)),
            full(w_ih_t), full(w_hh_t), full(b_ih_k), full(b_hh_k),
            full(w_lin_t), full(b_lin_k),
        ],
        out_specs=pl.BlockSpec((S, TB, F), lambda b: (0, b, 0)),
        scratch_shapes=[
            pltpu.VMEM((S, TB, 3 * Hd), jnp.float32),   # fused gates + h stash
        ],
        compiler_params=pltpu.CompilerParams(
            dimension_semantics=("parallel",),
            vmem_limit_bytes=vmem_limit,
        ),
        cost_estimate=cost,
    )(x_tm, lengths, w_ih_t, w_hh_t, b_ih_k, b_hh_k, w_lin_t, b_lin_k)

    return jnp.transpose(out_tm, (1, 0, 2))[:B]                  # (B, S, F)


# ----------------------------------------------------------------------------
# Deterministic parameter init (mirrors nn.GRU / nn.Linear shapes).
# ----------------------------------------------------------------------------
def init_params(key, feature_dim, hidden_dim, num_layers):
    ks = jax.random.split(key, 6)
    bound = 1.0 / jnp.sqrt(hidden_dim)
    # input_size == hidden_dim for every layer in this module.
    w_ih = jax.random.uniform(ks[0], (num_layers, 3 * hidden_dim, hidden_dim),
                              jnp.float32, -bound, bound)
    w_hh = jax.random.uniform(ks[1], (num_layers, 3 * hidden_dim, hidden_dim),
                              jnp.float32, -bound, bound)
    b_ih = jax.random.uniform(ks[2], (num_layers, 3 * hidden_dim),
                              jnp.float32, -bound, bound)
    b_hh = jax.random.uniform(ks[3], (num_layers, 3 * hidden_dim),
                              jnp.float32, -bound, bound)
    w_lin = jax.random.uniform(ks[4], (feature_dim, hidden_dim),
                               jnp.float32, -bound, bound)
    b_lin = jax.random.uniform(ks[5], (feature_dim,),
                               jnp.float32, -bound, bound)
    return dict(w_ih=w_ih, w_hh=w_hh, b_ih=b_ih, b_hh=b_hh,
                w_lin=w_lin, b_lin=b_lin)


# ----------------------------------------------------------------------------
# Pure-JAX f32 reference (same math, no Pallas) for a correctness check.
# ----------------------------------------------------------------------------
def reference_forward(H, T, params, *, padding_value, max_seq_len):
    B, S, Hd = H.shape
    L = params["w_ih"].shape[0]
    if S < max_seq_len:
        H = jnp.pad(H, ((0, 0), (0, max_seq_len - S), (0, 0)))
    hs = [jnp.zeros((B, Hd), jnp.float32) for _ in range(L)]
    outs = []
    for t in range(max_seq_len):
        inp = H[:, t, :]
        for l in range(L):
            gx = inp @ params["w_ih"][l].T + params["b_ih"][l]
            gh = hs[l] @ params["w_hh"][l].T + params["b_hh"][l]
            r = jax.nn.sigmoid(gx[:, :Hd] + gh[:, :Hd])
            z = jax.nn.sigmoid(gx[:, Hd:2 * Hd] + gh[:, Hd:2 * Hd])
            n = jnp.tanh(gx[:, 2 * Hd:] + r * gh[:, 2 * Hd:])
            hs[l] = (1.0 - z) * n + z * hs[l]
            inp = hs[l]
        h_out = jnp.where((t < T)[:, None], inp, padding_value)
        outs.append(h_out)
    H_o = jnp.stack(outs, axis=1)                                # (B, S, Hd)
    return H_o @ params["w_lin"].T + params["b_lin"]


if __name__ == "__main__":
    # Small shapes consistent with the module's forward.
    batch, hidden_dim, feature_dim = 4, 32, 8
    num_layers, max_seq_len = 2, 8
    padding_value = -1.0

    key = jax.random.PRNGKey(0)
    k_h, k_p = jax.random.split(key)
    params = init_params(k_p, feature_dim, hidden_dim, num_layers)

    H = jax.random.normal(k_h, (batch, max_seq_len, hidden_dim), jnp.float32)
    T = jnp.array([8, 5, 3, 8], dtype=jnp.int32)                 # valid lengths

    X_tilde = recovery_network_forward(
        H, T, params, padding_value=padding_value, max_seq_len=max_seq_len)
    X_tilde = jax.block_until_ready(X_tilde)

    X_ref = reference_forward(
        H, T, params, padding_value=padding_value, max_seq_len=max_seq_len)

    assert X_tilde.shape == (batch, max_seq_len, feature_dim)
    # bf16 MXU operands + EUP-approx sigmoid => relaxed tolerance vs the f32
    # reference (per the performance review's correctness note).
    err = jnp.max(jnp.abs(X_tilde - X_ref))
    assert jnp.allclose(X_tilde, X_ref, atol=1e-1, rtol=0.0), (
        f"max abs err = {err}")
    print("KERNEL_OK")
</pallas_src>

<mosaic_0001>
module attributes {stable_mosaic.version = 11 : i64} {
  func.func @_recovery_kernel(%arg0: i32, %arg1: memref<8x8x32xf32, #tpu.memory_space<vmem>>, %arg2: memref<8x1xi32, #tpu.memory_space<vmem>>, %arg3: memref<2x32x96xbf16, #tpu.memory_space<vmem>>, %arg4: memref<2x32x96xbf16, #tpu.memory_space<vmem>>, %arg5: memref<2x1x96xf32, #tpu.memory_space<vmem>>, %arg6: memref<2x1x96xf32, #tpu.memory_space<vmem>>, %arg7: memref<32x8xbf16, #tpu.memory_space<vmem>>, %arg8: memref<1x8xf32, #tpu.memory_space<vmem>>, %arg9: memref<8x8x8xf32, #tpu.memory_space<vmem>>, %arg10: memref<8x8x96xf32, #tpu.memory_space<vmem>>) attributes {dimension_semantics = [#tpu.dimension_semantics<parallel>], iteration_bounds = array<i64: 1>, scalar_prefetch = 0 : i64, scratch_operands = 1 : i64, tpu.core_type = #tpu.core_type<tc>, window_params = [{transform_indices = @transform_0, window_bounds = array<i64: 8, 8, 32>}, {transform_indices = @transform_1, window_bounds = array<i64: 8, 1>}, {pipeline_mode = #tpu.pipeline_mode<synchronous>, transform_indices = @transform_2, window_bounds = array<i64: 2, 32, 96>}, {pipeline_mode = #tpu.pipeline_mode<synchronous>, transform_indices = @transform_3, window_bounds = array<i64: 2, 32, 96>}, {pipeline_mode = #tpu.pipeline_mode<synchronous>, transform_indices = @transform_4, window_bounds = array<i64: 2, 1, 96>}, {pipeline_mode = #tpu.pipeline_mode<synchronous>, transform_indices = @transform_5, window_bounds = array<i64: 2, 1, 96>}, {pipeline_mode = #tpu.pipeline_mode<synchronous>, transform_indices = @transform_6, window_bounds = array<i64: 32, 8>}, {pipeline_mode = #tpu.pipeline_mode<synchronous>, transform_indices = @transform_7, window_bounds = array<i64: 1, 8>}, {transform_indices = @transform_8, window_bounds = array<i64: 8, 8, 8>}]} {
    %c0 = arith.constant 0 : index
    %c0_0 = arith.constant 0 : index
    %c0_1 = arith.constant 0 : index
    %0 = vector.load %arg5[%c0, %c0_0, %c0_1] : memref<2x1x96xf32, #tpu.memory_space<vmem>>, vector<1x1x96xf32>
    %1 = vector.shape_cast %0 : vector<1x1x96xf32> to vector<1x96xf32>
    %c1 = arith.constant 1 : index
    %c0_2 = arith.constant 0 : index
    %c0_3 = arith.constant 0 : index
    %2 = vector.load %arg5[%c1, %c0_2, %c0_3] : memref<2x1x96xf32, #tpu.memory_space<vmem>>, vector<1x1x96xf32>
    %3 = vector.shape_cast %2 : vector<1x1x96xf32> to vector<1x96xf32>
    %c0_4 = arith.constant 0 : index
    %c0_5 = arith.constant 0 : index
    %c0_6 = arith.constant 0 : index
    %4 = vector.load %arg6[%c0_4, %c0_5, %c0_6] : memref<2x1x96xf32, #tpu.memory_space<vmem>>, vector<1x1x96xf32>
    %5 = vector.shape_cast %4 : vector<1x1x96xf32> to vector<1x96xf32>
    %c1_7 = arith.constant 1 : index
    %c0_8 = arith.constant 0 : index
    %c0_9 = arith.constant 0 : index
    %6 = vector.load %arg6[%c1_7, %c0_8, %c0_9] : memref<2x1x96xf32, #tpu.memory_space<vmem>>, vector<1x1x96xf32>
    %7 = vector.shape_cast %6 : vector<1x1x96xf32> to vector<1x96xf32>
    %c0_10 = arith.constant 0 : index
    %c0_11 = arith.constant 0 : index
    %c0_12 = arith.constant 0 : index
    %8 = vector.load %arg1[%c0_10, %c0_11, %c0_12] : memref<8x8x32xf32, #tpu.memory_space<vmem>>, vector<8x8x32xf32>
    %9 = arith.truncf %8 : vector<8x8x32xf32> to vector<8x8x32xbf16>
    %10 = vector.shape_cast %9 : vector<8x8x32xbf16> to vector<64x32xbf16>
    %c0_13 = arith.constant 0 : index
    %c0_14 = arith.constant 0 : index
    %c0_15 = arith.constant 0 : index
    %11 = vector.load %arg3[%c0_13, %c0_14, %c0_15] : memref<2x32x96xbf16, #tpu.memory_space<vmem>>, vector<1x32x96xbf16>
    %12 = vector.shape_cast %11 : vector<1x32x96xbf16> to vector<32x96xbf16>
    %cst = arith.constant dense<0.000000e+00> : vector<64x96xf32>
    %13 = tpu.matmul %10, %12, %cst {dimension_numbers = #tpu.dot_dimension_numbers<[1], [0], [0], [1], [0, 0, 1, 1], [], []>} : vector<64x32xbf16>, vector<32x96xbf16>, vector<64x96xf32> -> vector<64x96xf32>
    %14 = vector.broadcast %1 : vector<1x96xf32> to vector<64x96xf32>
    %15 = arith.addf %13, %14 : vector<64x96xf32>
    %16 = vector.shape_cast %15 : vector<64x96xf32> to vector<8x8x96xf32>
    %c0_16 = arith.constant 0 : index
    %c0_17 = arith.constant 0 : index
    %c0_18 = arith.constant 0 : index
    %17 = vector.load %arg10[%c0_16, %c0_17, %c0_18] : memref<8x8x96xf32, #tpu.memory_space<vmem>>, vector<8x8x96xf32>
    tpu.vector_store %arg10[%c0_16, %c0_17, %c0_18], %16 {strides = array<i32>} : memref<8x8x96xf32, #tpu.memory_space<vmem>>, vector<8x8x96xf32>,
    %cst_19 = arith.constant 0.000000e+00 : f32
    %18 = vector.broadcast %cst_19 : f32 to vector<8x32xf32>
    %cst_20 = arith.constant 0.000000e+00 : f32
    %19 = vector.broadcast %cst_20 : f32 to vector<8x32xf32>
    %c0_i32 = arith.constant 0 : i32
    %20 = arith.index_cast %c0_i32 : i32 to index
    %c0_21 = arith.constant 0 : index
    %c0_22 = arith.constant 0 : index
    %21 = vector.load %arg10[%20, %c0_21, %c0_22] : memref<8x8x96xf32, #tpu.memory_space<vmem>>, vector<1x8x96xf32>
    %22 = vector.shape_cast %21 : vector<1x8x96xf32> to vector<8x96xf32>
    %c0_23 = arith.constant 0 : index
    %c0_24 = arith.constant 0 : index
    %c0_25 = arith.constant 0 : index
    %23 = vector.load %arg4[%c0_23, %c0_24, %c0_25] : memref<2x32x96xbf16, #tpu.memory_space<vmem>>, vector<1x32x96xbf16>
    %24 = vector.shape_cast %23 : vector<1x32x96xbf16> to vector<32x96xbf16>
    %25 = arith.truncf %18 : vector<8x32xf32> to vector<8x32xbf16>
    %cst_26 = arith.constant dense<0.000000e+00> : vector<8x96xf32>
    %26 = tpu.matmul %25, %24, %cst_26 {dimension_numbers = #tpu.dot_dimension_numbers<[1], [0], [0], [1], [0, 0, 1, 1], [], []>} : vector<8x32xbf16>, vector<32x96xbf16>, vector<8x96xf32> -> vector<8x96xf32>
    %27 = vector.broadcast %5 : vector<1x96xf32> to vector<8x96xf32>
    %28 = arith.addf %26, %27 : vector<8x96xf32>
    %29 = vector.extract_strided_slice %22 {offsets = [0, 0], sizes = [8, 32], strides = [1, 1]} : vector<8x96xf32> to vector<8x32xf32>
    %30 = vector.extract_strided_slice %28 {offsets = [0, 0], sizes = [8, 32], strides = [1, 1]} : vector<8x96xf32> to vector<8x32xf32>
    %31 = arith.addf %29, %30 : vector<8x32xf32>
    %32 = vector.extract_strided_slice %22 {offsets = [0, 32], sizes = [8, 32], strides = [1, 1]} : vector<8x96xf32> to vector<8x32xf32>
    %33 = vector.extract_strided_slice %28 {offsets = [0, 32], sizes = [8, 32], strides = [1, 1]} : vector<8x96xf32> to vector<8x32xf32>
    %34 = arith.addf %32, %33 : vector<8x32xf32>
    %cst_27 = arith.constant 0.000000e+00 : f32
    %35 = vector.broadcast %cst_27 : f32 to vector<8x32xf32>
    %36 = arith.subf %35, %31 : vector<8x32xf32>
    %37 = math.exp %36 : vector<8x32xf32>
    %cst_28 = arith.constant 1.000000e+00 : f32
    %38 = vector.broadcast %cst_28 : f32 to vector<8x32xf32>
    %39 = arith.addf %38, %37 : vector<8x32xf32>
    %40 = tpu.reciprocal %39 {approx = true} : vector<8x32xf32> -> vector<8x32xf32>
    %cst_29 = arith.constant 0.000000e+00 : f32
    %41 = vector.broadcast %cst_29 : f32 to vector<8x32xf32>
    %42 = arith.subf %41, %34 : vector<8x32xf32>
    %43 = math.exp %42 : vector<8x32xf32>
    %cst_30 = arith.constant 1.000000e+00 : f32
    %44 = vector.broadcast %cst_30 : f32 to vector<8x32xf32>
    %45 = arith.addf %44, %43 : vector<8x32xf32>
    %46 = tpu.reciprocal %45 {approx = true} : vector<8x32xf32> -> vector<8x32xf32>
    %47 = vector.extract_strided_slice %22 {offsets = [0, 64], sizes = [8, 32], strides = [1, 1]} : vector<8x96xf32> to vector<8x32xf32>
    %48 = vector.extract_strided_slice %28 {offsets = [0, 64], sizes = [8, 32], strides = [1, 1]} : vector<8x96xf32> to vector<8x32xf32>
    %49 = arith.mulf %40, %48 : vector<8x32xf32>
    %50 = arith.addf %47, %49 : vector<8x32xf32>
    %51 = math.tanh %50 : vector<8x32xf32>
    %cst_31 = arith.constant 1.000000e+00 : f32
    %52 = vector.broadcast %cst_31 : f32 to vector<8x32xf32>
    %53 = arith.subf %52, %46 : vector<8x32xf32>
    %54 = arith.mulf %53, %51 : vector<8x32xf32>
    %55 = arith.mulf %46, %18 : vector<8x32xf32>
    %56 = arith.addf %54, %55 : vector<8x32xf32>
    %57 = arith.truncf %56 : vector<8x32xf32> to vector<8x32xbf16>
    %c1_32 = arith.constant 1 : index
    %c0_33 = arith.constant 0 : index
    %c0_34 = arith.constant 0 : index
    %58 = vector.load %arg3[%c1_32, %c0_33, %c0_34] : memref<2x32x96xbf16, #tpu.memory_space<vmem>>, vector<1x32x96xbf16>
    %59 = vector.shape_cast %58 : vector<1x32x96xbf16> to vector<32x96xbf16>
    %cst_35 = arith.constant dense<0.000000e+00> : vector<8x96xf32>
    %60 = tpu.matmul %57, %59, %cst_35 {dimension_numbers = #tpu.dot_dimension_numbers<[1], [0], [0], [1], [0, 0, 1, 1], [], []>} : vector<8x32xbf16>, vector<32x96xbf16>, vector<8x96xf32> -> vector<8x96xf32>
    %61 = vector.broadcast %3 : vector<1x96xf32> to vector<8x96xf32>
    %62 = arith.addf %60, %61 : vector<8x96xf32>
    %c1_36 = arith.constant 1 : index
    %c0_37 = arith.constant 0 : index
    %c0_38 = arith.constant 0 : index
    %63 = vector.load %arg4[%c1_36, %c0_37, %c0_38] : memref<2x32x96xbf16, #tpu.memory_space<vmem>>, vector<1x32x96xbf16>
    %64 = vector.shape_cast %63 : vector<1x32x96xbf16> to vector<32x96xbf16>
    %65 = arith.truncf %19 : vector<8x32xf32> to vector<8x32xbf16>
    %cst_39 = arith.constant dense<0.000000e+00> : vector<8x96xf32>
    %66 = tpu.matmul %65, %64, %cst_39 {dimension_numbers = #tpu.dot_dimension_numbers<[1], [0], [0], [1], [0, 0, 1, 1], [], []>} : vector<8x32xbf16>, vector<32x96xbf16>, vector<8x96xf32> -> vector<8x96xf32>
    %67 = vector.broadcast %7 : vector<1x96xf32> to vector<8x96xf32>
    %68 = arith.addf %66, %67 : vector<8x96xf32>
    %69 = vector.extract_strided_slice %62 {offsets = [0, 0], sizes = [8, 32], strides = [1, 1]} : vector<8x96xf32> to vector<8x32xf32>
    %70 = vector.extract_strided_slice %68 {offsets = [0, 0], sizes = [8, 32], strides = [1, 1]} : vector<8x96xf32> to vector<8x32xf32>
    %71 = arith.addf %69, %70 : vector<8x32xf32>
    %72 = vector.extract_strided_slice %62 {offsets = [0, 32], sizes = [8, 32], strides = [1, 1]} : vector<8x96xf32> to vector<8x32xf32>
    %73 = vector.extract_strided_slice %68 {offsets = [0, 32], sizes = [8, 32], strides = [1, 1]} : vector<8x96xf32> to vector<8x32xf32>
    %74 = arith.addf %72, %73 : vector<8x32xf32>
    %cst_40 = arith.constant 0.000000e+00 : f32
    %75 = vector.broadcast %cst_40 : f32 to vector<8x32xf32>
    %76 = arith.subf %75, %71 : vector<8x32xf32>
    %77 = math.exp %76 : vector<8x32xf32>
    %cst_41 = arith.constant 1.000000e+00 : f32
    %78 = vector.broadcast %cst_41 : f32 to vector<8x32xf32>
    %79 = arith.addf %78, %77 : vector<8x32xf32>
    %80 = tpu.reciprocal %79 {approx = true} : vector<8x32xf32> -> vector<8x32xf32>
    %cst_42 = arith.constant 0.000000e+00 : f32
    %81 = vector.broadcast %cst_42 : f32 to vector<8x32xf32>
    %82 = arith.subf %81, %74 : vector<8x32xf32>
    %83 = math.exp %82 : vector<8x32xf32>
    %cst_43 = arith.constant 1.000000e+00 : f32
    %84 = vector.broadcast %cst_43 : f32 to vector<8x32xf32>
    %85 = arith.addf %84, %83 : vector<8x32xf32>
    %86 = tpu.reciprocal %85 {approx = true} : vector<8x32xf32> -> vector<8x32xf32>
    %87 = vector.extract_strided_slice %62 {offsets = [0, 64], sizes = [8, 32], strides = [1, 1]} : vector<8x96xf32> to vector<8x32xf32>
    %88 = vector.extract_strided_slice %68 {offsets = [0, 64], sizes = [8, 32], strides = [1, 1]} : vector<8x96xf32> to vector<8x32xf32>
    %89 = arith.mulf %80, %88 : vector<8x32xf32>
    %90 = arith.addf %87, %89 : vector<8x32xf32>
    %91 = math.tanh %90 : vector<8x32xf32>
    %cst_44 = arith.constant 1.000000e+00 : f32
    %92 = vector.broadcast %cst_44 : f32 to vector<8x32xf32>
    %93 = arith.subf %92, %86 : vector<8x32xf32>
    %94 = arith.mulf %93, %91 : vector<8x32xf32>
    %95 = arith.mulf %86, %19 : vector<8x32xf32>
    %96 = arith.addf %94, %95 : vector<8x32xf32>
    %97 = arith.index_cast %c0_i32 : i32 to index
    %c0_45 = arith.constant 0 : index
    %c0_46 = arith.constant 0 : index
    %98 = vector.load %arg10[%97, %c0_45, %c0_46] : memref<8x8x96xf32, #tpu.memory_space<vmem>>, vector<1x8x32xf32>
    %99 = vector.shape_cast %98 : vector<1x8x32xf32> to vector<8x32xf32>
    %100 = vector.shape_cast %96 : vector<8x32xf32> to vector<1x8x32xf32>
    tpu.vector_store %arg10[%97, %c0_45, %c0_46], %100 {strides = array<i32>} : memref<8x8x96xf32, #tpu.memory_space<vmem>>, vector<1x8x32xf32>,
    %c1_i32 = arith.constant 1 : i32
    %101 = arith.index_cast %c1_i32 : i32 to index
    %c0_47 = arith.constant 0 : index
    %c0_48 = arith.constant 0 : index
    %102 = vector.load %arg10[%101, %c0_47, %c0_48] : memref<8x8x96xf32, #tpu.memory_space<vmem>>, vector<1x8x96xf32>
    %103 = vector.shape_cast %102 : vector<1x8x96xf32> to vector<8x96xf32>
    %c0_49 = arith.constant 0 : index
    %c0_50 = arith.constant 0 : index
    %c0_51 = arith.constant 0 : index
    %104 = vector.load %arg4[%c0_49, %c0_50, %c0_51] : memref<2x32x96xbf16, #tpu.memory_space<vmem>>, vector<1x32x96xbf16>
    %105 = vector.shape_cast %104 : vector<1x32x96xbf16> to vector<32x96xbf16>
    %106 = arith.truncf %56 : vector<8x32xf32> to vector<8x32xbf16>
    %cst_52 = arith.constant dense<0.000000e+00> : vector<8x96xf32>
    %107 = tpu.matmul %106, %105, %cst_52 {dimension_numbers = #tpu.dot_dimension_numbers<[1], [0], [0], [1], [0, 0, 1, 1], [], []>} : vector<8x32xbf16>, vector<32x96xbf16>, vector<8x96xf32> -> vector<8x96xf32>
    %108 = vector.broadcast %5 : vector<1x96xf32> to vector<8x96xf32>
    %109 = arith.addf %107, %108 : vector<8x96xf32>
    %110 = vector.extract_strided_slice %103 {offsets = [0, 0], sizes = [8, 32], strides = [1, 1]} : vector<8x96xf32> to vector<8x32xf32>
    %111 = vector.extract_strided_slice %109 {offsets = [0, 0], sizes = [8, 32], strides = [1, 1]} : vector<8x96xf32> to vector<8x32xf32>
    %112 = arith.addf %110, %111 : vector<8x32xf32>
    %113 = vector.extract_strided_slice %103 {offsets = [0, 32], sizes = [8, 32], strides = [1, 1]} : vector<8x96xf32> to vector<8x32xf32>
    %114 = vector.extract_strided_slice %109 {offsets = [0, 32], sizes = [8, 32], strides = [1, 1]} : vector<8x96xf32> to vector<8x32xf32>
    %115 = arith.addf %113, %114 : vector<8x32xf32>
    %cst_53 = arith.constant 0.000000e+00 : f32
    %116 = vector.broadcast %cst_53 : f32 to vector<8x32xf32>
    %117 = arith.subf %116, %112 : vector<8x32xf32>
    %118 = math.exp %117 : vector<8x32xf32>
    %cst_54 = arith.constant 1.000000e+00 : f32
    %119 = vector.broadcast %cst_54 : f32 to vector<8x32xf32>
    %120 = arith.addf %119, %118 : vector<8x32xf32>
    %121 = tpu.reciprocal %120 {approx = true} : vector<8x32xf32> -> vector<8x32xf32>
    %cst_55 = arith.constant 0.000000e+00 : f32
    %122 = vector.broadcast %cst_55 : f32 to vector<8x32xf32>
    %123 = arith.subf %122, %115 : vector<8x32xf32>
    %124 = math.exp %123 : vector<8x32xf32>
    %cst_56 = arith.constant 1.000000e+00 : f32
    %125 = vector.broadcast %cst_56 : f32 to vector<8x32xf32>
    %126 = arith.addf %125, %124 : vector<8x32xf32>
    %127 = tpu.reciprocal %126 {approx = true} : vector<8x32xf32> -> vector<8x32xf32>
    %128 = vector.extract_strided_slice %103 {offsets = [0, 64], sizes = [8, 32], strides = [1, 1]} : vector<8x96xf32> to vector<8x32xf32>
    %129 = vector.extract_strided_slice %109 {offsets = [0, 64], sizes = [8, 32], strides = [1, 1]} : vector<8x96xf32> to vector<8x32xf32>
    %130 = arith.mulf %121, %129 : vector<8x32xf32>
    %131 = arith.addf %128, %130 : vector<8x32xf32>
    %132 = math.tanh %131 : vector<8x32xf32>
    %cst_57 = arith.constant 1.000000e+00 : f32
    %133 = vector.broadcast %cst_57 : f32 to vector<8x32xf32>
    %134 = arith.subf %133, %127 : vector<8x32xf32>
    %135 = arith.mulf %134, %132 : vector<8x32xf32>
    %136 = arith.mulf %127, %56 : vector<8x32xf32>
    %137 = arith.addf %135, %136 : vector<8x32xf32>
    %138 = arith.truncf %137 : vector<8x32xf32> to vector<8x32xbf16>
    %c1_58 = arith.constant 1 : index
    %c0_59 = arith.constant 0 : index
    %c0_60 = arith.constant 0 : index
    %139 = vector.load %arg3[%c1_58, %c0_59, %c0_60] : memref<2x32x96xbf16, #tpu.memory_space<vmem>>, vector<1x32x96xbf16>
    %140 = vector.shape_cast %139 : vector<1x32x96xbf16> to vector<32x96xbf16>
    %cst_61 = arith.constant dense<0.000000e+00> : vector<8x96xf32>
    %141 = tpu.matmul %138, %140, %cst_61 {dimension_numbers = #tpu.dot_dimension_numbers<[1], [0], [0], [1], [0, 0, 1, 1], [], []>} : vector<8x32xbf16>, vector<32x96xbf16>, vector<8x96xf32> -> vector<8x96xf32>
    %142 = vector.broadcast %3 : vector<1x96xf32> to vector<8x96xf32>
    %143 = arith.addf %141, %142 : vector<8x96xf32>
    %c1_62 = arith.constant 1 : index
    %c0_63 = arith.constant 0 : index
    %c0_64 = arith.constant 0 : index
    %144 = vector.load %arg4[%c1_62, %c0_63, %c0_64] : memref<2x32x96xbf16, #tpu.memory_space<vmem>>, vector<1x32x96xbf16>
    %145 = vector.shape_cast %144 : vector<1x32x96xbf16> to vector<32x96xbf16>
    %146 = arith.truncf %96 : vector<8x32xf32> to vector<8x32xbf16>
    %cst_65 = arith.constant dense<0.000000e+00> : vector<8x96xf32>
    %147 = tpu.matmul %146, %145, %cst_65 {dimension_numbers = #tpu.dot_dimension_numbers<[1], [0], [0], [1], [0, 0, 1, 1], [], []>} : vector<8x32xbf16>, vector<32x96xbf16>, vector<8x96xf32> -> vector<8x96xf32>
    %148 = vector.broadcast %7 : vector<1x96xf32> to vector<8x96xf32>
    %149 = arith.addf %147, %148 : vector<8x96xf32>
    %150 = vector.extract_strided_slice %143 {offsets = [0, 0], sizes = [8, 32], strides = [1, 1]} : vector<8x96xf32> to vector<8x32xf32>
    %151 = vector.extract_strided_slice %149 {offsets = [0, 0], sizes = [8, 32], strides = [1, 1]} : vector<8x96xf32> to vector<8x32xf32>
    %152 = arith.addf %150, %151 : vector<8x32xf32>
    %153 = vector.extract_strided_slice %143 {offsets = [0, 32], sizes = [8, 32], strides = [1, 1]} : vector<8x96xf32> to vector<8x32xf32>
    %154 = vector.extract_strided_slice %149 {offsets = [0, 32], sizes = [8, 32], strides = [1, 1]} : vector<8x96xf32> to vector<8x32xf32>
    %155 = arith.addf %153, %154 : vector<8x32xf32>
    %cst_66 = arith.constant 0.000000e+00 : f32
    %156 = vector.broadcast %cst_66 : f32 to vector<8x32xf32>
    %157 = arith.subf %156, %152 : vector<8x32xf32>
    %158 = math.exp %157 : vector<8x32xf32>
    %cst_67 = arith.constant 1.000000e+00 : f32
    %159 = vector.broadcast %cst_67 : f32 to vector<8x32xf32>
    %160 = arith.addf %159, %158 : vector<8x32xf32>
    %161 = tpu.reciprocal %160 {approx = true} : vector<8x32xf32> -> vector<8x32xf32>
    %cst_68 = arith.constant 0.000000e+00 : f32
    %162 = vector.broadcast %cst_68 : f32 to vector<8x32xf32>
    %163 = arith.subf %162, %155 : vector<8x32xf32>
    %164 = math.exp %163 : vector<8x32xf32>
    %cst_69 = arith.constant 1.000000e+00 : f32
    %165 = vector.broadcast %cst_69 : f32 to vector<8x32xf32>
    %166 = arith.addf %165, %164 : vector<8x32xf32>
    %167 = tpu.reciprocal %166 {approx = true} : vector<8x32xf32> -> vector<8x32xf32>
    %168 = vector.extract_strided_slice %143 {offsets = [0, 64], sizes = [8, 32], strides = [1, 1]} : vector<8x96xf32> to vector<8x32xf32>
    %169 = vector.extract_strided_slice %149 {offsets = [0, 64], sizes = [8, 32], strides = [1, 1]} : vector<8x96xf32> to vector<8x32xf32>
    %170 = arith.mulf %161, %169 : vector<8x32xf32>
    %171 = arith.addf %168, %170 : vector<8x32xf32>
    %172 = math.tanh %171 : vector<8x32xf32>
    %cst_70 = arith.constant 1.000000e+00 : f32
    %173 = vector.broadcast %cst_70 : f32 to vector<8x32xf32>
    %174 = arith.subf %173, %167 : vector<8x32xf32>
    %175 = arith.mulf %174, %172 : vector<8x32xf32>
    %176 = arith.mulf %167, %96 : vector<8x32xf32>
    %177 = arith.addf %175, %176 : vector<8x32xf32>
    %178 = arith.index_cast %c1_i32 : i32 to index
    %c0_71 = arith.constant 0 : index
    %c0_72 = arith.constant 0 : index
    %179 = vector.load %arg10[%178, %c0_71, %c0_72] : memref<8x8x96xf32, #tpu.memory_space<vmem>>, vector<1x8x32xf32>
    %180 = vector.shape_cast %179 : vector<1x8x32xf32> to vector<8x32xf32>
    %181 = vector.shape_cast %177 : vector<8x32xf32> to vector<1x8x32xf32>
    tpu.vector_store %arg10[%178, %c0_71, %c0_72], %181 {strides = array<i32>} : memref<8x8x96xf32, #tpu.memory_space<vmem>>, vector<1x8x32xf32>,
    %c2_i32 = arith.constant 2 : i32
    %182 = arith.index_cast %c2_i32 : i32 to index
    %c0_73 = arith.constant 0 : index
    %c0_74 = arith.constant 0 : index
    %183 = vector.load %arg10[%182, %c0_73, %c0_74] : memref<8x8x96xf32, #tpu.memory_space<vmem>>, vector<1x8x96xf32>
    %184 = vector.shape_cast %183 : vector<1x8x96xf32> to vector<8x96xf32>
    %c0_75 = arith.constant 0 : index
    %c0_76 = arith.constant 0 : index
    %c0_77 = arith.constant 0 : index
    %185 = vector.load %arg4[%c0_75, %c0_76, %c0_77] : memref<2x32x96xbf16, #tpu.memory_space<vmem>>, vector<1x32x96xbf16>
    %186 = vector.shape_cast %185 : vector<1x32x96xbf16> to vector<32x96xbf16>
    %187 = arith.truncf %137 : vector<8x32xf32> to vector<8x32xbf16>
    %cst_78 = arith.constant dense<0.000000e+00> : vector<8x96xf32>
    %188 = tpu.matmul %187, %186, %cst_78 {dimension_numbers = #tpu.dot_dimension_numbers<[1], [0], [0], [1], [0, 0, 1, 1], [], []>} : vector<8x32xbf16>, vector<32x96xbf16>, vector<8x96xf32> -> vector<8x96xf32>
    %189 = vector.broadcast %5 : vector<1x96xf32> to vector<8x96xf32>
    %190 = arith.addf %188, %189 : vector<8x96xf32>
    %191 = vector.extract_strided_slice %184 {offsets = [0, 0], sizes = [8, 32], strides = [1, 1]} : vector<8x96xf32> to vector<8x32xf32>
    %192 = vector.extract_strided_slice %190 {offsets = [0, 0], sizes = [8, 32], strides = [1, 1]} : vector<8x96xf32> to vector<8x32xf32>
    %193 = arith.addf %191, %192 : vector<8x32xf32>
    %194 = vector.extract_strided_slice %184 {offsets = [0, 32], sizes = [8, 32], strides = [1, 1]} : vector<8x96xf32> to vector<8x32xf32>
    %195 = vector.extract_strided_slice %190 {offsets = [0, 32], sizes = [8, 32], strides = [1, 1]} : vector<8x96xf32> to vector<8x32xf32>
    %196 = arith.addf %194, %195 : vector<8x32xf32>
    %cst_79 = arith.constant 0.000000e+00 : f32
    %197 = vector.broadcast %cst_79 : f32 to vector<8x32xf32>
    %198 = arith.subf %197, %193 : vector<8x32xf32>
    %199 = math.exp %198 : vector<8x32xf32>
    %cst_80 = arith.constant 1.000000e+00 : f32
    %200 = vector.broadcast %cst_80 : f32 to vector<8x32xf32>
    %201 = arith.addf %200, %199 : vector<8x32xf32>
    %202 = tpu.reciprocal %201 {approx = true} : vector<8x32xf32> -> vector<8x32xf32>
    %cst_81 = arith.constant 0.000000e+00 : f32
    %203 = vector.broadcast %cst_81 : f32 to vector<8x32xf32>
    %204 = arith.subf %203, %196 : vector<8x32xf32>
    %205 = math.exp %204 : vector<8x32xf32>
    %cst_82 = arith.constant 1.000000e+00 : f32
    %206 = vector.broadcast %cst_82 : f32 to vector<8x32xf32>
    %207 = arith.addf %206, %205 : vector<8x32xf32>
    %208 = tpu.reciprocal %207 {approx = true} : vector<8x32xf32> -> vector<8x32xf32>
    %209 = vector.extract_strided_slice %184 {offsets = [0, 64], sizes = [8, 32], strides = [1, 1]} : vector<8x96xf32> to vector<8x32xf32>
    %210 = vector.extract_strided_slice %190 {offsets = [0, 64], sizes = [8, 32], strides = [1, 1]} : vector<8x96xf32> to vector<8x32xf32>
    %211 = arith.mulf %202, %210 : vector<8x32xf32>
    %212 = arith.addf %209, %211 : vector<8x32xf32>
    %213 = math.tanh %212 : vector<8x32xf32>
    %cst_83 = arith.constant 1.000000e+00 : f32
    %214 = vector.broadcast %cst_83 : f32 to vector<8x32xf32>
    %215 = arith.subf %214, %208 : vector<8x32xf32>
    %216 = arith.mulf %215, %213 : vector<8x32xf32>
    %217 = arith.mulf %208, %137 : vector<8x32xf32>
    %218 = arith.addf %216, %217 : vector<8x32xf32>
    %219 = arith.truncf %218 : vector<8x32xf32> to vector<8x32xbf16>
    %c1_84 = arith.constant 1 : index
    %c0_85 = arith.constant 0 : index
    %c0_86 = arith.constant 0 : index
    %220 = vector.load %arg3[%c1_84, %c0_85, %c0_86] : memref<2x32x96xbf16, #tpu.memory_space<vmem>>, vector<1x32x96xbf16>
    %221 = vector.shape_cast %220 : vector<1x32x96xbf16> to vector<32x96xbf16>
    %cst_87 = arith.constant dense<0.000000e+00> : vector<8x96xf32>
    %222 = tpu.matmul %219, %221, %cst_87 {dimension_numbers = #tpu.dot_dimension_numbers<[1], [0], [0], [1], [0, 0, 1, 1], [], []>} : vector<8x32xbf16>, vector<32x96xbf16>, vector<8x96xf32> -> vector<8x96xf32>
    %223 = vector.broadcast %3 : vector<1x96xf32> to vector<8x96xf32>
    %224 = arith.addf %222, %223 : vector<8x96xf32>
    %c1_88 = arith.constant 1 : index
    %c0_89 = arith.constant 0 : index
    %c0_90 = arith.constant 0 : index
    %225 = vector.load %arg4[%c1_88, %c0_89, %c0_90] : memref<2x32x96xbf16, #tpu.memory_space<vmem>>, vector<1x32x96xbf16>
    %226 = vector.shape_cast %225 : vector<1x32x96xbf16> to vector<32x96xbf16>
    %227 = arith.truncf %177 : vector<8x32xf32> to vector<8x32xbf16>
    %cst_91 = arith.constant dense<0.000000e+00> : vector<8x96xf32>
    %228 = tpu.matmul %227, %226, %cst_91 {dimension_numbers = #tpu.dot_dimension_numbers<[1], [0], [0], [1], [0, 0, 1, 1], [], []>} : vector<8x32xbf16>, vector<32x96xbf16>, vector<8x96xf32> -> vector<8x96xf32>
    %229 = vector.broadcast %7 : vector<1x96xf32> to vector<8x96xf32>
    %230 = arith.addf %228, %229 : vector<8x96xf32>
    %231 = vector.extract_strided_slice %224 {offsets = [0, 0], sizes = [8, 32], strides = [1, 1]} : vector<8x96xf32> to vector<8x32xf32>
    %232 = vector.extract_strided_slice %230 {offsets = [0, 0], sizes = [8, 32], strides = [1, 1]} : vector<8x96xf32> to vector<8x32xf32>
    %233 = arith.addf %231, %232 : vector<8x32xf32>
    %234 = vector.extract_strided_slice %224 {offsets = [0, 32], sizes = [8, 32], strides = [1, 1]} : vector<8x96xf32> to vector<8x32xf32>
    %235 = vector.extract_strided_slice %230 {offsets = [0, 32], sizes = [8, 32], strides = [1, 1]} : vector<8x96xf32> to vector<8x32xf32>
    %236 = arith.addf %234, %235 : vector<8x32xf32>
    %cst_92 = arith.constant 0.000000e+00 : f32
    %237 = vector.broadcast %cst_92 : f32 to vector<8x32xf32>
    %238 = arith.subf %237, %233 : vector<8x32xf32>
    %239 = math.exp %238 : vector<8x32xf32>
    %cst_93 = arith.constant 1.000000e+00 : f32
    %240 = vector.broadcast %cst_93 : f32 to vector<8x32xf32>
    %241 = arith.addf %240, %239 : vector<8x32xf32>
    %242 = tpu.reciprocal %241 {approx = true} : vector<8x32xf32> -> vector<8x32xf32>
    %cst_94 = arith.constant 0.000000e+00 : f32
    %243 = vector.broadcast %cst_94 : f32 to vector<8x32xf32>
    %244 = arith.subf %243, %236 : vector<8x32xf32>
    %245 = math.exp %244 : vector<8x32xf32>
    %cst_95 = arith.constant 1.000000e+00 : f32
    %246 = vector.broadcast %cst_95 : f32 to vector<8x32xf32>
    %247 = arith.addf %246, %245 : vector<8x32xf32>
    %248 = tpu.reciprocal %247 {approx = true} : vector<8x32xf32> -> vector<8x32xf32>
    %249 = vector.extract_strided_slice %224 {offsets = [0, 64], sizes = [8, 32], strides = [1, 1]} : vector<8x96xf32> to vector<8x32xf32>
    %250 = vector.extract_strided_slice %230 {offsets = [0, 64], sizes = [8, 32], strides = [1, 1]} : vector<8x96xf32> to vector<8x32xf32>
    %251 = arith.mulf %242, %250 : vector<8x32xf32>
    %252 = arith.addf %249, %251 : vector<8x32xf32>
    %253 = math.tanh %252 : vector<8x32xf32>
    %cst_96 = arith.constant 1.000000e+00 : f32
    %254 = vector.broadcast %cst_96 : f32 to vector<8x32xf32>
    %255 = arith.subf %254, %248 : vector<8x32xf32>
    %256 = arith.mulf %255, %253 : vector<8x32xf32>
    %257 = arith.mulf %248, %177 : vector<8x32xf32>
    %258 = arith.addf %256, %257 : vector<8x32xf32>
    %259 = arith.index_cast %c2_i32 : i32 to index
    %c0_97 = arith.constant 0 : index
    %c0_98 = arith.constant 0 : index
    %260 = vector.load %arg10[%259, %c0_97, %c0_98] : memref<8x8x96xf32, #tpu.memory_space<vmem>>, vector<1x8x32xf32>
    %261 = vector.shape_cast %260 : vector<1x8x32xf32> to vector<8x32xf32>
    %262 = vector.shape_cast %258 : vector<8x32xf32> to vector<1x8x32xf32>
    tpu.vector_store %arg10[%259, %c0_97, %c0_98], %262 {strides = array<i32>} : memref<8x8x96xf32, #tpu.memory_space<vmem>>, vector<1x8x32xf32>,
    %c3_i32 = arith.constant 3 : i32
    %263 = arith.index_cast %c3_i32 : i32 to index
    %c0_99 = arith.constant 0 : index
    %c0_100 = arith.constant 0 : index
    %264 = vector.load %arg10[%263, %c0_99, %c0_100] : memref<8x8x96xf32, #tpu.memory_space<vmem>>, vector<1x8x96xf32>
    %265 = vector.shape_cast %264 : vector<1x8x96xf32> to vector<8x96xf32>
    %c0_101 = arith.constant 0 : index
    %c0_102 = arith.constant 0 : index
    %c0_103 = arith.constant 0 : index
    %266 = vector.load %arg4[%c0_101, %c0_102, %c0_103] : memref<2x32x96xbf16, #tpu.memory_space<vmem>>, vector<1x32x96xbf16>
    %267 = vector.shape_cast %266 : vector<1x32x96xbf16> to vector<32x96xbf16>
    %268 = arith.truncf %218 : vector<8x32xf32> to vector<8x32xbf16>
    %cst_104 = arith.constant dense<0.000000e+00> : vector<8x96xf32>
    %269 = tpu.matmul %268, %267, %cst_104 {dimension_numbers = #tpu.dot_dimension_numbers<[1], [0], [0], [1], [0, 0, 1, 1], [], []>} : vector<8x32xbf16>, vector<32x96xbf16>, vector<8x96xf32> -> vector<8x96xf32>
    %270 = vector.broadcast %5 : vector<1x96xf32> to vector<8x96xf32>
    %271 = arith.addf %269, %270 : vector<8x96xf32>
    %272 = vector.extract_strided_slice %265 {offsets = [0, 0], sizes = [8, 32], strides = [1, 1]} : vector<8x96xf32> to vector<8x32xf32>
    %273 = vector.extract_strided_slice %271 {offsets = [0, 0], sizes = [8, 32], strides = [1, 1]} : vector<8x96xf32> to vector<8x32xf32>
    %274 = arith.addf %272, %273 : vector<8x32xf32>
    %275 = vector.extract_strided_slice %265 {offsets = [0, 32], sizes = [8, 32], strides = [1, 1]} : vector<8x96xf32> to vector<8x32xf32>
    %276 = vector.extract_strided_slice %271 {offsets = [0, 32], sizes = [8, 32], strides = [1, 1]} : vector<8x96xf32> to vector<8x32xf32>
    %277 = arith.addf %275, %276 : vector<8x32xf32>
    %cst_105 = arith.constant 0.000000e+00 : f32
    %278 = vector.broadcast %cst_105 : f32 to vector<8x32xf32>
    %279 = arith.subf %278, %274 : vector<8x32xf32>
    %280 = math.exp %279 : vector<8x32xf32>
    %cst_106 = arith.constant 1.000000e+00 : f32
    %281 = vector.broadcast %cst_106 : f32 to vector<8x32xf32>
    %282 = arith.addf %281, %280 : vector<8x32xf32>
    %283 = tpu.reciprocal %282 {approx = true} : vector<8x32xf32> -> vector<8x32xf32>
    %cst_107 = arith.constant 0.000000e+00 : f32
    %284 = vector.broadcast %cst_107 : f32 to vector<8x32xf32>
    %285 = arith.subf %284, %277 : vector<8x32xf32>
    %286 = math.exp %285 : vector<8x32xf32>
    %cst_108 = arith.constant 1.000000e+00 : f32
    %287 = vector.broadcast %cst_108 : f32 to vector<8x32xf32>
    %288 = arith.addf %287, %286 : vector<8x32xf32>
    %289 = tpu.reciprocal %288 {approx = true} : vector<8x32xf32> -> vector<8x32xf32>
    %290 = vector.extract_strided_slice %265 {offsets = [0, 64], sizes = [8, 32], strides = [1, 1]} : vector<8x96xf32> to vector<8x32xf32>
    %291 = vector.extract_strided_slice %271 {offsets = [0, 64], sizes = [8, 32], strides = [1, 1]} : vector<8x96xf32> to vector<8x32xf32>
    %292 = arith.mulf %283, %291 : vector<8x32xf32>
    %293 = arith.addf %290, %292 : vector<8x32xf32>
    %294 = math.tanh %293 : vector<8x32xf32>
    %cst_109 = arith.constant 1.000000e+00 : f32
    %295 = vector.broadcast %cst_109 : f32 to vector<8x32xf32>
    %296 = arith.subf %295, %289 : vector<8x32xf32>
    %297 = arith.mulf %296, %294 : vector<8x32xf32>
    %298 = arith.mulf %289, %218 : vector<8x32xf32>
    %299 = arith.addf %297, %298 : vector<8x32xf32>
    %300 = arith.truncf %299 : vector<8x32xf32> to vector<8x32xbf16>
    %c1_110 = arith.constant 1 : index
    %c0_111 = arith.constant 0 : index
    %c0_112 = arith.constant 0 : index
    %301 = vector.load %arg3[%c1_110, %c0_111, %c0_112] : memref<2x32x96xbf16, #tpu.memory_space<vmem>>, vector<1x32x96xbf16>
    %302 = vector.shape_cast %301 : vector<1x32x96xbf16> to vector<32x96xbf16>
    %cst_113 = arith.constant dense<0.000000e+00> : vector<8x96xf32>
    %303 = tpu.matmul %300, %302, %cst_113 {dimension_numbers = #tpu.dot_dimension_numbers<[1], [0], [0], [1], [0, 0, 1, 1], [], []>} : vector<8x32xbf16>, vector<32x96xbf16>, vector<8x96xf32> -> vector<8x96xf32>
    %304 = vector.broadcast %3 : vector<1x96xf32> to vector<8x96xf32>
    %305 = arith.addf %303, %304 : vector<8x96xf32>
    %c1_114 = arith.constant 1 : index
    %c0_115 = arith.constant 0 : index
    %c0_116 = arith.constant 0 : index
    %306 = vector.load %arg4[%c1_114, %c0_115, %c0_116] : memref<2x32x96xbf16, #tpu.memory_space<vmem>>, vector<1x32x96xbf16>
    %307 = vector.shape_cast %306 : vector<1x32x96xbf16> to vector<32x96xbf16>
    %308 = arith.truncf %258 : vector<8x32xf32> to vector<8x32xbf16>
    %cst_117 = arith.constant dense<0.000000e+00> : vector<8x96xf32>
    %309 = tpu.matmul %308, %307, %cst_117 {dimension_numbers = #tpu.dot_dimension_numbers<[1], [0], [0], [1], [0, 0, 1, 1], [], []>} : vector<8x32xbf16>, vector<32x96xbf16>, vector<8x96xf32> -> vector<8x96xf32>
    %310 = vector.broadcast %7 : vector<1x96xf32> to vector<8x96xf32>
    %311 = arith.addf %309, %310 : vector<8x96xf32>
    %312 = vector.extract_strided_slice %305 {offsets = [0, 0], sizes = [8, 32], strides = [1, 1]} : vector<8x96xf32> to vector<8x32xf32>
    %313 = vector.extract_strided_slice %311 {offsets = [0, 0], sizes = [8, 32], strides = [1, 1]} : vector<8x96xf32> to vector<8x32xf32>
    %314 = arith.addf %312, %313 : vector<8x32xf32>
    %315 = vector.extract_strided_slice %305 {offsets = [0, 32], sizes = [8, 32], strides = [1, 1]} : vector<8x96xf32> to vector<8x32xf32>
    %316 = vector.extract_strided_slice %311 {offsets = [0, 32], sizes = [8, 32], strides = [1, 1]} : vector<8x96xf32> to vector<8x32xf32>
    %317 = arith.addf %315, %316 : vector<8x32xf32>
    %cst_118 = arith.constant 0.000000e+00 : f32
    %318 = vector.broadcast %cst_118 : f32 to vector<8x32xf32>
    %319 = arith.subf %318, %314 : vector<8x32xf32>
    %320 = math.exp %319 : vector<8x32xf32>
    %cst_119 = arith.constant 1.000000e+00 : f32
    %321 = vector.broadcast %cst_119 : f32 to vector<8x32xf32>
    %322 = arith.addf %321, %320 : vector<8x32xf32>
    %323 = tpu.reciprocal %322 {approx = true} : vector<8x32xf32> -> vector<8x32xf32>
    %cst_120 = arith.constant 0.000000e+00 : f32
    %324 = vector.broadcast %cst_120 : f32 to vector<8x32xf32>
    %325 = arith.subf %324, %317 : vector<8x32xf32>
    %326 = math.exp %325 : vector<8x32xf32>
    %cst_121 = arith.constant 1.000000e+00 : f32
    %327 = vector.broadcast %cst_121 : f32 to vector<8x32xf32>
    %328 = arith.addf %327, %326 : vector<8x32xf32>
    %329 = tpu.reciprocal %328 {approx = true} : vector<8x32xf32> -> vector<8x32xf32>
    %330 = vector.extract_strided_slice %305 {offsets = [0, 64], sizes = [8, 32], strides = [1, 1]} : vector<8x96xf32> to vector<8x32xf32>
    %331 = vector.extract_strided_slice %311 {offsets = [0, 64], sizes = [8, 32], strides = [1, 1]} : vector<8x96xf32> to vector<8x32xf32>
    %332 = arith.mulf %323, %331 : vector<8x32xf32>
    %333 = arith.addf %330, %332 : vector<8x32xf32>
    %334 = math.tanh %333 : vector<8x32xf32>
    %cst_122 = arith.constant 1.000000e+00 : f32
    %335 = vector.broadcast %cst_122 : f32 to vector<8x32xf32>
    %336 = arith.subf %335, %329 : vector<8x32xf32>
    %337 = arith.mulf %336, %334 : vector<8x32xf32>
    %338 = arith.mulf %329, %258 : vector<8x32xf32>
    %339 = arith.addf %337, %338 : vector<8x32xf32>
    %340 = arith.index_cast %c3_i32 : i32 to index
    %c0_123 = arith.constant 0 : index
    %c0_124 = arith.constant 0 : index
    %341 = vector.load %arg10[%340, %c0_123, %c0_124] : memref<8x8x96xf32, #tpu.memory_space<vmem>>, vector<1x8x32xf32>
    %342 = vector.shape_cast %341 : vector<1x8x32xf32> to vector<8x32xf32>
    %343 = vector.shape_cast %339 : vector<8x32xf32> to vector<1x8x32xf32>
    tpu.vector_store %arg10[%340, %c0_123, %c0_124], %343 {strides = array<i32>} : memref<8x8x96xf32, #tpu.memory_space<vmem>>, vector<1x8x32xf32>,
    %c4_i32 = arith.constant 4 : i32
    %344 = arith.index_cast %c4_i32 : i32 to index
    %c0_125 = arith.constant 0 : index
    %c0_126 = arith.constant 0 : index
    %345 = vector.load %arg10[%344, %c0_125, %c0_126] : memref<8x8x96xf32, #tpu.memory_space<vmem>>, vector<1x8x96xf32>
    %346 = vector.shape_cast %345 : vector<1x8x96xf32> to vector<8x96xf32>
    %c0_127 = arith.constant 0 : index
    %c0_128 = arith.constant 0 : index
    %c0_129 = arith.constant 0 : index
    %347 = vector.load %arg4[%c0_127, %c0_128, %c0_129] : memref<2x32x96xbf16, #tpu.memory_space<vmem>>, vector<1x32x96xbf16>
    %348 = vector.shape_cast %347 : vector<1x32x96xbf16> to vector<32x96xbf16>
    %349 = arith.truncf %299 : vector<8x32xf32> to vector<8x32xbf16>
    %cst_130 = arith.constant dense<0.000000e+00> : vector<8x96xf32>
    %350 = tpu.matmul %349, %348, %cst_130 {dimension_numbers = #tpu.dot_dimension_numbers<[1], [0], [0], [1], [0, 0, 1, 1], [], []>} : vector<8x32xbf16>, vector<32x96xbf16>, vector<8x96xf32> -> vector<8x96xf32>
    %351 = vector.broadcast %5 : vector<1x96xf32> to vector<8x96xf32>
    %352 = arith.addf %350, %351 : vector<8x96xf32>
    %353 = vector.extract_strided_slice %346 {offsets = [0, 0], sizes = [8, 32], strides = [1, 1]} : vector<8x96xf32> to vector<8x32xf32>
    %354 = vector.extract_strided_slice %352 {offsets = [0, 0], sizes = [8, 32], strides = [1, 1]} : vector<8x96xf32> to vector<8x32xf32>
    %355 = arith.addf %353, %354 : vector<8x32xf32>
    %356 = vector.extract_strided_slice %346 {offsets = [0, 32], sizes = [8, 32], strides = [1, 1]} : vector<8x96xf32> to vector<8x32xf32>
    %357 = vector.extract_strided_slice %352 {offsets = [0, 32], sizes = [8, 32], strides = [1, 1]} : vector<8x96xf32> to vector<8x32xf32>
    %358 = arith.addf %356, %357 : vector<8x32xf32>
    %cst_131 = arith.constant 0.000000e+00 : f32
    %359 = vector.broadcast %cst_131 : f32 to vector<8x32xf32>
    %360 = arith.subf %359, %355 : vector<8x32xf32>
    %361 = math.exp %360 : vector<8x32xf32>
    %cst_132 = arith.constant 1.000000e+00 : f32
    %362 = vector.broadcast %cst_132 : f32 to vector<8x32xf32>
    %363 = arith.addf %362, %361 : vector<8x32xf32>
    %364 = tpu.reciprocal %363 {approx = true} : vector<8x32xf32> -> vector<8x32xf32>
    %cst_133 = arith.constant 0.000000e+00 : f32
    %365 = vector.broadcast %cst_133 : f32 to vector<8x32xf32>
    %366 = arith.subf %365, %358 : vector<8x32xf32>
    %367 = math.exp %366 : vector<8x32xf32>
    %cst_134 = arith.constant 1.000000e+00 : f32
    %368 = vector.broadcast %cst_134 : f32 to vector<8x32xf32>
    %369 = arith.addf %368, %367 : vector<8x32xf32>
    %370 = tpu.reciprocal %369 {approx = true} : vector<8x32xf32> -> vector<8x32xf32>
    %371 = vector.extract_strided_slice %346 {offsets = [0, 64], sizes = [8, 32], strides = [1, 1]} : vector<8x96xf32> to vector<8x32xf32>
    %372 = vector.extract_strided_slice %352 {offsets = [0, 64], sizes = [8, 32], strides = [1, 1]} : vector<8x96xf32> to vector<8x32xf32>
    %373 = arith.mulf %364, %372 : vector<8x32xf32>
    %374 = arith.addf %371, %373 : vector<8x32xf32>
    %375 = math.tanh %374 : vector<8x32xf32>
    %cst_135 = arith.constant 1.000000e+00 : f32
    %376 = vector.broadcast %cst_135 : f32 to vector<8x32xf32>
    %377 = arith.subf %376, %370 : vector<8x32xf32>
    %378 = arith.mulf %377, %375 : vector<8x32xf32>
    %379 = arith.mulf %370, %299 : vector<8x32xf32>
    %380 = arith.addf %378, %379 : vector<8x32xf32>
    %381 = arith.truncf %380 : vector<8x32xf32> to vector<8x32xbf16>
    %c1_136 = arith.constant 1 : index
    %c0_137 = arith.constant 0 : index
    %c0_138 = arith.constant 0 : index
    %382 = vector.load %arg3[%c1_136, %c0_137, %c0_138] : memref<2x32x96xbf16, #tpu.memory_space<vmem>>, vector<1x32x96xbf16>
    %383 = vector.shape_cast %382 : vector<1x32x96xbf16> to vector<32x96xbf16>
    %cst_139 = arith.constant dense<0.000000e+00> : vector<8x96xf32>
    %384 = tpu.matmul %381, %383, %cst_139 {dimension_numbers = #tpu.dot_dimension_numbers<[1], [0], [0], [1], [0, 0, 1, 1], [], []>} : vector<8x32xbf16>, vector<32x96xbf16>, vector<8x96xf32> -> vector<8x96xf32>
    %385 = vector.broadcast %3 : vector<1x96xf32> to vector<8x96xf32>
    %386 = arith.addf %384, %385 : vector<8x96xf32>
    %c1_140 = arith.constant 1 : index
    %c0_141 = arith.constant 0 : index
    %c0_142 = arith.constant 0 : index
    %387 = vector.load %arg4[%c1_140, %c0_141, %c0_142] : memref<2x32x96xbf16, #tpu.memory_space<vmem>>, vector<1x32x96xbf16>
    %388 = vector.shape_cast %387 : vector<1x32x96xbf16> to vector<32x96xbf16>
    %389 = arith.truncf %339 : vector<8x32xf32> to vector<8x32xbf16>
    %cst_143 = arith.constant dense<0.000000e+00> : vector<8x96xf32>
    %390 = tpu.matmul %389, %388, %cst_143 {dimension_numbers = #tpu.dot_dimension_numbers<[1], [0], [0], [1], [0, 0, 1, 1], [], []>} : vector<8x32xbf16>, vector<32x96xbf16>, vector<8x96xf32> -> vector<8x96xf32>
    %391 = vector.broadcast %7 : vector<1x96xf32> to vector<8x96xf32>
    %392 = arith.addf %390, %391 : vector<8x96xf32>
    %393 = vector.extract_strided_slice %386 {offsets = [0, 0], sizes = [8, 32], strides = [1, 1]} : vector<8x96xf32> to vector<8x32xf32>
    %394 = vector.extract_strided_slice %392 {offsets = [0, 0], sizes = [8, 32], strides = [1, 1]} : vector<8x96xf32> to vector<8x32xf32>
    %395 = arith.addf %393, %394 : vector<8x32xf32>
    %396 = vector.extract_strided_slice %386 {offsets = [0, 32], sizes = [8, 32], strides = [1, 1]} : vector<8x96xf32> to vector<8x32xf32>
    %397 = vector.extract_strided_slice %392 {offsets = [0, 32], sizes = [8, 32], strides = [1, 1]} : vector<8x96xf32> to vector<8x32xf32>
    %398 = arith.addf %396, %397 : vector<8x32xf32>
    %cst_144 = arith.constant 0.000000e+00 : f32
    %399 = vector.broadcast %cst_144 : f32 to vector<8x32xf32>
    %400 = arith.subf %399, %395 : vector<8x32xf32>
    %401 = math.exp %400 : vector<8x32xf32>
    %cst_145 = arith.constant 1.000000e+00 : f32
    %402 = vector.broadcast %cst_145 : f32 to vector<8x32xf32>
    %403 = arith.addf %402, %401 : vector<8x32xf32>
    %404 = tpu.reciprocal %403 {approx = true} : vector<8x32xf32> -> vector<8x32xf32>
    %cst_146 = arith.constant 0.000000e+00 : f32
    %405 = vector.broadcast %cst_146 : f32 to vector<8x32xf32>
    %406 = arith.subf %405, %398 : vector<8x32xf32>
    %407 = math.exp %406 : vector<8x32xf32>
    %cst_147 = arith.constant 1.000000e+00 : f32
    %408 = vector.broadcast %cst_147 : f32 to vector<8x32xf32>
    %409 = arith.addf %408, %407 : vector<8x32xf32>
    %410 = tpu.reciprocal %409 {approx = true} : vector<8x32xf32> -> vector<8x32xf32>
    %411 = vector.extract_strided_slice %386 {offsets = [0, 64], sizes = [8, 32], strides = [1, 1]} : vector<8x96xf32> to vector<8x32xf32>
    %412 = vector.extract_strided_slice %392 {offsets = [0, 64], sizes = [8, 32], strides = [1, 1]} : vector<8x96xf32> to vector<8x32xf32>
    %413 = arith.mulf %404, %412 : vector<8x32xf32>
    %414 = arith.addf %411, %413 : vector<8x32xf32>
    %415 = math.tanh %414 : vector<8x32xf32>
    %cst_148 = arith.constant 1.000000e+00 : f32
    %416 = vector.broadcast %cst_148 : f32 to vector<8x32xf32>
    %417 = arith.subf %416, %410 : vector<8x32xf32>
    %418 = arith.mulf %417, %415 : vector<8x32xf32>
    %419 = arith.mulf %410, %339 : vector<8x32xf32>
    %420 = arith.addf %418, %419 : vector<8x32xf32>
    %421 = arith.index_cast %c4_i32 : i32 to index
    %c0_149 = arith.constant 0 : index
    %c0_150 = arith.constant 0 : index
    %422 = vector.load %arg10[%421, %c0_149, %c0_150] : memref<8x8x96xf32, #tpu.memory_space<vmem>>, vector<1x8x32xf32>
    %423 = vector.shape_cast %422 : vector<1x8x32xf32> to vector<8x32xf32>
    %424 = vector.shape_cast %420 : vector<8x32xf32> to vector<1x8x32xf32>
    tpu.vector_store %arg10[%421, %c0_149, %c0_150], %424 {strides = array<i32>} : memref<8x8x96xf32, #tpu.memory_space<vmem>>, vector<1x8x32xf32>,
    %c5_i32 = arith.constant 5 : i32
    %425 = arith.index_cast %c5_i32 : i32 to index
    %c0_151 = arith.constant 0 : index
    %c0_152 = arith.constant 0 : index
    %426 = vector.load %arg10[%425, %c0_151, %c0_152] : memref<8x8x96xf32, #tpu.memory_space<vmem>>, vector<1x8x96xf32>
    %427 = vector.shape_cast %426 : vector<1x8x96xf32> to vector<8x96xf32>
    %c0_153 = arith.constant 0 : index
    %c0_154 = arith.constant 0 : index
    %c0_155 = arith.constant 0 : index
    %428 = vector.load %arg4[%c0_153, %c0_154, %c0_155] : memref<2x32x96xbf16, #tpu.memory_space<vmem>>, vector<1x32x96xbf16>
    %429 = vector.shape_cast %428 : vector<1x32x96xbf16> to vector<32x96xbf16>
    %430 = arith.truncf %380 : vector<8x32xf32> to vector<8x32xbf16>
    %cst_156 = arith.constant dense<0.000000e+00> : vector<8x96xf32>
    %431 = tpu.matmul %430, %429, %cst_156 {dimension_numbers = #tpu.dot_dimension_numbers<[1], [0], [0], [1], [0, 0, 1, 1], [], []>} : vector<8x32xbf16>, vector<32x96xbf16>, vector<8x96xf32> -> vector<8x96xf32>
    %432 = vector.broadcast %5 : vector<1x96xf32> to vector<8x96xf32>
    %433 = arith.addf %431, %432 : vector<8x96xf32>
    %434 = vector.extract_strided_slice %427 {offsets = [0, 0], sizes = [8, 32], strides = [1, 1]} : vector<8x96xf32> to vector<8x32xf32>
    %435 = vector.extract_strided_slice %433 {offsets = [0, 0], sizes = [8, 32], strides = [1, 1]} : vector<8x96xf32> to vector<8x32xf32>
    %436 = arith.addf %434, %435 : vector<8x32xf32>
    %437 = vector.extract_strided_slice %427 {offsets = [0, 32], sizes = [8, 32], strides = [1, 1]} : vector<8x96xf32> to vector<8x32xf32>
    %438 = vector.extract_strided_slice %433 {offsets = [0, 32], sizes = [8, 32], strides = [1, 1]} : vector<8x96xf32> to vector<8x32xf32>
    %439 = arith.addf %437, %438 : vector<8x32xf32>
    %cst_157 = arith.constant 0.000000e+00 : f32
    %440 = vector.broadcast %cst_157 : f32 to vector<8x32xf32>
    %441 = arith.subf %440, %436 : vector<8x32xf32>
    %442 = math.exp %441 : vector<8x32xf32>
    %cst_158 = arith.constant 1.000000e+00 : f32
    %443 = vector.broadcast %cst_158 : f32 to vector<8x32xf32>
    %444 = arith.addf %443, %442 : vector<8x32xf32>
    %445 = tpu.reciprocal %444 {approx = true} : vector<8x32xf32> -> vector<8x32xf32>
    %cst_159 = arith.constant 0.000000e+00 : f32
    %446 = vector.broadcast %cst_159 : f32 to vector<8x32xf32>
    %447 = arith.subf %446, %439 : vector<8x32xf32>
    %448 = math.exp %447 : vector<8x32xf32>
    %cst_160 = arith.constant 1.000000e+00 : f32
    %449 = vector.broadcast %cst_160 : f32 to vector<8x32xf32>
    %450 = arith.addf %449, %448 : vector<8x32xf32>
    %451 = tpu.reciprocal %450 {approx = true} : vector<8x32xf32> -> vector<8x32xf32>
    %452 = vector.extract_strided_slice %427 {offsets = [0, 64], sizes = [8, 32], strides = [1, 1]} : vector<8x96xf32> to vector<8x32xf32>
    %453 = vector.extract_strided_slice %433 {offsets = [0, 64], sizes = [8, 32], strides = [1, 1]} : vector<8x96xf32> to vector<8x32xf32>
    %454 = arith.mulf %445, %453 : vector<8x32xf32>
    %455 = arith.addf %452, %454 : vector<8x32xf32>
    %456 = math.tanh %455 : vector<8x32xf32>
    %cst_161 = arith.constant 1.000000e+00 : f32
    %457 = vector.broadcast %cst_161 : f32 to vector<8x32xf32>
    %458 = arith.subf %457, %451 : vector<8x32xf32>
    %459 = arith.mulf %458, %456 : vector<8x32xf32>
    %460 = arith.mulf %451, %380 : vector<8x32xf32>
    %461 = arith.addf %459, %460 : vector<8x32xf32>
    %462 = arith.truncf %461 : vector<8x32xf32> to vector<8x32xbf16>
    %c1_162 = arith.constant 1 : index
    %c0_163 = arith.constant 0 : index
    %c0_164 = arith.constant 0 : index
    %463 = vector.load %arg3[%c1_162, %c0_163, %c0_164] : memref<2x32x96xbf16, #tpu.memory_space<vmem>>, vector<1x32x96xbf16>
    %464 = vector.shape_cast %463 : vector<1x32x96xbf16> to vector<32x96xbf16>
    %cst_165 = arith.constant dense<0.000000e+00> : vector<8x96xf32>
    %465 = tpu.matmul %462, %464, %cst_165 {dimension_numbers = #tpu.dot_dimension_numbers<[1], [0], [0], [1], [0, 0, 1, 1], [], []>} : vector<8x32xbf16>, vector<32x96xbf16>, vector<8x96xf32> -> vector<8x96xf32>
    %466 = vector.broadcast %3 : vector<1x96xf32> to vector<8x96xf32>
    %467 = arith.addf %465, %466 : vector<8x96xf32>
    %c1_166 = arith.constant 1 : index
    %c0_167 = arith.constant 0 : index
    %c0_168 = arith.constant 0 : index
    %468 = vector.load %arg4[%c1_166, %c0_167, %c0_168] : memref<2x32x96xbf16, #tpu.memory_space<vmem>>, vector<1x32x96xbf16>
    %469 = vector.shape_cast %468 : vector<1x32x96xbf16> to vector<32x96xbf16>
    %470 = arith.truncf %420 : vector<8x32xf32> to vector<8x32xbf16>
    %cst_169 = arith.constant dense<0.000000e+00> : vector<8x96xf32>
    %471 = tpu.matmul %470, %469, %cst_169 {dimension_numbers = #tpu.dot_dimension_numbers<[1], [0], [0], [1], [0, 0, 1, 1], [], []>} : vector<8x32xbf16>, vector<32x96xbf16>, vector<8x96xf32> -> vector<8x96xf32>
    %472 = vector.broadcast %7 : vector<1x96xf32> to vector<8x96xf32>
    %473 = arith.addf %471, %472 : vector<8x96xf32>
    %474 = vector.extract_strided_slice %467 {offsets = [0, 0], sizes = [8, 32], strides = [1, 1]} : vector<8x96xf32> to vector<8x32xf32>
    %475 = vector.extract_strided_slice %473 {offsets = [0, 0], sizes = [8, 32], strides = [1, 1]} : vector<8x96xf32> to vector<8x32xf32>
    %476 = arith.addf %474, %475 : vector<8x32xf32>
    %477 = vector.extract_strided_slice %467 {offsets = [0, 32], sizes = [8, 32], strides = [1, 1]} : vector<8x96xf32> to vector<8x32xf32>
    %478 = vector.extract_strided_slice %473 {offsets = [0, 32], sizes = [8, 32], strides = [1, 1]} : vector<8x96xf32> to vector<8x32xf32>
    %479 = arith.addf %477, %478 : vector<8x32xf32>
    %cst_170 = arith.constant 0.000000e+00 : f32
    %480 = vector.broadcast %cst_170 : f32 to vector<8x32xf32>
    %481 = arith.subf %480, %476 : vector<8x32xf32>
    %482 = math.exp %481 : vector<8x32xf32>
    %cst_171 = arith.constant 1.000000e+00 : f32
    %483 = vector.broadcast %cst_171 : f32 to vector<8x32xf32>
    %484 = arith.addf %483, %482 : vector<8x32xf32>
    %485 = tpu.reciprocal %484 {approx = true} : vector<8x32xf32> -> vector<8x32xf32>
    %cst_172 = arith.constant 0.000000e+00 : f32
    %486 = vector.broadcast %cst_172 : f32 to vector<8x32xf32>
    %487 = arith.subf %486, %479 : vector<8x32xf32>
    %488 = math.exp %487 : vector<8x32xf32>
    %cst_173 = arith.constant 1.000000e+00 : f32
    %489 = vector.broadcast %cst_173 : f32 to vector<8x32xf32>
    %490 = arith.addf %489, %488 : vector<8x32xf32>
    %491 = tpu.reciprocal %490 {approx = true} : vector<8x32xf32> -> vector<8x32xf32>
    %492 = vector.extract_strided_slice %467 {offsets = [0, 64], sizes = [8, 32], strides = [1, 1]} : vector<8x96xf32> to vector<8x32xf32>
    %493 = vector.extract_strided_slice %473 {offsets = [0, 64], sizes = [8, 32], strides = [1, 1]} : vector<8x96xf32> to vector<8x32xf32>
    %494 = arith.mulf %485, %493 : vector<8x32xf32>
    %495 = arith.addf %492, %494 : vector<8x32xf32>
    %496 = math.tanh %495 : vector<8x32xf32>
    %cst_174 = arith.constant 1.000000e+00 : f32
    %497 = vector.broadcast %cst_174 : f32 to vector<8x32xf32>
    %498 = arith.subf %497, %491 : vector<8x32xf32>
    %499 = arith.mulf %498, %496 : vector<8x32xf32>
    %500 = arith.mulf %491, %420 : vector<8x32xf32>
    %501 = arith.addf %499, %500 : vector<8x32xf32>
    %502 = arith.index_cast %c5_i32 : i32 to index
    %c0_175 = arith.constant 0 : index
    %c0_176 = arith.constant 0 : index
    %503 = vector.load %arg10[%502, %c0_175, %c0_176] : memref<8x8x96xf32, #tpu.memory_space<vmem>>, vector<1x8x32xf32>
    %504 = vector.shape_cast %503 : vector<1x8x32xf32> to vector<8x32xf32>
    %505 = vector.shape_cast %501 : vector<8x32xf32> to vector<1x8x32xf32>
    tpu.vector_store %arg10[%502, %c0_175, %c0_176], %505 {strides = array<i32>} : memref<8x8x96xf32, #tpu.memory_space<vmem>>, vector<1x8x32xf32>,
    %c6_i32 = arith.constant 6 : i32
    %506 = arith.index_cast %c6_i32 : i32 to index
    %c0_177 = arith.constant 0 : index
    %c0_178 = arith.constant 0 : index
    %507 = vector.load %arg10[%506, %c0_177, %c0_178] : memref<8x8x96xf32, #tpu.memory_space<vmem>>, vector<1x8x96xf32>
    %508 = vector.shape_cast %507 : vector<1x8x96xf32> to vector<8x96xf32>
    %c0_179 = arith.constant 0 : index
    %c0_180 = arith.constant 0 : index
    %c0_181 = arith.constant 0 : index
    %509 = vector.load %arg4[%c0_179, %c0_180, %c0_181] : memref<2x32x96xbf16, #tpu.memory_space<vmem>>, vector<1x32x96xbf16>
    %510 = vector.shape_cast %509 : vector<1x32x96xbf16> to vector<32x96xbf16>
    %511 = arith.truncf %461 : vector<8x32xf32> to vector<8x32xbf16>
    %cst_182 = arith.constant dense<0.000000e+00> : vector<8x96xf32>
    %512 = tpu.matmul %511, %510, %cst_182 {dimension_numbers = #tpu.dot_dimension_numbers<[1], [0], [0], [1], [0, 0, 1, 1], [], []>} : vector<8x32xbf16>, vector<32x96xbf16>, vector<8x96xf32> -> vector<8x96xf32>
    %513 = vector.broadcast %5 : vector<1x96xf32> to vector<8x96xf32>
    %514 = arith.addf %512, %513 : vector<8x96xf32>
    %515 = vector.extract_strided_slice %508 {offsets = [0, 0], sizes = [8, 32], strides = [1, 1]} : vector<8x96xf32> to vector<8x32xf32>
    %516 = vector.extract_strided_slice %514 {offsets = [0, 0], sizes = [8, 32], strides = [1, 1]} : vector<8x96xf32> to vector<8x32xf32>
    %517 = arith.addf %515, %516 : vector<8x32xf32>
    %518 = vector.extract_strided_slice %508 {offsets = [0, 32], sizes = [8, 32], strides = [1, 1]} : vector<8x96xf32> to vector<8x32xf32>
    %519 = vector.extract_strided_slice %514 {offsets = [0, 32], sizes = [8, 32], strides = [1, 1]} : vector<8x96xf32> to vector<8x32xf32>
    %520 = arith.addf %518, %519 : vector<8x32xf32>
    %cst_183 = arith.constant 0.000000e+00 : f32
    %521 = vector.broadcast %cst_183 : f32 to vector<8x32xf32>
    %522 = arith.subf %521, %517 : vector<8x32xf32>
    %523 = math.exp %522 : vector<8x32xf32>
    %cst_184 = arith.constant 1.000000e+00 : f32
    %524 = vector.broadcast %cst_184 : f32 to vector<8x32xf32>
    %525 = arith.addf %524, %523 : vector<8x32xf32>
    %526 = tpu.reciprocal %525 {approx = true} : vector<8x32xf32> -> vector<8x32xf32>
    %cst_185 = arith.constant 0.000000e+00 : f32
    %527 = vector.broadcast %cst_185 : f32 to vector<8x32xf32>
    %528 = arith.subf %527, %520 : vector<8x32xf32>
    %529 = math.exp %528 : vector<8x32xf32>
    %cst_186 = arith.constant 1.000000e+00 : f32
    %530 = vector.broadcast %cst_186 : f32 to vector<8x32xf32>
    %531 = arith.addf %530, %529 : vector<8x32xf32>
    %532 = tpu.reciprocal %531 {approx = true} : vector<8x32xf32> -> vector<8x32xf32>
    %533 = vector.extract_strided_slice %508 {offsets = [0, 64], sizes = [8, 32], strides = [1, 1]} : vector<8x96xf32> to vector<8x32xf32>
    %534 = vector.extract_strided_slice %514 {offsets = [0, 64], sizes = [8, 32], strides = [1, 1]} : vector<8x96xf32> to vector<8x32xf32>
    %535 = arith.mulf %526, %534 : vector<8x32xf32>
    %536 = arith.addf %533, %535 : vector<8x32xf32>
    %537 = math.tanh %536 : vector<8x32xf32>
    %cst_187 = arith.constant 1.000000e+00 : f32
    %538 = vector.broadcast %cst_187 : f32 to vector<8x32xf32>
    %539 = arith.subf %538, %532 : vector<8x32xf32>
    %540 = arith.mulf %539, %537 : vector<8x32xf32>
    %541 = arith.mulf %532, %461 : vector<8x32xf32>
    %542 = arith.addf %540, %541 : vector<8x32xf32>
    %543 = arith.truncf %542 : vector<8x32xf32> to vector<8x32xbf16>
    %c1_188 = arith.constant 1 : index
    %c0_189 = arith.constant 0 : index
    %c0_190 = arith.constant 0 : index
    %544 = vector.load %arg3[%c1_188, %c0_189, %c0_190] : memref<2x32x96xbf16, #tpu.memory_space<vmem>>, vector<1x32x96xbf16>
    %545 = vector.shape_cast %544 : vector<1x32x96xbf16> to vector<32x96xbf16>
    %cst_191 = arith.constant dense<0.000000e+00> : vector<8x96xf32>
    %546 = tpu.matmul %543, %545, %cst_191 {dimension_numbers = #tpu.dot_dimension_numbers<[1], [0], [0], [1], [0, 0, 1, 1], [], []>} : vector<8x32xbf16>, vector<32x96xbf16>, vector<8x96xf32> -> vector<8x96xf32>
    %547 = vector.broadcast %3 : vector<1x96xf32> to vector<8x96xf32>
    %548 = arith.addf %546, %547 : vector<8x96xf32>
    %c1_192 = arith.constant 1 : index
    %c0_193 = arith.constant 0 : index
    %c0_194 = arith.constant 0 : index
    %549 = vector.load %arg4[%c1_192, %c0_193, %c0_194] : memref<2x32x96xbf16, #tpu.memory_space<vmem>>, vector<1x32x96xbf16>
    %550 = vector.shape_cast %549 : vector<1x32x96xbf16> to vector<32x96xbf16>
    %551 = arith.truncf %501 : vector<8x32xf32> to vector<8x32xbf16>
    %cst_195 = arith.constant dense<0.000000e+00> : vector<8x96xf32>
    %552 = tpu.matmul %551, %550, %cst_195 {dimension_numbers = #tpu.dot_dimension_numbers<[1], [0], [0], [1], [0, 0, 1, 1], [], []>} : vector<8x32xbf16>, vector<32x96xbf16>, vector<8x96xf32> -> vector<8x96xf32>
    %553 = vector.broadcast %7 : vector<1x96xf32> to vector<8x96xf32>
    %554 = arith.addf %552, %553 : vector<8x96xf32>
    %555 = vector.extract_strided_slice %548 {offsets = [0, 0], sizes = [8, 32], strides = [1, 1]} : vector<8x96xf32> to vector<8x32xf32>
    %556 = vector.extract_strided_slice %554 {offsets = [0, 0], sizes = [8, 32], strides = [1, 1]} : vector<8x96xf32> to vector<8x32xf32>
    %557 = arith.addf %555, %556 : vector<8x32xf32>
    %558 = vector.extract_strided_slice %548 {offsets = [0, 32], sizes = [8, 32], strides = [1, 1]} : vector<8x96xf32> to vector<8x32xf32>
    %559 = vector.extract_strided_slice %554 {offsets = [0, 32], sizes = [8, 32], strides = [1, 1]} : vector<8x96xf32> to vector<8x32xf32>
    %560 = arith.addf %558, %559 : vector<8x32xf32>
    %cst_196 = arith.constant 0.000000e+00 : f32
    %561 = vector.broadcast %cst_196 : f32 to vector<8x32xf32>
    %562 = arith.subf %561, %557 : vector<8x32xf32>
    %563 = math.exp %562 : vector<8x32xf32>
    %cst_197 = arith.constant 1.000000e+00 : f32
    %564 = vector.broadcast %cst_197 : f32 to vector<8x32xf32>
    %565 = arith.addf %564, %563 : vector<8x32xf32>
    %566 = tpu.reciprocal %565 {approx = true} : vector<8x32xf32> -> vector<8x32xf32>
    %cst_198 = arith.constant 0.000000e+00 : f32
    %567 = vector.broadcast %cst_198 : f32 to vector<8x32xf32>
    %568 = arith.subf %567, %560 : vector<8x32xf32>
    %569 = math.exp %568 : vector<8x32xf32>
    %cst_199 = arith.constant 1.000000e+00 : f32
    %570 = vector.broadcast %cst_199 : f32 to vector<8x32xf32>
    %571 = arith.addf %570, %569 : vector<8x32xf32>
    %572 = tpu.reciprocal %571 {approx = true} : vector<8x32xf32> -> vector<8x32xf32>
    %573 = vector.extract_strided_slice %548 {offsets = [0, 64], sizes = [8, 32], strides = [1, 1]} : vector<8x96xf32> to vector<8x32xf32>
    %574 = vector.extract_strided_slice %554 {offsets = [0, 64], sizes = [8, 32], strides = [1, 1]} : vector<8x96xf32> to vector<8x32xf32>
    %575 = arith.mulf %566, %574 : vector<8x32xf32>
    %576 = arith.addf %573, %575 : vector<8x32xf32>
    %577 = math.tanh %576 : vector<8x32xf32>
    %cst_200 = arith.constant 1.000000e+00 : f32
    %578 = vector.broadcast %cst_200 : f32 to vector<8x32xf32>
    %579 = arith.subf %578, %572 : vector<8x32xf32>
    %580 = arith.mulf %579, %577 : vector<8x32xf32>
    %581 = arith.mulf %572, %501 : vector<8x32xf32>
    %582 = arith.addf %580, %581 : vector<8x32xf32>
    %583 = arith.index_cast %c6_i32 : i32 to index
    %c0_201 = arith.constant 0 : index
    %c0_202 = arith.constant 0 : index
    %584 = vector.load %arg10[%583, %c0_201, %c0_202] : memref<8x8x96xf32, #tpu.memory_space<vmem>>, vector<1x8x32xf32>
    %585 = vector.shape_cast %584 : vector<1x8x32xf32> to vector<8x32xf32>
    %586 = vector.shape_cast %582 : vector<8x32xf32> to vector<1x8x32xf32>
    tpu.vector_store %arg10[%583, %c0_201, %c0_202], %586 {strides = array<i32>} : memref<8x8x96xf32, #tpu.memory_space<vmem>>, vector<1x8x32xf32>,
    %c7_i32 = arith.constant 7 : i32
    %587 = arith.index_cast %c7_i32 : i32 to index
    %c0_203 = arith.constant 0 : index
    %c0_204 = arith.constant 0 : index
    %588 = vector.load %arg10[%587, %c0_203, %c0_204] : memref<8x8x96xf32, #tpu.memory_space<vmem>>, vector<1x8x96xf32>
    %589 = vector.shape_cast %588 : vector<1x8x96xf32> to vector<8x96xf32>
    %c0_205 = arith.constant 0 : index
    %c0_206 = arith.constant 0 : index
    %c0_207 = arith.constant 0 : index
    %590 = vector.load %arg4[%c0_205, %c0_206, %c0_207] : memref<2x32x96xbf16, #tpu.memory_space<vmem>>, vector<1x32x96xbf16>
    %591 = vector.shape_cast %590 : vector<1x32x96xbf16> to vector<32x96xbf16>
    %592 = arith.truncf %542 : vector<8x32xf32> to vector<8x32xbf16>
    %cst_208 = arith.constant dense<0.000000e+00> : vector<8x96xf32>
    %593 = tpu.matmul %592, %591, %cst_208 {dimension_numbers = #tpu.dot_dimension_numbers<[1], [0], [0], [1], [0, 0, 1, 1], [], []>} : vector<8x32xbf16>, vector<32x96xbf16>, vector<8x96xf32> -> vector<8x96xf32>
    %594 = vector.broadcast %5 : vector<1x96xf32> to vector<8x96xf32>
    %595 = arith.addf %593, %594 : vector<8x96xf32>
    %596 = vector.extract_strided_slice %589 {offsets = [0, 0], sizes = [8, 32], strides = [1, 1]} : vector<8x96xf32> to vector<8x32xf32>
    %597 = vector.extract_strided_slice %595 {offsets = [0, 0], sizes = [8, 32], strides = [1, 1]} : vector<8x96xf32> to vector<8x32xf32>
    %598 = arith.addf %596, %597 : vector<8x32xf32>
    %599 = vector.extract_strided_slice %589 {offsets = [0, 32], sizes = [8, 32], strides = [1, 1]} : vector<8x96xf32> to vector<8x32xf32>
    %600 = vector.extract_strided_slice %595 {offsets = [0, 32], sizes = [8, 32], strides = [1, 1]} : vector<8x96xf32> to vector<8x32xf32>
    %601 = arith.addf %599, %600 : vector<8x32xf32>
    %cst_209 = arith.constant 0.000000e+00 : f32
    %602 = vector.broadcast %cst_209 : f32 to vector<8x32xf32>
    %603 = arith.subf %602, %598 : vector<8x32xf32>
    %604 = math.exp %603 : vector<8x32xf32>
    %cst_210 = arith.constant 1.000000e+00 : f32
    %605 = vector.broadcast %cst_210 : f32 to vector<8x32xf32>
    %606 = arith.addf %605, %604 : vector<8x32xf32>
    %607 = tpu.reciprocal %606 {approx = true} : vector<8x32xf32> -> vector<8x32xf32>
    %cst_211 = arith.constant 0.000000e+00 : f32
    %608 = vector.broadcast %cst_211 : f32 to vector<8x32xf32>
    %609 = arith.subf %608, %601 : vector<8x32xf32>
    %610 = math.exp %609 : vector<8x32xf32>
    %cst_212 = arith.constant 1.000000e+00 : f32
    %611 = vector.broadcast %cst_212 : f32 to vector<8x32xf32>
    %612 = arith.addf %611, %610 : vector<8x32xf32>
    %613 = tpu.reciprocal %612 {approx = true} : vector<8x32xf32> -> vector<8x32xf32>
    %614 = vector.extract_strided_slice %589 {offsets = [0, 64], sizes = [8, 32], strides = [1, 1]} : vector<8x96xf32> to vector<8x32xf32>
    %615 = vector.extract_strided_slice %595 {offsets = [0, 64], sizes = [8, 32], strides = [1, 1]} : vector<8x96xf32> to vector<8x32xf32>
    %616 = arith.mulf %607, %615 : vector<8x32xf32>
    %617 = arith.addf %614, %616 : vector<8x32xf32>
    %618 = math.tanh %617 : vector<8x32xf32>
    %cst_213 = arith.constant 1.000000e+00 : f32
    %619 = vector.broadcast %cst_213 : f32 to vector<8x32xf32>
    %620 = arith.subf %619, %613 : vector<8x32xf32>
    %621 = arith.mulf %620, %618 : vector<8x32xf32>
    %622 = arith.mulf %613, %542 : vector<8x32xf32>
    %623 = arith.addf %621, %622 : vector<8x32xf32>
    %624 = arith.truncf %623 : vector<8x32xf32> to vector<8x32xbf16>
    %c1_214 = arith.constant 1 : index
    %c0_215 = arith.constant 0 : index
    %c0_216 = arith.constant 0 : index
    %625 = vector.load %arg3[%c1_214, %c0_215, %c0_216] : memref<2x32x96xbf16, #tpu.memory_space<vmem>>, vector<1x32x96xbf16>
    %626 = vector.shape_cast %625 : vector<1x32x96xbf16> to vector<32x96xbf16>
    %cst_217 = arith.constant dense<0.000000e+00> : vector<8x96xf32>
    %627 = tpu.matmul %624, %626, %cst_217 {dimension_numbers = #tpu.dot_dimension_numbers<[1], [0], [0], [1], [0, 0, 1, 1], [], []>} : vector<8x32xbf16>, vector<32x96xbf16>, vector<8x96xf32> -> vector<8x96xf32>
    %628 = vector.broadcast %3 : vector<1x96xf32> to vector<8x96xf32>
    %629 = arith.addf %627, %628 : vector<8x96xf32>
    %c1_218 = arith.constant 1 : index
    %c0_219 = arith.constant 0 : index
    %c0_220 = arith.constant 0 : index
    %630 = vector.load %arg4[%c1_218, %c0_219, %c0_220] : memref<2x32x96xbf16, #tpu.memory_space<vmem>>, vector<1x32x96xbf16>
    %631 = vector.shape_cast %630 : vector<1x32x96xbf16> to vector<32x96xbf16>
    %632 = arith.truncf %582 : vector<8x32xf32> to vector<8x32xbf16>
    %cst_221 = arith.constant dense<0.000000e+00> : vector<8x96xf32>
    %633 = tpu.matmul %632, %631, %cst_221 {dimension_numbers = #tpu.dot_dimension_numbers<[1], [0], [0], [1], [0, 0, 1, 1], [], []>} : vector<8x32xbf16>, vector<32x96xbf16>, vector<8x96xf32> -> vector<8x96xf32>
    %634 = vector.broadcast %7 : vector<1x96xf32> to vector<8x96xf32>
    %635 = arith.addf %633, %634 : vector<8x96xf32>
    %636 = vector.extract_strided_slice %629 {offsets = [0, 0], sizes = [8, 32], strides = [1, 1]} : vector<8x96xf32> to vector<8x32xf32>
    %637 = vector.extract_strided_slice %635 {offsets = [0, 0], sizes = [8, 32], strides = [1, 1]} : vector<8x96xf32> to vector<8x32xf32>
    %638 = arith.addf %636, %637 : vector<8x32xf32>
    %639 = vector.extract_strided_slice %629 {offsets = [0, 32], sizes = [8, 32], strides = [1, 1]} : vector<8x96xf32> to vector<8x32xf32>
    %640 = vector.extract_strided_slice %635 {offsets = [0, 32], sizes = [8, 32], strides = [1, 1]} : vector<8x96xf32> to vector<8x32xf32>
    %641 = arith.addf %639, %640 : vector<8x32xf32>
    %cst_222 = arith.constant 0.000000e+00 : f32
    %642 = vector.broadcast %cst_222 : f32 to vector<8x32xf32>
    %643 = arith.subf %642, %638 : vector<8x32xf32>
    %644 = math.exp %643 : vector<8x32xf32>
    %cst_223 = arith.constant 1.000000e+00 : f32
    %645 = vector.broadcast %cst_223 : f32 to vector<8x32xf32>
    %646 = arith.addf %645, %644 : vector<8x32xf32>
    %647 = tpu.reciprocal %646 {approx = true} : vector<8x32xf32> -> vector<8x32xf32>
    %cst_224 = arith.constant 0.000000e+00 : f32
    %648 = vector.broadcast %cst_224 : f32 to vector<8x32xf32>
    %649 = arith.subf %648, %641 : vector<8x32xf32>
    %650 = math.exp %649 : vector<8x32xf32>
    %cst_225 = arith.constant 1.000000e+00 : f32
    %651 = vector.broadcast %cst_225 : f32 to vector<8x32xf32>
    %652 = arith.addf %651, %650 : vector<8x32xf32>
    %653 = tpu.reciprocal %652 {approx = true} : vector<8x32xf32> -> vector<8x32xf32>
    %654 = vector.extract_strided_slice %629 {offsets = [0, 64], sizes = [8, 32], strides = [1, 1]} : vector<8x96xf32> to vector<8x32xf32>
    %655 = vector.extract_strided_slice %635 {offsets = [0, 64], sizes = [8, 32], strides = [1, 1]} : vector<8x96xf32> to vector<8x32xf32>
    %656 = arith.mulf %647, %655 : vector<8x32xf32>
    %657 = arith.addf %654, %656 : vector<8x32xf32>
    %658 = math.tanh %657 : vector<8x32xf32>
    %cst_226 = arith.constant 1.000000e+00 : f32
    %659 = vector.broadcast %cst_226 : f32 to vector<8x32xf32>
    %660 = arith.subf %659, %653 : vector<8x32xf32>
    %661 = arith.mulf %660, %658 : vector<8x32xf32>
    %662 = arith.mulf %653, %582 : vector<8x32xf32>
    %663 = arith.addf %661, %662 : vector<8x32xf32>
    %664 = arith.index_cast %c7_i32 : i32 to index
    %c0_227 = arith.constant 0 : index
    %c0_228 = arith.constant 0 : index
    %665 = vector.load %arg10[%664, %c0_227, %c0_228] : memref<8x8x96xf32, #tpu.memory_space<vmem>>, vector<1x8x32xf32>
    %666 = vector.shape_cast %665 : vector<1x8x32xf32> to vector<8x32xf32>
    %667 = vector.shape_cast %663 : vector<8x32xf32> to vector<1x8x32xf32>
    tpu.vector_store %arg10[%664, %c0_227, %c0_228], %667 {strides = array<i32>} : memref<8x8x96xf32, #tpu.memory_space<vmem>>, vector<1x8x32xf32>,
    %c8_i32 = arith.constant 8 : i32
    %c0_229 = arith.constant 0 : index
    %c0_230 = arith.constant 0 : index
    %668 = vector.load %arg2[%c0_229, %c0_230] : memref<8x1xi32, #tpu.memory_space<vmem>>, vector<8x1xi32>
    %669 = tpu.iota {dimensions = array<i32: 0>} : vector<8x8x1xi32>
    %670 = vector.shape_cast %668 : vector<8x1xi32> to vector<1x8x1xi32>
    %671 = vector.broadcast %670 : vector<1x8x1xi32> to vector<8x8x1xi32>
    %672 = arith.cmpi slt, %669, %671 : vector<8x8x1xi32>
    %c0_231 = arith.constant 0 : index
    %c0_232 = arith.constant 0 : index
    %c0_233 = arith.constant 0 : index
    %673 = vector.load %arg10[%c0_231, %c0_232, %c0_233] : memref<8x8x96xf32, #tpu.memory_space<vmem>>, vector<8x8x32xf32>
    %cst_234 = arith.constant -1.000000e+00 : f32
    %674 = vector.shape_cast %672 : vector<8x8x1xi1> to vector<8x8x1xi1>
    %675 = vector.broadcast %674 : vector<8x8x1xi1> to vector<8x8x32xi1>
    %676 = vector.broadcast %cst_234 : f32 to vector<8x8x32xf32>
    %677 = arith.select %675, %673, %676 : vector<8x8x32xi1>, vector<8x8x32xf32>
    %678 = vector.shape_cast %677 : vector<8x8x32xf32> to vector<64x32xf32>
    %679 = arith.truncf %678 : vector<64x32xf32> to vector<64x32xbf16>
    %c0_235 = arith.constant 0 : index
    %c0_236 = arith.constant 0 : index
    %680 = vector.load %arg7[%c0_235, %c0_236] : memref<32x8xbf16, #tpu.memory_space<vmem>>, vector<32x8xbf16>
    %cst_237 = arith.constant dense<0.000000e+00> : vector<64x8xf32>
    %681 = tpu.matmul %679, %680, %cst_237 {dimension_numbers = #tpu.dot_dimension_numbers<[1], [0], [0], [1], [0, 0, 1, 1], [], []>} : vector<64x32xbf16>, vector<32x8xbf16>, vector<64x8xf32> -> vector<64x8xf32>
    %c0_238 = arith.constant 0 : index
    %c0_239 = arith.constant 0 : index
    %682 = vector.load %arg8[%c0_238, %c0_239] : memref<1x8xf32, #tpu.memory_space<vmem>>, vector<1x8xf32>
    %683 = vector.broadcast %682 : vector<1x8xf32> to vector<64x8xf32>
    %684 = arith.addf %681, %683 : vector<64x8xf32>
    %685 = vector.shape_cast %684 : vector<64x8xf32> to vector<8x8x8xf32>
    %c0_240 = arith.constant 0 : index
    %c0_241 = arith.constant 0 : index
    %c0_242 = arith.constant 0 : index
    %686 = vector.load %arg9[%c0_240, %c0_241, %c0_242] : memref<8x8x8xf32, #tpu.memory_space<vmem>>, vector<8x8x8xf32>
    tpu.vector_store %arg9[%c0_240, %c0_241, %c0_242], %685 {strides = array<i32>} : memref<8x8x8xf32, #tpu.memory_space<vmem>>, vector<8x8x8xf32>,
    return
  }
  func.func @transform_0(%arg0: i32) -> (i32, i32, i32) {
    %c0_i32 = arith.constant 0 : i32
    %c0_i32_0 = arith.constant 0 : i32
    %c0_i32_1 = arith.constant 0 : i32
    return %c0_i32, %arg0, %c0_i32_0 : i32, i32, i32
  }
  func.func @transform_1(%arg0: i32) -> (i32, i32) {
    %c0_i32 = arith.constant 0 : i32
    %c0_i32_0 = arith.constant 0 : i32
    return %arg0, %c0_i32 : i32, i32
  }
  func.func @transform_2(%arg0: i32) -> (i32, i32, i32) {
    %c0_i32 = arith.constant 0 : i32
    %c0_i32_0 = arith.constant 0 : i32
    %c0_i32_1 = arith.constant 0 : i32
    %c0_i32_2 = arith.constant 0 : i32
    return %c0_i32, %c0_i32_0, %c0_i32_1 : i32, i32, i32
  }
  func.func @transform_3(%arg0: i32) -> (i32, i32, i32) {
    %c0_i32 = arith.constant 0 : i32
    %c0_i32_0 = arith.constant 0 : i32
    %c0_i32_1 = arith.constant 0 : i32
    %c0_i32_2 = arith.constant 0 : i32
    return %c0_i32, %c0_i32_0, %c0_i32_1 : i32, i32, i32
  }
  func.func @transform_4(%arg0: i32) -> (i32, i32, i32) {
    %c0_i32 = arith.constant 0 : i32
    %c0_i32_0 = arith.constant 0 : i32
    %c0_i32_1 = arith.constant 0 : i32
    %c0_i32_2 = arith.constant 0 : i32
    return %c0_i32, %c0_i32_0, %c0_i32_1 : i32, i32, i32
  }
  func.func @transform_5(%arg0: i32) -> (i32, i32, i32) {
    %c0_i32 = arith.constant 0 : i32
    %c0_i32_0 = arith.constant 0 : i32
    %c0_i32_1 = arith.constant 0 : i32
    %c0_i32_2 = arith.constant 0 : i32
    return %c0_i32, %c0_i32_0, %c0_i32_1 : i32, i32, i32
  }
  func.func @transform_6(%arg0: i32) -> (i32, i32) {
    %c0_i32 = arith.constant 0 : i32
    %c0_i32_0 = arith.constant 0 : i32
    %c0_i32_1 = arith.constant 0 : i32
    return %c0_i32, %c0_i32_0 : i32, i32
  }
  func.func @transform_7(%arg0: i32) -> (i32, i32) {
    %c0_i32 = arith.constant 0 : i32
    %c0_i32_0 = arith.constant 0 : i32
    %c0_i32_1 = arith.constant 0 : i32
    return %c0_i32, %c0_i32_0 : i32, i32
  }
  func.func @transform_8(%arg0: i32) -> (i32, i32, i32) {
    %c0_i32 = arith.constant 0 : i32
    %c0_i32_0 = arith.constant 0 : i32
    %c0_i32_1 = arith.constant 0 : i32
    return %c0_i32, %arg0, %c0_i32_0 : i32, i32, i32
  }
}

</mosaic_0001>

<llo_original>
// kernel: tpu_custom_call.1
$region0: #{tpu_custom_call.1}
  #allocation0 [shape = 'u32[]', space=smem, size = 0x4, offset = 0x4, fixed_abs, tag = 'smem constant byte address 0x4 - core index']
  #allocation1 [shape = 'u32[144,128]{1,0:T(1,128)}', space=vmem, size = 0x12000, scoped, tag = 'internal scratch']
  #allocation2 [shape = 'f32[8,8,96]{2,1,0:T(8,128)}', space=vmem, size = 0x8000, scoped, tag = 'scratch operand']
  %s0 = inlined_call_operand.hbm [shape: f32[8,8,32], index: 0, kind: input, shape index: {}]
  %s1 = inlined_call_operand.vmem [shape: s32[8,1], index: 1, kind: input, shape index: {}]
  %s2 = inlined_call_operand.vmem [shape: bf16[2,32,96], index: 2, kind: input, shape index: {}]
  %s3 = inlined_call_operand.hbm [shape: bf16[2,32,96], index: 3, kind: input, shape index: {}]
  %s4 = inlined_call_operand.hbm [shape: f32[2,1,96], index: 4, kind: input, shape index: {}]
  %s5 = inlined_call_operand.vmem [shape: f32[2,1,96], index: 5, kind: input, shape index: {}]
  %s6 = inlined_call_operand.vmem [shape: bf16[32,8], index: 6, kind: input, shape index: {}]
  %s7 = inlined_call_operand.vmem [shape: f32[1,8], index: 7, kind: input, shape index: {}]
  %s8 = inlined_call_operand.hbm [shape: f32[8,8,8], index: 8, kind: output, shape index: {}]
  %s9 = sld [smem:[#allocation0]]
  $region54: #{tpu_custom_call.1} parent=0
    _
  %s11 = ssub.s32 1, %s9
  %s12 = scalar_select 0, %s11, %s9
  $region1: #{tpu_custom_call.1} parent=0
    #allocation3 [shape = 'u8[32768]{0}', space=vmem, size = 0x8000, scoped, tag = 'input window, operand 0, single buffered']
    #allocation4 [shape = 's32[1]{0}', space=sflag, size = 0x4, scoped, tag = 'scoped memory for tpu_custom_call.1']
    #allocation5 [shape = 's32[1]{0}', space=sflag, size = 0x4, scoped, tag = 'scoped memory for tpu_custom_call.1']
    #allocation6 [shape = 'u8[16384]{0}', space=vmem, size = 0x4000, scoped, tag = 'input window, operand 3, single buffered']
    #allocation7 [shape = 's32[1]{0}', space=sflag, size = 0x4, scoped, tag = 'scoped memory for tpu_custom_call.1']
    #allocation8 [shape = 'u8[1024]{0}', space=vmem, size = 0x400, scoped, tag = 'input window, operand 4, single buffered']
    #allocation9 [shape = 'u8[32768]{0}', space=vmem, size = 0x8000, scoped, tag = 'output window, operand 0, single buffered']
    %13 = vsyncpa [#allocation4], 0
    %14 = vsyncpa [#allocation7], 0
    %15 = vsyncpa [#allocation5], 0
    // Predicated region
    $region2: #{tpu_custom_call.1} parent=1 // pred_check
      _
    $region3: #{tpu_custom_call.1} parent=1 // pred_check_branch
      %17 = sbr.rel (0) target = $region5
    $region4: #{tpu_custom_call.1} parent=1 // pred_region
      %s19 = ssub.s32 1024, 1024
      %20 = vsyncadd [#allocation4], %s19
      %s21 = sshll.u32 [#allocation3], 4
      %s22 = int_to_ptr.vmem [resolvable:$true] %s21
      %27 = dma.hbm_to_vmem [thread:$0]  %s0, 1024, %s22, [#allocation4], 128, 128, 8
    $region5: #{tpu_custom_call.1} parent=1 // pred_fallthru
      _
    // Predicated region
    $region6: #{tpu_custom_call.1} parent=1 // pred_check
      _
    $region7: #{tpu_custom_call.1} parent=1 // pred_check_branch
      %29 = sbr.rel (0) target = $region9
    $region8: #{tpu_custom_call.1} parent=1 // pred_region
      _
    $region9: #{tpu_custom_call.1} parent=1 // pred_fallthru
      _
    // Predicated region
    $region10: #{tpu_custom_call.1} parent=1 // pred_check
      _
    $region11: #{tpu_custom_call.1} parent=1 // pred_check_branch
      %31 = sbr.rel (0) target = $region13
    $region12: #{tpu_custom_call.1} parent=1 // pred_region
      _
    $region13: #{tpu_custom_call.1} parent=1 // pred_fallthru
      _
    // Predicated region
    $region14: #{tpu_custom_call.1} parent=1 // pred_check
      _
    $region15: #{tpu_custom_call.1} parent=1 // pred_check_branch
      %33 = sbr.rel (0) target = $region17
    $region16: #{tpu_custom_call.1} parent=1 // pred_region
      %s35 = ssub.s32 512, 512
      %36 = vsyncadd [#allocation7], %s35
      %s37 = sshll.u32 [#allocation6], 4
      %s38 = int_to_ptr.vmem [resolvable:$true] %s37
      %43 = dma.hbm_to_vmem [thread:$0]  %s3, 512, %s38, [#allocation7], 64, 64, 4
    $region17: #{tpu_custom_call.1} parent=1 // pred_fallthru
      _
    // Predicated region
    $region18: #{tpu_custom_call.1} parent=1 // pred_check
      _
    $region19: #{tpu_custom_call.1} parent=1 // pred_check_branch
      %45 = sbr.rel (0) target = $region21
    $region20: #{tpu_custom_call.1} parent=1 // pred_region
      %s47 = ssub.s32 32, 32
      %48 = vsyncadd [#allocation7], %s47
      %s49 = sshll.u32 [#allocation8], 4
      %s50 = int_to_ptr.vmem [resolvable:$true] %s49
      %55 = dma.hbm_to_vmem [thread:$0]  %s4, 32, %s50, [#allocation7], 16, 16, 1
    $region21: #{tpu_custom_call.1} parent=1 // pred_fallthru
      _
    // Predicated region
    $region22: #{tpu_custom_call.1} parent=1 // pred_check
      _
    $region23: #{tpu_custom_call.1} parent=1 // pred_check_branch
      %57 = sbr.rel (0) target = $region25
    $region24: #{tpu_custom_call.1} parent=1 // pred_region
      _
    $region25: #{tpu_custom_call.1} parent=1 // pred_fallthru
      _
    // Predicated region
    $region26: #{tpu_custom_call.1} parent=1 // pred_check
      _
    $region27: #{tpu_custom_call.1} parent=1 // pred_check_branch
      %59 = sbr.rel (0) target = $region29
    $region28: #{tpu_custom_call.1} parent=1 // pred_region
      _
    $region29: #{tpu_custom_call.1} parent=1 // pred_fallthru
      _
    // Predicated region
    $region30: #{tpu_custom_call.1} parent=1 // pred_check
      _
    $region31: #{tpu_custom_call.1} parent=1 // pred_check_branch
      %61 = sbr.rel (0) target = $region33
    $region32: #{tpu_custom_call.1} parent=1 // pred_region
      _
    $region33: #{tpu_custom_call.1} parent=1 // pred_fallthru
      _
    // Predicated region
    $region34: #{tpu_custom_call.1} parent=1 // pred_check
      _
    $region35: #{tpu_custom_call.1} parent=1 // pred_check_branch
      %63 = sbr.rel (0) target = $region37
    $region36: #{tpu_custom_call.1} parent=1 // pred_region
      %64 = dma.done [#allocation4], 1024
    $region37: #{tpu_custom_call.1} parent=1 // pred_fallthru
      _
    // Predicated region
    $region38: #{tpu_custom_call.1} parent=1 // pred_check
      _
    $region39: #{tpu_custom_call.1} parent=1 // pred_check_branch
      %66 = sbr.rel (0) target = $region41
    $region40: #{tpu_custom_call.1} parent=1 // pred_region
      %67 = dma.done [#allocation7], 512
    $region41: #{tpu_custom_call.1} parent=1 // pred_fallthru
      _
    // Predicated region
    $region42: #{tpu_custom_call.1} parent=1 // pred_check
      _
    $region43: #{tpu_custom_call.1} parent=1 // pred_check_branch
      %69 = sbr.rel (0) target = $region45
    $region44: #{tpu_custom_call.1} parent=1 // pred_region
      %70 = dma.done [#allocation7], 32
    $region45: #{tpu_custom_call.1} parent=1 // pred_fallthru
      _
    %v72 = vld [vmem:[#allocation8] sm:$0x1]
    %s73 = scalar_lea.vmem [#allocation8], 1
    %v74 = vld [vmem:[%s73] sm:$0x1]
    %v75 = vld [vmem:[%s5] sm:$0x1]
    %s76 = scalar_lea.vmem %s5, 1
    %v77 = vld [vmem:[%s76] sm:$0x1]
    %v78 = vld [vmem:[#allocation3] sm:$0xff]
    %v79 = vld [vmem:[#allocation3 + $0x8] sm:$0xff]
    %v80 = vld [vmem:[#allocation3 + $0x10] sm:$0xff]
    %v81 = vld [vmem:[#allocation3 + $0x18] sm:$0xff]
    %v82 = vld [vmem:[#allocation3 + $0x20] sm:$0xff]
    %v83 = vld [vmem:[#allocation3 + $0x28] sm:$0xff]
    %v84 = vld [vmem:[#allocation3 + $0x30] sm:$0xff]
    %v85 = vld [vmem:[#allocation3 + $0x38] sm:$0xff]
    %v86 = vpack.c.bf16 %v78, %v78
    %v87 = vpack.c.bf16 %v79, %v79
    %v88 = vpack.c.bf16 %v80, %v80
    %v89 = vpack.c.bf16 %v81, %v81
    %v90 = vpack.c.bf16 %v82, %v82
    %v91 = vpack.c.bf16 %v83, %v83
    %v92 = vpack.c.bf16 %v84, %v84
    %v93 = vpack.c.bf16 %v85, %v85
    %v94 = vld [vmem:[%s2] sm:$0xf]
    %v95 = vld [vmem:[%s2 + $0x4] sm:$0xf]
    %v96 = vld [vmem:[%s2 + $0x8] sm:$0xf]
    %v97 = vld [vmem:[%s2 + $0xc] sm:$0xf]
    %v99 = vlaneseq
    %v100 = vshrl.u32 %v99, 7
    %v101 = vsub.s32 0, %v100
    %v102 = vrot.slane %v72, %v101
    %v112 = vunpack.c.l.b16 %v86
    %v113 = vunpack.c.l.b16 %v87
    %v114 = vunpack.c.l.b16 %v88
    %v115 = vunpack.c.l.b16 %v89
    %v116 = vunpack.c.l.b16 %v90
    %v117 = vunpack.c.l.b16 %v91
    %v118 = vunpack.c.l.b16 %v92
    %v119 = vunpack.c.l.b16 %v93
    %v120 = vpack.c.b16 %v113, %v112
    %v121 = vpack.c.b16 %v115, %v114
    %v122 = vpack.c.b16 %v117, %v116
    %v123 = vpack.c.b16 %v119, %v118
    %v128 = vunpack.c.l.b16 %v94
    %v129 = vunpack.c.l.b16 %v95
    %v130 = vunpack.c.l.b16 %v96
    %v131 = vunpack.c.l.b16 %v97
    %v132 = vpack.c.b16 %v129, %v128
    %v133 = vpack.c.b16 %v131, %v130
    %vm136 = vcmask 261120
    %v138 = vsel %vm136, %v120, 0
    %v141 = vsel %vm136, %v121, 0
    %v144 = vsel %vm136, %v122, 0
    %v147 = vsel %vm136, %v123, 0
    %149 = vmatprep.subr.bf16.mxu0 0
    %150 = vmatpush1.bf16.msra.mxu0 0
    %151 = vmatprep.subr.bf16.mxu0 0
    %152 = vmatpush1.bf16.msra.mxu0 0
    %153 = vmatprep.subr.bf16.mxu0 0
    %154 = vmatpush1.bf16.msra.mxu0 0
    %155 = vmatprep.subr.bf16.mxu0 0
    %156 = vmatpush1.bf16.msra.mxu0 0
    %157 = vmatprep.subr.bf16.mxu0 0
    %158 = vmatpush1.bf16.msra.mxu0 0
    %159 = vmatprep.subr.bf16.mxu0 0
    %160 = vmatpush1.bf16.msra.mxu0 0
    %161 = vmatprep.subr.bf16.mxu0 0
    %162 = vmatpush1.bf16.msra.mxu0 %v133
    %163 = vmatprep.subr.bf16.mxu0 0
    %164 = vmatpush1.bf16.msra.mxu0 %v132
    %165 = vmatprep.subr.bf16.mxu0 0
    %166 = vmatpush2.bf16.msra.mxu0 0
    %167 = vmatprep.subr.bf16.mxu0 0
    %168 = vmatpush2.bf16.msra.mxu0 0
    %169 = vmatprep.subr.bf16.mxu0 0
    %170 = vmatpush2.bf16.msra.mxu0 0
    %171 = vmatprep.subr.bf16.mxu0 0
    %172 = vmatpush2.bf16.msra.mxu0 0
    %173 = vmatprep.subr.bf16.mxu0 0
    %174 = vmatpush2.bf16.msra.mxu0 0
    %175 = vmatprep.subr.bf16.mxu0 0
    %176 = vmatpush2.bf16.msra.mxu0 0
    %177 = vmatprep.subr.bf16.mxu0 0
    %178 = vmatpush2.bf16.msra.mxu0 0
    %179 = vmatprep.subr.bf16.mxu0 0
    %180 = vmatpush2.bf16.msra.mxu0 0
    %181 = vmatprep.mubr.bf16.mxu0 0
    %182 = vmatmul.mubr.bf16.gmra.mxu0 %v138
    %v183 = vpop.f32.mrf.mxu0
    %v184 = vadd.f32 %v102, %v183
    %v185 = vpop.f32.mrf.mxu0
    %v186 = vpop.f32.mrf.mxu0
    %v187 = vadd.f32 %v102, %v186
    %v188 = vpop.f32.mrf.mxu0
    %189 = vmatprep.mubr.bf16.mxu0 0
    %190 = vmatmul.mubr.bf16.gmra.mxu0 %v141
    %v191 = vpop.f32.mrf.mxu0
    %v192 = vadd.f32 %v102, %v191
    %v193 = vpop.f32.mrf.mxu0
    %v194 = vpop.f32.mrf.mxu0
    %v195 = vadd.f32 %v102, %v194
    %v196 = vpop.f32.mrf.mxu0
    %197 = vmatprep.mubr.bf16.mxu0 0
    %198 = vmatmul.mubr.bf16.gmra.mxu0 %v144
    %v199 = vpop.f32.mrf.mxu0
    %v200 = vadd.f32 %v102, %v199
    %v201 = vpop.f32.mrf.mxu0
    %v202 = vpop.f32.mrf.mxu0
    %v203 = vadd.f32 %v102, %v202
    %v204 = vpop.f32.mrf.mxu0
    %205 = vmatprep.mubr.bf16.mxu0 0
    %206 = vmatmul.mubr.bf16.gmra.mxu0 %v147
    %v207 = vpop.f32.mrf.mxu0
    %v208 = vadd.f32 %v102, %v207
    %v209 = vpop.f32.mrf.mxu0
    %v210 = vpop.f32.mrf.mxu0
    %v211 = vadd.f32 %v102, %v210
    %v212 = vpop.f32.mrf.mxu0
    %213 = vdwg.mxu0
    %vm214 = vcmask 785408
    %215 = vst.msk [vmem:[#allocation2] sm:$0xff] %vm214, %v184
    %216 = vst.msk [vmem:[#allocation2 + $0x8] sm:$0xff] %vm214, %v187
    %217 = vst.msk [vmem:[#allocation2 + $0x10] sm:$0xff] %vm214, %v192
    %218 = vst.msk [vmem:[#allocation2 + $0x18] sm:$0xff] %vm214, %v195
    %219 = vst.msk [vmem:[#allocation2 + $0x20] sm:$0xff] %vm214, %v200
    %220 = vst.msk [vmem:[#allocation2 + $0x28] sm:$0xff] %vm214, %v203
    %221 = vst.msk [vmem:[#allocation2 + $0x30] sm:$0xff] %vm214, %v208
    %222 = vst.msk [vmem:[#allocation2 + $0x38] sm:$0xff] %vm214, %v211
    %v223 = vld [vmem:[#allocation2] sm:$0xff]
    %v224 = vld [vmem:[#allocation6] sm:$0xf]
    %v225 = vld [vmem:[#allocation6 + $0x4] sm:$0xf]
    %v226 = vld [vmem:[#allocation6 + $0x8] sm:$0xf]
    %v227 = vld [vmem:[#allocation6 + $0xc] sm:$0xf]
    %v229 = vlaneseq
    %v230 = vshrl.u32 %v229, 7
    %v231 = vsub.s32 0, %v230
    %v232 = vrot.slane %v75, %v231
    %v238 = vunpack.c.l.b16 %v224
    %v239 = vunpack.c.l.b16 %v225
    %v240 = vunpack.c.l.b16 %v226
    %v241 = vunpack.c.l.b16 %v227
    %v242 = vpack.c.b16 %v239, %v238
    %v243 = vpack.c.b16 %v241, %v240
    %v247 = vsel %vm136, 0, 0
    %249 = vmatprep.subr.bf16.mxu0 0
    %250 = vmatpush1.bf16.msra.mxu0 0
    %251 = vmatprep.subr.bf16.mxu0 0
    %252 = vmatpush1.bf16.msra.mxu0 0
    %253 = vmatprep.subr.bf16.mxu0 0
    %254 = vmatpush1.bf16.msra.mxu0 0
    %255 = vmatprep.subr.bf16.mxu0 0
    %256 = vmatpush1.bf16.msra.mxu0 0
    %257 = vmatprep.subr.bf16.mxu0 0
    %258 = vmatpush1.bf16.msra.mxu0 0
    %259 = vmatprep.subr.bf16.mxu0 0
    %260 = vmatpush1.bf16.msra.mxu0 0
    %261 = vmatprep.subr.bf16.mxu0 0
    %262 = vmatpush1.bf16.msra.mxu0 %v243
    %263 = vmatprep.subr.bf16.mxu0 0
    %264 = vmatpush1.bf16.msra.mxu0 %v242
    %265 = vmatprep.subr.bf16.mxu0 0
    %266 = vmatpush2.bf16.msra.mxu0 0
    %267 = vmatprep.subr.bf16.mxu0 0
    %268 = vmatpush2.bf16.msra.mxu0 0
    %269 = vmatprep.subr.bf16.mxu0 0
    %270 = vmatpush2.bf16.msra.mxu0 0
    %271 = vmatprep.subr.bf16.mxu0 0
    %272 = vmatpush2.bf16.msra.mxu0 0
    %273 = vmatprep.subr.bf16.mxu0 0
    %274 = vmatpush2.bf16.msra.mxu0 0
    %275 = vmatprep.subr.bf16.mxu0 0
    %276 = vmatpush2.bf16.msra.mxu0 0
    %277 = vmatprep.subr.bf16.mxu0 0
    %278 = vmatpush2.bf16.msra.mxu0 0
    %279 = vmatprep.subr.bf16.mxu0 0
    %280 = vmatpush2.bf16.msra.mxu0 0
    %281 = vmatprep.mubr.bf16.mxu0 0
    %282 = vmatmul.mubr.bf16.gmra.mxu0 %v247
    %v283 = vpop.f32.mrf.mxu0
    %v284 = vadd.f32 %v232, %v283
    %v285 = vpop.f32.mrf.mxu0
    %v286 = vpop.f32.mrf.mxu0
    %v287 = vpop.f32.mrf.mxu0
    %288 = vdwg.mxu0
    %v289 = vadd.f32 %v223, %v284
    %v290 = vsub.f32 0.0, %v289
    %v291 = vmul.f32 %v290, 1.442695
    %v292 = vpow.pop %v291
    %v293 = vadd.f32 %v292, 1.0
    %v294 = vrcp.pop %v293
    %296 = vrot.lane.b32.xlu0 %v284, 64
    %v297 = vpop.permute.xlu0 %296
    %v299 = vmul.f32 %v294, %v297
    %301 = vrot.lane.b32.xlu0 %v299, 64
    %v302 = vpop.permute.xlu0 %301
    %v304 = vadd.f32 %v223, %v302
    %v305 = vtanh.pop %v304
    %v306 = vsub.f32 1.0, %v294
    %308 = vrot.lane.b32.xlu0 %v305, 96
    %v309 = vpop.permute.xlu0 %308
    %v311 = vmul.f32 %v306, %v309
    %v312 = vmul.f32 %v294, 0.0
    %v313 = vadd.f32 %v311, %v312
    %v314 = vpack.c.bf16 %v313, %v313
    %s315 = scalar_lea.vmem %s2, 16
    %v316 = vld [vmem:[%s315] sm:$0xf]
    %v317 = vld [vmem:[%s315 + $0x4] sm:$0xf]
    %v318 = vld [vmem:[%s315 + $0x8] sm:$0xf]
    %v319 = vld [vmem:[%s315 + $0xc] sm:$0xf]
    %v321 = vlaneseq
    %v322 = vshrl.u32 %v321, 7
    %v323 = vsub.s32 0, %v322
    %v324 = vrot.slane %v74, %v323
    %327 = vrot.lane.b32.xlu0 %v314, 96
    %v328 = vpop.permute.xlu0 %327
    %v333 = vunpack.c.l.b16 %v316
    %v334 = vunpack.c.l.b16 %v317
    %v335 = vunpack.c.l.b16 %v318
    %v336 = vunpack.c.l.b16 %v319
    %v337 = vpack.c.b16 %v334, %v333
    %v338 = vpack.c.b16 %v336, %v335
    %v342 = vsel %vm136, %v328, 0
    %344 = vmatprep.subr.bf16.mxu0 0
    %345 = vmatpush1.bf16.msra.mxu0 0
    %346 = vmatprep.subr.bf16.mxu0 0
    %347 = vmatpush1.bf16.msra.mxu0 0
    %348 = vmatprep.subr.bf16.mxu0 0
    %349 = vmatpush1.bf16.msra.mxu0 0
    %350 = vmatprep.subr.bf16.mxu0 0
    %351 = vmatpush1.bf16.msra.mxu0 0
    %352 = vmatprep.subr.bf16.mxu0 0
    %353 = vmatpush1.bf16.msra.mxu0 0
    %354 = vmatprep.subr.bf16.mxu0 0
    %355 = vmatpush1.bf16.msra.mxu0 0
    %356 = vmatprep.subr.bf16.mxu0 0
    %357 = vmatpush1.bf16.msra.mxu0 %v338
    %358 = vmatprep.subr.bf16.mxu0 0
    %359 = vmatpush1.bf16.msra.mxu0 %v337
    %360 = vmatprep.subr.bf16.mxu0 0
    %361 = vmatpush2.bf16.msra.mxu0 0
    %362 = vmatprep.subr.bf16.mxu0 0
    %363 = vmatpush2.bf16.msra.mxu0 0
    %364 = vmatprep.subr.bf16.mxu0 0
    %365 = vmatpush2.bf16.msra.mxu0 0
    %366 = vmatprep.subr.bf16.mxu0 0
    %367 = vmatpush2.bf16.msra.mxu0 0
    %368 = vmatprep.subr.bf16.mxu0 0
    %369 = vmatpush2.bf16.msra.mxu0 0
    %370 = vmatprep.subr.bf16.mxu0 0
    %371 = vmatpush2.bf16.msra.mxu0 0
    %372 = vmatprep.subr.bf16.mxu0 0
    %373 = vmatpush2.bf16.msra.mxu0 0
    %374 = vmatprep.subr.bf16.mxu0 0
    %375 = vmatpush2.bf16.msra.mxu0 0
    %376 = vmatprep.mubr.bf16.mxu0 0
    %377 = vmatmul.mubr.bf16.gmra.mxu0 %v342
    %v378 = vpop.f32.mrf.mxu0
    %v379 = vadd.f32 %v324, %v378
    %v380 = vpop.f32.mrf.mxu0
    %v381 = vpop.f32.mrf.mxu0
    %v382 = vpop.f32.mrf.mxu0
    %383 = vdwg.mxu0
    %s384 = scalar_lea.vmem [#allocation6], 16
    %v385 = vld [vmem:[%s384] sm:$0xf]
    %v386 = vld [vmem:[%s384 + $0x4] sm:$0xf]
    %v387 = vld [vmem:[%s384 + $0x8] sm:$0xf]
    %v388 = vld [vmem:[%s384 + $0xc] sm:$0xf]
    %v390 = vlaneseq
    %v391 = vshrl.u32 %v390, 7
    %v392 = vsub.s32 0, %v391
    %v393 = vrot.slane %v77, %v392
    %v399 = vunpack.c.l.b16 %v385
    %v400 = vunpack.c.l.b16 %v386
    %v401 = vunpack.c.l.b16 %v387
    %v402 = vunpack.c.l.b16 %v388
    %v403 = vpack.c.b16 %v400, %v399
    %v404 = vpack.c.b16 %v402, %v401
    %407 = vmatprep.subr.bf16.mxu0 0
    %408 = vmatpush1.bf16.msra.mxu0 0
    %409 = vmatprep.subr.bf16.mxu0 0
    %410 = vmatpush1.bf16.msra.mxu0 0
    %411 = vmatprep.subr.bf16.mxu0 0
    %412 = vmatpush1.bf16.msra.mxu0 0
    %413 = vmatprep.subr.bf16.mxu0 0
    %414 = vmatpush1.bf16.msra.mxu0 0
    %415 = vmatprep.subr.bf16.mxu0 0
    %416 = vmatpush1.bf16.msra.mxu0 0
    %417 = vmatprep.subr.bf16.mxu0 0
    %418 = vmatpush1.bf16.msra.mxu0 0
    %419 = vmatprep.subr.bf16.mxu0 0
    %420 = vmatpush1.bf16.msra.mxu0 %v404
    %421 = vmatprep.subr.bf16.mxu0 0
    %422 = vmatpush1.bf16.msra.mxu0 %v403
    %423 = vmatprep.subr.bf16.mxu0 0
    %424 = vmatpush2.bf16.msra.mxu0 0
    %425 = vmatprep.subr.bf16.mxu0 0
    %426 = vmatpush2.bf16.msra.mxu0 0
    %427 = vmatprep.subr.bf16.mxu0 0
    %428 = vmatpush2.bf16.msra.mxu0 0
    %429 = vmatprep.subr.bf16.mxu0 0
    %430 = vmatpush2.bf16.msra.mxu0 0
    %431 = vmatprep.subr.bf16.mxu0 0
    %432 = vmatpush2.bf16.msra.mxu0 0
    %433 = vmatprep.subr.bf16.mxu0 0
    %434 = vmatpush2.bf16.msra.mxu0 0
    %435 = vmatprep.subr.bf16.mxu0 0
    %436 = vmatpush2.bf16.msra.mxu0 0
    %437 = vmatprep.subr.bf16.mxu0 0
    %438 = vmatpush2.bf16.msra.mxu0 0
    %439 = vmatprep.mubr.bf16.mxu0 0
    %440 = vmatmul.mubr.bf16.gmra.mxu0 %v247
    %v441 = vpop.f32.mrf.mxu0
    %v442 = vadd.f32 %v393, %v441
    %v443 = vpop.f32.mrf.mxu0
    %v444 = vpop.f32.mrf.mxu0
    %v445 = vpop.f32.mrf.mxu0
    %446 = vdwg.mxu0
    %v447 = vadd.f32 %v379, %v442
    %v448 = vsub.f32 0.0, %v447
    %v449 = vmul.f32 %v448, 1.442695
    %v450 = vpow.pop %v449
    %v451 = vadd.f32 %v450, 1.0
    %v452 = vrcp.pop %v451
    %454 = vrot.lane.b32.xlu0 %v442, 64
    %v455 = vpop.permute.xlu0 %454
    %v457 = vmul.f32 %v452, %v455
    %459 = vrot.lane.b32.xlu0 %v457, 64
    %v460 = vpop.permute.xlu0 %459
    %v462 = vadd.f32 %v379, %v460
    %v463 = vtanh.pop %v462
    %v464 = vsub.f32 1.0, %v452
    %466 = vrot.lane.b32.xlu0 %v463, 96
    %v467 = vpop.permute.xlu0 %466
    %v469 = vmul.f32 %v464, %v467
    %v470 = vmul.f32 %v452, 0.0
    %v471 = vadd.f32 %v469, %v470
    %473 = vrot.lane.b32.xlu0 %v471, 96
    %v474 = vpop.permute.xlu0 %473
    %476 = vst.msk [vmem:[#allocation2] sm:$0xff] %vm136, %v474
    %s477 = scalar_lea.vmem [#allocation2], 8
    %v478 = vld [vmem:[%s477] sm:$0xff]
    %v479 = vld [vmem:[#allocation6] sm:$0xf]
    %v480 = vld [vmem:[#allocation6 + $0x4] sm:$0xf]
    %v481 = vld [vmem:[#allocation6 + $0x8] sm:$0xf]
    %v482 = vld [vmem:[#allocation6 + $0xc] sm:$0xf]
    %v487 = vunpack.c.l.b16 %v479
    %v488 = vunpack.c.l.b16 %v480
    %v489 = vunpack.c.l.b16 %v481
    %v490 = vunpack.c.l.b16 %v482
    %v491 = vpack.c.b16 %v488, %v487
    %v492 = vpack.c.b16 %v490, %v489
    %495 = vmatprep.subr.bf16.mxu0 0
    %496 = vmatpush1.bf16.msra.mxu0 0
    %497 = vmatprep.subr.bf16.mxu0 0
    %498 = vmatpush1.bf16.msra.mxu0 0
    %499 = vmatprep.subr.bf16.mxu0 0
    %500 = vmatpush1.bf16.msra.mxu0 0
    %501 = vmatprep.subr.bf16.mxu0 0
    %502 = vmatpush1.bf16.msra.mxu0 0
    %503 = vmatprep.subr.bf16.mxu0 0
    %504 = vmatpush1.bf16.msra.mxu0 0
    %505 = vmatprep.subr.bf16.mxu0 0
    %506 = vmatpush1.bf16.msra.mxu0 0
    %507 = vmatprep.subr.bf16.mxu0 0
    %508 = vmatpush1.bf16.msra.mxu0 %v492
    %509 = vmatprep.subr.bf16.mxu0 0
    %510 = vmatpush1.bf16.msra.mxu0 %v491
    %511 = vmatprep.subr.bf16.mxu0 0
    %512 = vmatpush2.bf16.msra.mxu0 0
    %513 = vmatprep.subr.bf16.mxu0 0
    %514 = vmatpush2.bf16.msra.mxu0 0
    %515 = vmatprep.subr.bf16.mxu0 0
    %516 = vmatpush2.bf16.msra.mxu0 0
    %517 = vmatprep.subr.bf16.mxu0 0
    %518 = vmatpush2.bf16.msra.mxu0 0
    %519 = vmatprep.subr.bf16.mxu0 0
    %520 = vmatpush2.bf16.msra.mxu0 0
    %521 = vmatprep.subr.bf16.mxu0 0
    %522 = vmatpush2.bf16.msra.mxu0 0
    %523 = vmatprep.subr.bf16.mxu0 0
    %524 = vmatpush2.bf16.msra.mxu0 0
    %525 = vmatprep.subr.bf16.mxu0 0
    %526 = vmatpush2.bf16.msra.mxu0 0
    %527 = vmatprep.mubr.bf16.mxu0 0
    %528 = vmatmul.mubr.bf16.gmra.mxu0 %v342
    %v529 = vpop.f32.mrf.mxu0
    %v530 = vadd.f32 %v232, %v529
    %v531 = vpop.f32.mrf.mxu0
    %v532 = vpop.f32.mrf.mxu0
    %v533 = vpop.f32.mrf.mxu0
    %534 = vdwg.mxu0
    %v535 = vadd.f32 %v478, %v530
    %v536 = vsub.f32 0.0, %v535
    %v537 = vmul.f32 %v536, 1.442695
    %v538 = vpow.pop %v537
    %v539 = vadd.f32 %v538, 1.0
    %v540 = vrcp.pop %v539
    %542 = vrot.lane.b32.xlu0 %v530, 64
    %v543 = vpop.permute.xlu0 %542
    %v545 = vmul.f32 %v540, %v543
    %547 = vrot.lane.b32.xlu0 %v545, 64
    %v548 = vpop.permute.xlu0 %547
    %v550 = vadd.f32 %v478, %v548
    %v551 = vtanh.pop %v550
    %v552 = vsub.f32 1.0, %v540
    %554 = vrot.lane.b32.xlu0 %v551, 96
    %v555 = vpop.permute.xlu0 %554
    %v557 = vmul.f32 %v552, %v555
    %v558 = vmul.f32 %v540, %v313
    %v559 = vadd.f32 %v557, %v558
    %v560 = vpack.c.bf16 %v559, %v559
    %v561 = vld [vmem:[%s315] sm:$0xf]
    %v562 = vld [vmem:[%s315 + $0x4] sm:$0xf]
    %v563 = vld [vmem:[%s315 + $0x8] sm:$0xf]
    %v564 = vld [vmem:[%s315 + $0xc] sm:$0xf]
    %566 = vrot.lane.b32.xlu0 %v560, 96
    %v567 = vpop.permute.xlu0 %566
    %v572 = vunpack.c.l.b16 %v561
    %v573 = vunpack.c.l.b16 %v562
    %v574 = vunpack.c.l.b16 %v563
    %v575 = vunpack.c.l.b16 %v564
    %v576 = vpack.c.b16 %v573, %v572
    %v577 = vpack.c.b16 %v575, %v574
    %v581 = vsel %vm136, %v567, 0
    %583 = vmatprep.subr.bf16.mxu0 0
    %584 = vmatpush1.bf16.msra.mxu0 0
    %585 = vmatprep.subr.bf16.mxu0 0
    %586 = vmatpush1.bf16.msra.mxu0 0
    %587 = vmatprep.subr.bf16.mxu0 0
    %588 = vmatpush1.bf16.msra.mxu0 0
    %589 = vmatprep.subr.bf16.mxu0 0
    %590 = vmatpush1.bf16.msra.mxu0 0
    %591 = vmatprep.subr.bf16.mxu0 0
    %592 = vmatpush1.bf16.msra.mxu0 0
    %593 = vmatprep.subr.bf16.mxu0 0
    %594 = vmatpush1.bf16.msra.mxu0 0
    %595 = vmatprep.subr.bf16.mxu0 0
    %596 = vmatpush1.bf16.msra.mxu0 %v577
    %597 = vmatprep.subr.bf16.mxu0 0
    %598 = vmatpush1.bf16.msra.mxu0 %v576
    %599 = vmatprep.subr.bf16.mxu0 0
    %600 = vmatpush2.bf16.msra.mxu0 0
    %601 = vmatprep.subr.bf16.mxu0 0
    %602 = vmatpush2.bf16.msra.mxu0 0
    %603 = vmatprep.subr.bf16.mxu0 0
    %604 = vmatpush2.bf16.msra.mxu0 0
    %605 = vmatprep.subr.bf16.mxu0 0
    %606 = vmatpush2.bf16.msra.mxu0 0
    %607 = vmatprep.subr.bf16.mxu0 0
    %608 = vmatpush2.bf16.msra.mxu0 0
    %609 = vmatprep.subr.bf16.mxu0 0
    %610 = vmatpush2.bf16.msra.mxu0 0
    %611 = vmatprep.subr.bf16.mxu0 0
    %612 = vmatpush2.bf16.msra.mxu0 0
    %613 = vmatprep.subr.bf16.mxu0 0
    %614 = vmatpush2.bf16.msra.mxu0 0
    %615 = vmatprep.mubr.bf16.mxu0 0
    %616 = vmatmul.mubr.bf16.gmra.mxu0 %v581
    %v617 = vpop.f32.mrf.mxu0
    %v618 = vadd.f32 %v324, %v617
    %v619 = vpop.f32.mrf.mxu0
    %v620 = vpop.f32.mrf.mxu0
    %v621 = vpop.f32.mrf.mxu0
    %622 = vdwg.mxu0
    %v623 = vld [vmem:[%s384] sm:$0xf]
    %v624 = vld [vmem:[%s384 + $0x4] sm:$0xf]
    %v625 = vld [vmem:[%s384 + $0x8] sm:$0xf]
    %v626 = vld [vmem:[%s384 + $0xc] sm:$0xf]
    %v627 = vpack.c.bf16 %v471, %v471
    %629 = vrot.lane.b32.xlu0 %v627, 96
    %v630 = vpop.permute.xlu0 %629
    %v635 = vunpack.c.l.b16 %v623
    %v636 = vunpack.c.l.b16 %v624
    %v637 = vunpack.c.l.b16 %v625
    %v638 = vunpack.c.l.b16 %v626
    %v639 = vpack.c.b16 %v636, %v635
    %v640 = vpack.c.b16 %v638, %v637
    %v644 = vsel %vm136, %v630, 0
    %646 = vmatprep.subr.bf16.mxu0 0
    %647 = vmatpush1.bf16.msra.mxu0 0
    %648 = vmatprep.subr.bf16.mxu0 0
    %649 = vmatpush1.bf16.msra.mxu0 0
    %650 = vmatprep.subr.bf16.mxu0 0
    %651 = vmatpush1.bf16.msra.mxu0 0
    %652 = vmatprep.subr.bf16.mxu0 0
    %653 = vmatpush1.bf16.msra.mxu0 0
    %654 = vmatprep.subr.bf16.mxu0 0
    %655 = vmatpush1.bf16.msra.mxu0 0
    %656 = vmatprep.subr.bf16.mxu0 0
    %657 = vmatpush1.bf16.msra.mxu0 0
    %658 = vmatprep.subr.bf16.mxu0 0
    %659 = vmatpush1.bf16.msra.mxu0 %v640
    %660 = vmatprep.subr.bf16.mxu0 0
    %661 = vmatpush1.bf16.msra.mxu0 %v639
    %662 = vmatprep.subr.bf16.mxu0 0
    %663 = vmatpush2.bf16.msra.mxu0 0
    %664 = vmatprep.subr.bf16.mxu0 0
    %665 = vmatpush2.bf16.msra.mxu0 0
    %666 = vmatprep.subr.bf16.mxu0 0
    %667 = vmatpush2.bf16.msra.mxu0 0
    %668 = vmatprep.subr.bf16.mxu0 0
    %669 = vmatpush2.bf16.msra.mxu0 0
    %670 = vmatprep.subr.bf16.mxu0 0
    %671 = vmatpush2.bf16.msra.mxu0 0
    %672 = vmatprep.subr.bf16.mxu0 0
    %673 = vmatpush2.bf16.msra.mxu0 0
    %674 = vmatprep.subr.bf16.mxu0 0
    %675 = vmatpush2.bf16.msra.mxu0 0
    %676 = vmatprep.subr.bf16.mxu0 0
    %677 = vmatpush2.bf16.msra.mxu0 0
    %678 = vmatprep.mubr.bf16.mxu0 0
    %679 = vmatmul.mubr.bf16.gmra.mxu0 %v644
    %v680 = vpop.f32.mrf.mxu0
    %v681 = vadd.f32 %v393, %v680
    %v682 = vpop.f32.mrf.mxu0
    %v683 = vpop.f32.mrf.mxu0
    %v684 = vpop.f32.mrf.mxu0
    %685 = vdwg.mxu0
    %v686 = vadd.f32 %v618, %v681
    %v687 = vsub.f32 0.0, %v686
    %v688 = vmul.f32 %v687, 1.442695
    %v689 = vpow.pop %v688
    %v690 = vadd.f32 %v689, 1.0
    %v691 = vrcp.pop %v690
    %693 = vrot.lane.b32.xlu0 %v681, 64
    %v694 = vpop.permute.xlu0 %693
    %v696 = vmul.f32 %v691, %v694
    %698 = vrot.lane.b32.xlu0 %v696, 64
    %v699 = vpop.permute.xlu0 %698
    %v701 = vadd.f32 %v618, %v699
    %v702 = vtanh.pop %v701
    %v703 = vsub.f32 1.0, %v691
    %705 = vrot.lane.b32.xlu0 %v702, 96
    %v706 = vpop.permute.xlu0 %705
    %v708 = vmul.f32 %v703, %v706
    %v709 = vmul.f32 %v691, %v471
    %v710 = vadd.f32 %v708, %v709
    %712 = vrot.lane.b32.xlu0 %v710, 96
    %v713 = vpop.permute.xlu0 %712
    %715 = vst.msk [vmem:[%s477] sm:$0xff] %vm136, %v713
    %s716 = scalar_lea.vmem [#allocation2], 16
    %v717 = vld [vmem:[%s716] sm:$0xff]
    %v718 = vld [vmem:[#allocation6] sm:$0xf]
    %v719 = vld [vmem:[#allocation6 + $0x4] sm:$0xf]
    %v720 = vld [vmem:[#allocation6 + $0x8] sm:$0xf]
    %v721 = vld [vmem:[#allocation6 + $0xc] sm:$0xf]
    %v726 = vunpack.c.l.b16 %v718
    %v727 = vunpack.c.l.b16 %v719
    %v728 = vunpack.c.l.b16 %v720
    %v729 = vunpack.c.l.b16 %v721
    %v730 = vpack.c.b16 %v727, %v726
    %v731 = vpack.c.b16 %v729, %v728
    %734 = vmatprep.subr.bf16.mxu0 0
    %735 = vmatpush1.bf16.msra.mxu0 0
    %736 = vmatprep.subr.bf16.mxu0 0
    %737 = vmatpush1.bf16.msra.mxu0 0
    %738 = vmatprep.subr.bf16.mxu0 0
    %739 = vmatpush1.bf16.msra.mxu0 0
    %740 = vmatprep.subr.bf16.mxu0 0
    %741 = vmatpush1.bf16.msra.mxu0 0
    %742 = vmatprep.subr.bf16.mxu0 0
    %743 = vmatpush1.bf16.msra.mxu0 0
    %744 = vmatprep.subr.bf16.mxu0 0
    %745 = vmatpush1.bf16.msra.mxu0 0
    %746 = vmatprep.subr.bf16.mxu0 0
    %747 = vmatpush1.bf16.msra.mxu0 %v731
    %748 = vmatprep.subr.bf16.mxu0 0
    %749 = vmatpush1.bf16.msra.mxu0 %v730
    %750 = vmatprep.subr.bf16.mxu0 0
    %751 = vmatpush2.bf16.msra.mxu0 0
    %752 = vmatprep.subr.bf16.mxu0 0
    %753 = vmatpush2.bf16.msra.mxu0 0
    %754 = vmatprep.subr.bf16.mxu0 0
    %755 = vmatpush2.bf16.msra.mxu0 0
    %756 = vmatprep.subr.bf16.mxu0 0
    %757 = vmatpush2.bf16.msra.mxu0 0
    %758 = vmatprep.subr.bf16.mxu0 0
    %759 = vmatpush2.bf16.msra.mxu0 0
    %760 = vmatprep.subr.bf16.mxu0 0
    %761 = vmatpush2.bf16.msra.mxu0 0
    %762 = vmatprep.subr.bf16.mxu0 0
    %763 = vmatpush2.bf16.msra.mxu0 0
    %764 = vmatprep.subr.bf16.mxu0 0
    %765 = vmatpush2.bf16.msra.mxu0 0
    %766 = vmatprep.mubr.bf16.mxu0 0
    %767 = vmatmul.mubr.bf16.gmra.mxu0 %v581
    %v768 = vpop.f32.mrf.mxu0
    %v769 = vadd.f32 %v232, %v768
    %v770 = vpop.f32.mrf.mxu0
    %v771 = vpop.f32.mrf.mxu0
    %v772 = vpop.f32.mrf.mxu0
    %773 = vdwg.mxu0
    %v774 = vadd.f32 %v717, %v769
    %v775 = vsub.f32 0.0, %v774
    %v776 = vmul.f32 %v775, 1.442695
    %v777 = vpow.pop %v776
    %v778 = vadd.f32 %v777, 1.0
    %v779 = vrcp.pop %v778
    %781 = vrot.lane.b32.xlu0 %v769, 64
    %v782 = vpop.permute.xlu0 %781
    %v784 = vmul.f32 %v779, %v782
    %786 = vrot.lane.b32.xlu0 %v784, 64
    %v787 = vpop.permute.xlu0 %786
    %v789 = vadd.f32 %v717, %v787
    %v790 = vtanh.pop %v789
    %v791 = vsub.f32 1.0, %v779
    %793 = vrot.lane.b32.xlu0 %v790, 96
    %v794 = vpop.permute.xlu0 %793
    %v796 = vmul.f32 %v791, %v794
    %v797 = vmul.f32 %v779, %v559
    %v798 = vadd.f32 %v796, %v797
    %v799 = vpack.c.bf16 %v798, %v798
    %v800 = vld [vmem:[%s315] sm:$0xf]
    %v801 = vld [vmem:[%s315 + $0x4] sm:$0xf]
    %v802 = vld [vmem:[%s315 + $0x8] sm:$0xf]
    %v803 = vld [vmem:[%s315 + $0xc] sm:$0xf]
    %805 = vrot.lane.b32.xlu0 %v799, 96
    %v806 = vpop.permute.xlu0 %805
    %v811 = vunpack.c.l.b16 %v800
    %v812 = vunpack.c.l.b16 %v801
    %v813 = vunpack.c.l.b16 %v802
    %v814 = vunpack.c.l.b16 %v803
    %v815 = vpack.c.b16 %v812, %v811
    %v816 = vpack.c.b16 %v814, %v813
    %v820 = vsel %vm136, %v806, 0
    %822 = vmatprep.subr.bf16.mxu0 0
    %823 = vmatpush1.bf16.msra.mxu0 0
    %824 = vmatprep.subr.bf16.mxu0 0
    %825 = vmatpush1.bf16.msra.mxu0 0
    %826 = vmatprep.subr.bf16.mxu0 0
    %827 = vmatpush1.bf16.msra.mxu0 0
    %828 = vmatprep.subr.bf16.mxu0 0
    %829 = vmatpush1.bf16.msra.mxu0 0
    %830 = vmatprep.subr.bf16.mxu0 0
    %831 = vmatpush1.bf16.msra.mxu0 0
    %832 = vmatprep.subr.bf16.mxu0 0
    %833 = vmatpush1.bf16.msra.mxu0 0
    %834 = vmatprep.subr.bf16.mxu0 0
    %835 = vmatpush1.bf16.msra.mxu0 %v816
    %836 = vmatprep.subr.bf16.mxu0 0
    %837 = vmatpush1.bf16.msra.mxu0 %v815
    %838 = vmatprep.subr.bf16.mxu0 0
    %839 = vmatpush2.bf16.msra.mxu0 0
    %840 = vmatprep.subr.bf16.mxu0 0
    %841 = vmatpush2.bf16.msra.mxu0 0
    %842 = vmatprep.subr.bf16.mxu0 0
    %843 = vmatpush2.bf16.msra.mxu0 0
    %844 = vmatprep.subr.bf16.mxu0 0
    %845 = vmatpush2.bf16.msra.mxu0 0
    %846 = vmatprep.subr.bf16.mxu0 0
    %847 = vmatpush2.bf16.msra.mxu0 0
    %848 = vmatprep.subr.bf16.mxu0 0
    %849 = vmatpush2.bf16.msra.mxu0 0
    %850 = vmatprep.subr.bf16.mxu0 0
    %851 = vmatpush2.bf16.msra.mxu0 0
    %852 = vmatprep.subr.bf16.mxu0 0
    %853 = vmatpush2.bf16.msra.mxu0 0
    %854 = vmatprep.mubr.bf16.mxu0 0
    %855 = vmatmul.mubr.bf16.gmra.mxu0 %v820
    %v856 = vpop.f32.mrf.mxu0
    %v857 = vadd.f32 %v324, %v856
    %v858 = vpop.f32.mrf.mxu0
    %v859 = vpop.f32.mrf.mxu0
    %v860 = vpop.f32.mrf.mxu0
    %861 = vdwg.mxu0
    %v862 = vld [vmem:[%s384] sm:$0xf]
    %v863 = vld [vmem:[%s384 + $0x4] sm:$0xf]
    %v864 = vld [vmem:[%s384 + $0x8] sm:$0xf]
    %v865 = vld [vmem:[%s384 + $0xc] sm:$0xf]
    %v866 = vpack.c.bf16 %v710, %v710
    %868 = vrot.lane.b32.xlu0 %v866, 96
    %v869 = vpop.permute.xlu0 %868
    %v874 = vunpack.c.l.b16 %v862
    %v875 = vunpack.c.l.b16 %v863
    %v876 = vunpack.c.l.b16 %v864
    %v877 = vunpack.c.l.b16 %v865
    %v878 = vpack.c.b16 %v875, %v874
    %v879 = vpack.c.b16 %v877, %v876
    %v883 = vsel %vm136, %v869, 0
    %885 = vmatprep.subr.bf16.mxu0 0
    %886 = vmatpush1.bf16.msra.mxu0 0
    %887 = vmatprep.subr.bf16.mxu0 0
    %888 = vmatpush1.bf16.msra.mxu0 0
    %889 = vmatprep.subr.bf16.mxu0 0
    %890 = vmatpush1.bf16.msra.mxu0 0
    %891 = vmatprep.subr.bf16.mxu0 0
    %892 = vmatpush1.bf16.msra.mxu0 0
    %893 = vmatprep.subr.bf16.mxu0 0
    %894 = vmatpush1.bf16.msra.mxu0 0
    %895 = vmatprep.subr.bf16.mxu0 0
    %896 = vmatpush1.bf16.msra.mxu0 0
    %897 = vmatprep.subr.bf16.mxu0 0
    %898 = vmatpush1.bf16.msra.mxu0 %v879
    %899 = vmatprep.subr.bf16.mxu0 0
    %900 = vmatpush1.bf16.msra.mxu0 %v878
    %901 = vmatprep.subr.bf16.mxu0 0
    %902 = vmatpush2.bf16.msra.mxu0 0
    %903 = vmatprep.subr.bf16.mxu0 0
    %904 = vmatpush2.bf16.msra.mxu0 0
    %905 = vmatprep.subr.bf16.mxu0 0
    %906 = vmatpush2.bf16.msra.mxu0 0
    %907 = vmatprep.subr.bf16.mxu0 0
    %908 = vmatpush2.bf16.msra.mxu0 0
    %909 = vmatprep.subr.bf16.mxu0 0
    %910 = vmatpush2.bf16.msra.mxu0 0
    %911 = vmatprep.subr.bf16.mxu0 0
    %912 = vmatpush2.bf16.msra.mxu0 0
    %913 = vmatprep.subr.bf16.mxu0 0
    %914 = vmatpush2.bf16.msra.mxu0 0
    %915 = vmatprep.subr.bf16.mxu0 0
    %916 = vmatpush2.bf16.msra.mxu0 0
    %917 = vmatprep.mubr.bf16.mxu0 0
    %918 = vmatmul.mubr.bf16.gmra.mxu0 %v883
    %v919 = vpop.f32.mrf.mxu0
    %v920 = vadd.f32 %v393, %v919
    %v921 = vpop.f32.mrf.mxu0
    %v922 = vpop.f32.mrf.mxu0
    %v923 = vpop.f32.mrf.mxu0
    %924 = vdwg.mxu0
    %v925 = vadd.f32 %v857, %v920
    %v926 = vsub.f32 0.0, %v925
    %v927 = vmul.f32 %v926, 1.442695
    %v928 = vpow.pop %v927
    %v929 = vadd.f32 %v928, 1.0
    %v930 = vrcp.pop %v929
    %932 = vrot.lane.b32.xlu0 %v920, 64
    %v933 = vpop.permute.xlu0 %932
    %v935 = vmul.f32 %v930, %v933
    %937 = vrot.lane.b32.xlu0 %v935, 64
    %v938 = vpop.permute.xlu0 %937
    %v940 = vadd.f32 %v857, %v938
    %v941 = vtanh.pop %v940
    %v942 = vsub.f32 1.0, %v930
    %944 = vrot.lane.b32.xlu0 %v941, 96
    %v945 = vpop.permute.xlu0 %944
    %v947 = vmul.f32 %v942, %v945
    %v948 = vmul.f32 %v930, %v710
    %v949 = vadd.f32 %v947, %v948
    %951 = vrot.lane.b32.xlu0 %v949, 96
    %v952 = vpop.permute.xlu0 %951
    %954 = vst.msk [vmem:[%s716] sm:$0xff] %vm136, %v952
    %s955 = scalar_lea.vmem [#allocation2], 24
    %v956 = vld [vmem:[%s955] sm:$0xff]
    %v957 = vld [vmem:[#allocation6] sm:$0xf]
    %v958 = vld [vmem:[#allocation6 + $0x4] sm:$0xf]
    %v959 = vld [vmem:[#allocation6 + $0x8] sm:$0xf]
    %v960 = vld [vmem:[#allocation6 + $0xc] sm:$0xf]
    %v965 = vunpack.c.l.b16 %v957
    %v966 = vunpack.c.l.b16 %v958
    %v967 = vunpack.c.l.b16 %v959
    %v968 = vunpack.c.l.b16 %v960
    %v969 = vpack.c.b16 %v966, %v965
    %v970 = vpack.c.b16 %v968, %v967
    %973 = vmatprep.subr.bf16.mxu0 0
    %974 = vmatpush1.bf16.msra.mxu0 0
    %975 = vmatprep.subr.bf16.mxu0 0
    %976 = vmatpush1.bf16.msra.mxu0 0
    %977 = vmatprep.subr.bf16.mxu0 0
    %978 = vmatpush1.bf16.msra.mxu0 0
    %979 = vmatprep.subr.bf16.mxu0 0
    %980 = vmatpush1.bf16.msra.mxu0 0
    %981 = vmatprep.subr.bf16.mxu0 0
    %982 = vmatpush1.bf16.msra.mxu0 0
    %983 = vmatprep.subr.bf16.mxu0 0
    %984 = vmatpush1.bf16.msra.mxu0 0
    %985 = vmatprep.subr.bf16.mxu0 0
    %986 = vmatpush1.bf16.msra.mxu0 %v970
    %987 = vmatprep.subr.bf16.mxu0 0
    %988 = vmatpush1.bf16.msra.mxu0 %v969
    %989 = vmatprep.subr.bf16.mxu0 0
    %990 = vmatpush2.bf16.msra.mxu0 0
    %991 = vmatprep.subr.bf16.mxu0 0
    %992 = vmatpush2.bf16.msra.mxu0 0
    %993 = vmatprep.subr.bf16.mxu0 0
    %994 = vmatpush2.bf16.msra.mxu0 0
    %995 = vmatprep.subr.bf16.mxu0 0
    %996 = vmatpush2.bf16.msra.mxu0 0
    %997 = vmatprep.subr.bf16.mxu0 0
    %998 = vmatpush2.bf16.msra.mxu0 0
    %999 = vmatprep.subr.bf16.mxu0 0
    %1000 = vmatpush2.bf16.msra.mxu0 0
    %1001 = vmatprep.subr.bf16.mxu0 0
    %1002 = vmatpush2.bf16.msra.mxu0 0
    %1003 = vmatprep.subr.bf16.mxu0 0
    %1004 = vmatpush2.bf16.msra.mxu0 0
    %1005 = vmatprep.mubr.bf16.mxu0 0
    %1006 = vmatmul.mubr.bf16.gmra.mxu0 %v820
    %v1007 = vpop.f32.mrf.mxu0
    %v1008 = vadd.f32 %v232, %v1007
    %v1009 = vpop.f32.mrf.mxu0
    %v1010 = vpop.f32.mrf.mxu0
    %v1011 = vpop.f32.mrf.mxu0
    %1012 = vdwg.mxu0
    %v1013 = vadd.f32 %v956, %v1008
    %v1014 = vsub.f32 0.0, %v1013
    %v1015 = vmul.f32 %v1014, 1.442695
    %v1016 = vpow.pop %v1015
    %v1017 = vadd.f32 %v1016, 1.0
    %v1018 = vrcp.pop %v1017
    %1020 = vrot.lane.b32.xlu0 %v1008, 64
    %v1021 = vpop.permute.xlu0 %1020
    %v1023 = vmul.f32 %v1018, %v1021
    %1025 = vrot.lane.b32.xlu0 %v1023, 64
    %v1026 = vpop.permute.xlu0 %1025
    %v1028 = vadd.f32 %v956, %v1026
    %v1029 = vtanh.pop %v1028
    %v1030 = vsub.f32 1.0, %v1018
    %1032 = vrot.lane.b32.xlu0 %v1029, 96
    %v1033 = vpop.permute.xlu0 %1032
    %v1035 = vmul.f32 %v1030, %v1033
    %v1036 = vmul.f32 %v1018, %v798
    %v1037 = vadd.f32 %v1035, %v1036
    %v1038 = vpack.c.bf16 %v1037, %v1037
    %v1039 = vld [vmem:[%s315] sm:$0xf]
    %v1040 = vld [vmem:[%s315 + $0x4] sm:$0xf]
    %v1041 = vld [vmem:[%s315 + $0x8] sm:$0xf]
    %v1042 = vld [vmem:[%s315 + $0xc] sm:$0xf]
    %1044 = vrot.lane.b32.xlu0 %v1038, 96
    %v1045 = vpop.permute.xlu0 %1044
    %v1050 = vunpack.c.l.b16 %v1039
    %v1051 = vunpack.c.l.b16 %v1040
    %v1052 = vunpack.c.l.b16 %v1041
    %v1053 = vunpack.c.l.b16 %v1042
    %v1054 = vpack.c.b16 %v1051, %v1050
    %v1055 = vpack.c.b16 %v1053, %v1052
    %v1059 = vsel %vm136, %v1045, 0
    %1061 = vmatprep.subr.bf16.mxu0 0
    %1062 = vmatpush1.bf16.msra.mxu0 0
    %1063 = vmatprep.subr.bf16.mxu0 0
    %1064 = vmatpush1.bf16.msra.mxu0 0
    %1065 = vmatprep.subr.bf16.mxu0 0
    %1066 = vmatpush1.bf16.msra.mxu0 0
    %1067 = vmatprep.subr.bf16.mxu0 0
    %1068 = vmatpush1.bf16.msra.mxu0 0
    %1069 = vmatprep.subr.bf16.mxu0 0
    %1070 = vmatpush1.bf16.msra.mxu0 0
    %1071 = vmatprep.subr.bf16.mxu0 0
    %1072 = vmatpush1.bf16.msra.mxu0 0
    %1073 = vmatprep.subr.bf16.mxu0 0
    %1074 = vmatpush1.bf16.msra.mxu0 %v1055
    %1075 = vmatprep.subr.bf16.mxu0 0
    %1076 = vmatpush1.bf16.msra.mxu0 %v1054
    %1077 = vmatprep.subr.bf16.mxu0 0
    %1078 = vmatpush2.bf16.msra.mxu0 0
    %1079 = vmatprep.subr.bf16.mxu0 0
    %1080 = vmatpush2.bf16.msra.mxu0 0
    %1081 = vmatprep.subr.bf16.mxu0 0
    %1082 = vmatpush2.bf16.msra.mxu0 0
    %1083 = vmatprep.subr.bf16.mxu0 0
    %1084 = vmatpush2.bf16.msra.mxu0 0
    %1085 = vmatprep.subr.bf16.mxu0 0
    %1086 = vmatpush2.bf16.msra.mxu0 0
    %1087 = vmatprep.subr.bf16.mxu0 0
    %1088 = vmatpush2.bf16.msra.mxu0 0
    %1089 = vmatprep.subr.bf16.mxu0 0
    %1090 = vmatpush2.bf16.msra.mxu0 0
    %1091 = vmatprep.subr.bf16.mxu0 0
    %1092 = vmatpush2.bf16.msra.mxu0 0
    %1093 = vmatprep.mubr.bf16.mxu0 0
    %1094 = vmatmul.mubr.bf16.gmra.mxu0 %v1059
    %v1095 = vpop.f32.mrf.mxu0
    %v1096 = vadd.f32 %v324, %v1095
    %v1097 = vpop.f32.mrf.mxu0
    %v1098 = vpop.f32.mrf.mxu0
    %v1099 = vpop.f32.mrf.mxu0
    %1100 = vdwg.mxu0
    %v1101 = vld [vmem:[%s384] sm:$0xf]
    %v1102 = vld [vmem:[%s384 + $0x4] sm:$0xf]
    %v1103 = vld [vmem:[%s384 + $0x8] sm:$0xf]
    %v1104 = vld [vmem:[%s384 + $0xc] sm:$0xf]
    %v1105 = vpack.c.bf16 %v949, %v949
    %1107 = vrot.lane.b32.xlu0 %v1105, 96
    %v1108 = vpop.permute.xlu0 %1107
    %v1113 = vunpack.c.l.b16 %v1101
    %v1114 = vunpack.c.l.b16 %v1102
    %v1115 = vunpack.c.l.b16 %v1103
    %v1116 = vunpack.c.l.b16 %v1104
    %v1117 = vpack.c.b16 %v1114, %v1113
    %v1118 = vpack.c.b16 %v1116, %v1115
    %v1122 = vsel %vm136, %v1108, 0
    %1124 = vmatprep.subr.bf16.mxu0 0
    %1125 = vmatpush1.bf16.msra.mxu0 0
    %1126 = vmatprep.subr.bf16.mxu0 0
    %1127 = vmatpush1.bf16.msra.mxu0 0
    %1128 = vmatprep.subr.bf16.mxu0 0
    %1129 = vmatpush1.bf16.msra.mxu0 0
    %1130 = vmatprep.subr.bf16.mxu0 0
    %1131 = vmatpush1.bf16.msra.mxu0 0
    %1132 = vmatprep.subr.bf16.mxu0 0
    %1133 = vmatpush1.bf16.msra.mxu0 0
    %1134 = vmatprep.subr.bf16.mxu0 0
    %1135 = vmatpush1.bf16.msra.mxu0 0
    %1136 = vmatprep.subr.bf16.mxu0 0
    %1137 = vmatpush1.bf16.msra.mxu0 %v1118
    %1138 = vmatprep.subr.bf16.mxu0 0
    %1139 = vmatpush1.bf16.msra.mxu0 %v1117
    %1140 = vmatprep.subr.bf16.mxu0 0
    %1141 = vmatpush2.bf16.msra.mxu0 0
    %1142 = vmatprep.subr.bf16.mxu0 0
    %1143 = vmatpush2.bf16.msra.mxu0 0
    %1144 = vmatprep.subr.bf16.mxu0 0
    %1145 = vmatpush2.bf16.msra.mxu0 0
    %1146 = vmatprep.subr.bf16.mxu0 0
    %1147 = vmatpush2.bf16.msra.mxu0 0
    %1148 = vmatprep.subr.bf16.mxu0 0
    %1149 = vmatpush2.bf16.msra.mxu0 0
    %1150 = vmatprep.subr.bf16.mxu0 0
    %1151 = vmatpush2.bf16.msra.mxu0 0
    %1152 = vmatprep.subr.bf16.mxu0 0
    %1153 = vmatpush2.bf16.msra.mxu0 0
    %1154 = vmatprep.subr.bf16.mxu0 0
    %1155 = vmatpush2.bf16.msra.mxu0 0
    %1156 = vmatprep.mubr.bf16.mxu0 0
    %1157 = vmatmul.mubr.bf16.gmra.mxu0 %v1122
    %v1158 = vpop.f32.mrf.mxu0
    %v1159 = vadd.f32 %v393, %v1158
    %v1160 = vpop.f32.mrf.mxu0
    %v1161 = vpop.f32.mrf.mxu0
    %v1162 = vpop.f32.mrf.mxu0
    %1163 = vdwg.mxu0
    %v1164 = vadd.f32 %v1096, %v1159
    %v1165 = vsub.f32 0.0, %v1164
    %v1166 = vmul.f32 %v1165, 1.442695
    %v1167 = vpow.pop %v1166
    %v1168 = vadd.f32 %v1167, 1.0
    %v1169 = vrcp.pop %v1168
    %1171 = vrot.lane.b32.xlu0 %v1159, 64
    %v1172 = vpop.permute.xlu0 %1171
    %v1174 = vmul.f32 %v1169, %v1172
    %1176 = vrot.lane.b32.xlu0 %v1174, 64
    %v1177 = vpop.permute.xlu0 %1176
    %v1179 = vadd.f32 %v1096, %v1177
    %v1180 = vtanh.pop %v1179
    %v1181 = vsub.f32 1.0, %v1169
    %1183 = vrot.lane.b32.xlu0 %v1180, 96
    %v1184 = vpop.permute.xlu0 %1183
    %v1186 = vmul.f32 %v1181, %v1184
    %v1187 = vmul.f32 %v1169, %v949
    %v1188 = vadd.f32 %v1186, %v1187
    %1190 = vrot.lane.b32.xlu0 %v1188, 96
    %v1191 = vpop.permute.xlu0 %1190
    %1193 = vst.msk [vmem:[%s955] sm:$0xff] %vm136, %v1191
    %s1194 = scalar_lea.vmem [#allocation2], 32
    %v1195 = vld [vmem:[%s1194] sm:$0xff]
    %v1196 = vld [vmem:[#allocation6] sm:$0xf]
    %v1197 = vld [vmem:[#allocation6 + $0x4] sm:$0xf]
    %v1198 = vld [vmem:[#allocation6 + $0x8] sm:$0xf]
    %v1199 = vld [vmem:[#allocation6 + $0xc] sm:$0xf]
    %v1204 = vunpack.c.l.b16 %v1196
    %v1205 = vunpack.c.l.b16 %v1197
    %v1206 = vunpack.c.l.b16 %v1198
    %v1207 = vunpack.c.l.b16 %v1199
    %v1208 = vpack.c.b16 %v1205, %v1204
    %v1209 = vpack.c.b16 %v1207, %v1206
    %1212 = vmatprep.subr.bf16.mxu0 0
    %1213 = vmatpush1.bf16.msra.mxu0 0
    %1214 = vmatprep.subr.bf16.mxu0 0
    %1215 = vmatpush1.bf16.msra.mxu0 0
    %1216 = vmatprep.subr.bf16.mxu0 0
    %1217 = vmatpush1.bf16.msra.mxu0 0
    %1218 = vmatprep.subr.bf16.mxu0 0
    %1219 = vmatpush1.bf16.msra.mxu0 0
    %1220 = vmatprep.subr.bf16.mxu0 0
    %1221 = vmatpush1.bf16.msra.mxu0 0
    %1222 = vmatprep.subr.bf16.mxu0 0
    %1223 = vmatpush1.bf16.msra.mxu0 0
    %1224 = vmatprep.subr.bf16.mxu0 0
    %1225 = vmatpush1.bf16.msra.mxu0 %v1209
    %1226 = vmatprep.subr.bf16.mxu0 0
    %1227 = vmatpush1.bf16.msra.mxu0 %v1208
    %1228 = vmatprep.subr.bf16.mxu0 0
    %1229 = vmatpush2.bf16.msra.mxu0 0
    %1230 = vmatprep.subr.bf16.mxu0 0
    %1231 = vmatpush2.bf16.msra.mxu0 0
    %1232 = vmatprep.subr.bf16.mxu0 0
    %1233 = vmatpush2.bf16.msra.mxu0 0
    %1234 = vmatprep.subr.bf16.mxu0 0
    %1235 = vmatpush2.bf16.msra.mxu0 0
    %1236 = vmatprep.subr.bf16.mxu0 0
    %1237 = vmatpush2.bf16.msra.mxu0 0
    %1238 = vmatprep.subr.bf16.mxu0 0
    %1239 = vmatpush2.bf16.msra.mxu0 0
    %1240 = vmatprep.subr.bf16.mxu0 0
    %1241 = vmatpush2.bf16.msra.mxu0 0
    %1242 = vmatprep.subr.bf16.mxu0 0
    %1243 = vmatpush2.bf16.msra.mxu0 0
    %1244 = vmatprep.mubr.bf16.mxu0 0
    %1245 = vmatmul.mubr.bf16.gmra.mxu0 %v1059
    %v1246 = vpop.f32.mrf.mxu0
    %v1247 = vadd.f32 %v232, %v1246
    %v1248 = vpop.f32.mrf.mxu0
    %v1249 = vpop.f32.mrf.mxu0
    %v1250 = vpop.f32.mrf.mxu0
    %1251 = vdwg.mxu0
    %v1252 = vadd.f32 %v1195, %v1247
    %v1253 = vsub.f32 0.0, %v1252
    %v1254 = vmul.f32 %v1253, 1.442695
    %v1255 = vpow.pop %v1254
    %v1256 = vadd.f32 %v1255, 1.0
    %v1257 = vrcp.pop %v1256
    %1259 = vrot.lane.b32.xlu0 %v1247, 64
    %v1260 = vpop.permute.xlu0 %1259
    %v1262 = vmul.f32 %v1257, %v1260
    %1264 = vrot.lane.b32.xlu0 %v1262, 64
    %v1265 = vpop.permute.xlu0 %1264
    %v1267 = vadd.f32 %v1195, %v1265
    %v1268 = vtanh.pop %v1267
    %v1269 = vsub.f32 1.0, %v1257
    %1271 = vrot.lane.b32.xlu0 %v1268, 96
    %v1272 = vpop.permute.xlu0 %1271
    %v1274 = vmul.f32 %v1269, %v1272
    %v1275 = vmul.f32 %v1257, %v1037
    %v1276 = vadd.f32 %v1274, %v1275
    %v1277 = vpack.c.bf16 %v1276, %v1276
    %v1278 = vld [vmem:[%s315] sm:$0xf]
    %v1279 = vld [vmem:[%s315 + $0x4] sm:$0xf]
    %v1280 = vld [vmem:[%s315 + $0x8] sm:$0xf]
    %v1281 = vld [vmem:[%s315 + $0xc] sm:$0xf]
    %1283 = vrot.lane.b32.xlu0 %v1277, 96
    %v1284 = vpop.permute.xlu0 %1283
    %v1289 = vunpack.c.l.b16 %v1278
    %v1290 = vunpack.c.l.b16 %v1279
    %v1291 = vunpack.c.l.b16 %v1280
    %v1292 = vunpack.c.l.b16 %v1281
    %v1293 = vpack.c.b16 %v1290, %v1289
    %v1294 = vpack.c.b16 %v1292, %v1291
    %v1298 = vsel %vm136, %v1284, 0
    %1300 = vmatprep.subr.bf16.mxu0 0
    %1301 = vmatpush1.bf16.msra.mxu0 0
    %1302 = vmatprep.subr.bf16.mxu0 0
    %1303 = vmatpush1.bf16.msra.mxu0 0
    %1304 = vmatprep.subr.bf16.mxu0 0
    %1305 = vmatpush1.bf16.msra.mxu0 0
    %1306 = vmatprep.subr.bf16.mxu0 0
    %1307 = vmatpush1.bf16.msra.mxu0 0
    %1308 = vmatprep.subr.bf16.mxu0 0
    %1309 = vmatpush1.bf16.msra.mxu0 0
    %1310 = vmatprep.subr.bf16.mxu0 0
    %1311 = vmatpush1.bf16.msra.mxu0 0
    %1312 = vmatprep.subr.bf16.mxu0 0
    %1313 = vmatpush1.bf16.msra.mxu0 %v1294
    %1314 = vmatprep.subr.bf16.mxu0 0
    %1315 = vmatpush1.bf16.msra.mxu0 %v1293
    %1316 = vmatprep.subr.bf16.mxu0 0
    %1317 = vmatpush2.bf16.msra.mxu0 0
    %1318 = vmatprep.subr.bf16.mxu0 0
    %1319 = vmatpush2.bf16.msra.mxu0 0
    %1320 = vmatprep.subr.bf16.mxu0 0
    %1321 = vmatpush2.bf16.msra.mxu0 0
    %1322 = vmatprep.subr.bf16.mxu0 0
    %1323 = vmatpush2.bf16.msra.mxu0 0
    %1324 = vmatprep.subr.bf16.mxu0 0
    %1325 = vmatpush2.bf16.msra.mxu0 0
    %1326 = vmatprep.subr.bf16.mxu0 0
    %1327 = vmatpush2.bf16.msra.mxu0 0
    %1328 = vmatprep.subr.bf16.mxu0 0
    %1329 = vmatpush2.bf16.msra.mxu0 0
    %1330 = vmatprep.subr.bf16.mxu0 0
    %1331 = vmatpush2.bf16.msra.mxu0 0
    %1332 = vmatprep.mubr.bf16.mxu0 0
    %1333 = vmatmul.mubr.bf16.gmra.mxu0 %v1298
    %v1334 = vpop.f32.mrf.mxu0
    %v1335 = vadd.f32 %v324, %v1334
    %v1336 = vpop.f32.mrf.mxu0
    %v1337 = vpop.f32.mrf.mxu0
    %v1338 = vpop.f32.mrf.mxu0
    %1339 = vdwg.mxu0
    %v1340 = vld [vmem:[%s384] sm:$0xf]
    %v1341 = vld [vmem:[%s384 + $0x4] sm:$0xf]
    %v1342 = vld [vmem:[%s384 + $0x8] sm:$0xf]
    %v1343 = vld [vmem:[%s384 + $0xc] sm:$0xf]
    %v1344 = vpack.c.bf16 %v1188, %v1188
    %1346 = vrot.lane.b32.xlu0 %v1344, 96
    %v1347 = vpop.permute.xlu0 %1346
    %v1352 = vunpack.c.l.b16 %v1340
    %v1353 = vunpack.c.l.b16 %v1341
    %v1354 = vunpack.c.l.b16 %v1342
    %v1355 = vunpack.c.l.b16 %v1343
    %v1356 = vpack.c.b16 %v1353, %v1352
    %v1357 = vpack.c.b16 %v1355, %v1354
    %v1361 = vsel %vm136, %v1347, 0
    %1363 = vmatprep.subr.bf16.mxu0 0
    %1364 = vmatpush1.bf16.msra.mxu0 0
    %1365 = vmatprep.subr.bf16.mxu0 0
    %1366 = vmatpush1.bf16.msra.mxu0 0
    %1367 = vmatprep.subr.bf16.mxu0 0
    %1368 = vmatpush1.bf16.msra.mxu0 0
    %1369 = vmatprep.subr.bf16.mxu0 0
    %1370 = vmatpush1.bf16.msra.mxu0 0
    %1371 = vmatprep.subr.bf16.mxu0 0
    %1372 = vmatpush1.bf16.msra.mxu0 0
    %1373 = vmatprep.subr.bf16.mxu0 0
    %1374 = vmatpush1.bf16.msra.mxu0 0
    %1375 = vmatprep.subr.bf16.mxu0 0
    %1376 = vmatpush1.bf16.msra.mxu0 %v1357
    %1377 = vmatprep.subr.bf16.mxu0 0
    %1378 = vmatpush1.bf16.msra.mxu0 %v1356
    %1379 = vmatprep.subr.bf16.mxu0 0
    %1380 = vmatpush2.bf16.msra.mxu0 0
    %1381 = vmatprep.subr.bf16.mxu0 0
    %1382 = vmatpush2.bf16.msra.mxu0 0
    %1383 = vmatprep.subr.bf16.mxu0 0
    %1384 = vmatpush2.bf16.msra.mxu0 0
    %1385 = vmatprep.subr.bf16.mxu0 0
    %1386 = vmatpush2.bf16.msra.mxu0 0
    %1387 = vmatprep.subr.bf16.mxu0 0
    %1388 = vmatpush2.bf16.msra.mxu0 0
    %1389 = vmatprep.subr.bf16.mxu0 0
    %1390 = vmatpush2.bf16.msra.mxu0 0
    %1391 = vmatprep.subr.bf16.mxu0 0
    %1392 = vmatpush2.bf16.msra.mxu0 0
    %1393 = vmatprep.subr.bf16.mxu0 0
    %1394 = vmatpush2.bf16.msra.mxu0 0
    %1395 = vmatprep.mubr.bf16.mxu0 0
    %1396 = vmatmul.mubr.bf16.gmra.mxu0 %v1361
    %v1397 = vpop.f32.mrf.mxu0
    %v1398 = vadd.f32 %v393, %v1397
    %v1399 = vpop.f32.mrf.mxu0
    %v1400 = vpop.f32.mrf.mxu0
    %v1401 = vpop.f32.mrf.mxu0
    %1402 = vdwg.mxu0
    %v1403 = vadd.f32 %v1335, %v1398
    %v1404 = vsub.f32 0.0, %v1403
    %v1405 = vmul.f32 %v1404, 1.442695
    %v1406 = vpow.pop %v1405
    %v1407 = vadd.f32 %v1406, 1.0
    %v1408 = vrcp.pop %v1407
    %1410 = vrot.lane.b32.xlu0 %v1398, 64
    %v1411 = vpop.permute.xlu0 %1410
    %v1413 = vmul.f32 %v1408, %v1411
    %1415 = vrot.lane.b32.xlu0 %v1413, 64
    %v1416 = vpop.permute.xlu0 %1415
    %v1418 = vadd.f32 %v1335, %v1416
    %v1419 = vtanh.pop %v1418
    %v1420 = vsub.f32 1.0, %v1408
    %1422 = vrot.lane.b32.xlu0 %v1419, 96
    %v1423 = vpop.permute.xlu0 %1422
    %v1425 = vmul.f32 %v1420, %v1423
    %v1426 = vmul.f32 %v1408, %v1188
    %v1427 = vadd.f32 %v1425, %v1426
    %1429 = vrot.lane.b32.xlu0 %v1427, 96
    %v1430 = vpop.permute.xlu0 %1429
    %1432 = vst.msk [vmem:[%s1194] sm:$0xff] %vm136, %v1430
    %s1433 = scalar_lea.vmem [#allocation2], 40
    %v1434 = vld [vmem:[%s1433] sm:$0xff]
    %v1435 = vld [vmem:[#allocation6] sm:$0xf]
    %v1436 = vld [vmem:[#allocation6 + $0x4] sm:$0xf]
    %v1437 = vld [vmem:[#allocation6 + $0x8] sm:$0xf]
    %v1438 = vld [vmem:[#allocation6 + $0xc] sm:$0xf]
    %v1443 = vunpack.c.l.b16 %v1435
    %v1444 = vunpack.c.l.b16 %v1436
    %v1445 = vunpack.c.l.b16 %v1437
    %v1446 = vunpack.c.l.b16 %v1438
    %v1447 = vpack.c.b16 %v1444, %v1443
    %v1448 = vpack.c.b16 %v1446, %v1445
    %1451 = vmatprep.subr.bf16.mxu0 0
    %1452 = vmatpush1.bf16.msra.mxu0 0
    %1453 = vmatprep.subr.bf16.mxu0 0
    %1454 = vmatpush1.bf16.msra.mxu0 0
    %1455 = vmatprep.subr.bf16.mxu0 0
    %1456 = vmatpush1.bf16.msra.mxu0 0
    %1457 = vmatprep.subr.bf16.mxu0 0
    %1458 = vmatpush1.bf16.msra.mxu0 0
    %1459 = vmatprep.subr.bf16.mxu0 0
    %1460 = vmatpush1.bf16.msra.mxu0 0
    %1461 = vmatprep.subr.bf16.mxu0 0
    %1462 = vmatpush1.bf16.msra.mxu0 0
    %1463 = vmatprep.subr.bf16.mxu0 0
    %1464 = vmatpush1.bf16.msra.mxu0 %v1448
    %1465 = vmatprep.subr.bf16.mxu0 0
    %1466 = vmatpush1.bf16.msra.mxu0 %v1447
    %1467 = vmatprep.subr.bf16.mxu0 0
    %1468 = vmatpush2.bf16.msra.mxu0 0
    %1469 = vmatprep.subr.bf16.mxu0 0
    %1470 = vmatpush2.bf16.msra.mxu0 0
    %1471 = vmatprep.subr.bf16.mxu0 0
    %1472 = vmatpush2.bf16.msra.mxu0 0
    %1473 = vmatprep.subr.bf16.mxu0 0
    %1474 = vmatpush2.bf16.msra.mxu0 0
    %1475 = vmatprep.subr.bf16.mxu0 0
    %1476 = vmatpush2.bf16.msra.mxu0 0
    %1477 = vmatprep.subr.bf16.mxu0 0
    %1478 = vmatpush2.bf16.msra.mxu0 0
    %1479 = vmatprep.subr.bf16.mxu0 0
    %1480 = vmatpush2.bf16.msra.mxu0 0
    %1481 = vmatprep.subr.bf16.mxu0 0
    %1482 = vmatpush2.bf16.msra.mxu0 0
    %1483 = vmatprep.mubr.bf16.mxu0 0
    %1484 = vmatmul.mubr.bf16.gmra.mxu0 %v1298
    %v1485 = vpop.f32.mrf.mxu0
    %v1486 = vadd.f32 %v232, %v1485
    %v1487 = vpop.f32.mrf.mxu0
    %v1488 = vpop.f32.mrf.mxu0
    %v1489 = vpop.f32.mrf.mxu0
    %1490 = vdwg.mxu0
    %v1491 = vadd.f32 %v1434, %v1486
    %v1492 = vsub.f32 0.0, %v1491
    %v1493 = vmul.f32 %v1492, 1.442695
    %v1494 = vpow.pop %v1493
    %v1495 = vadd.f32 %v1494, 1.0
    %v1496 = vrcp.pop %v1495
    %1498 = vrot.lane.b32.xlu0 %v1486, 64
    %v1499 = vpop.permute.xlu0 %1498
    %v1501 = vmul.f32 %v1496, %v1499
    %1503 = vrot.lane.b32.xlu0 %v1501, 64
    %v1504 = vpop.permute.xlu0 %1503
    %v1506 = vadd.f32 %v1434, %v1504
    %v1507 = vtanh.pop %v1506
    %v1508 = vsub.f32 1.0, %v1496
    %1510 = vrot.lane.b32.xlu0 %v1507, 96
    %v1511 = vpop.permute.xlu0 %1510
    %v1513 = vmul.f32 %v1508, %v1511
    %v1514 = vmul.f32 %v1496, %v1276
    %v1515 = vadd.f32 %v1513, %v1514
    %v1516 = vpack.c.bf16 %v1515, %v1515
    %v1517 = vld [vmem:[%s315] sm:$0xf]
    %v1518 = vld [vmem:[%s315 + $0x4] sm:$0xf]
    %v1519 = vld [vmem:[%s315 + $0x8] sm:$0xf]
    %v1520 = vld [vmem:[%s315 + $0xc] sm:$0xf]
    %1522 = vrot.lane.b32.xlu0 %v1516, 96
    %v1523 = vpop.permute.xlu0 %1522
    %v1528 = vunpack.c.l.b16 %v1517
    %v1529 = vunpack.c.l.b16 %v1518
    %v1530 = vunpack.c.l.b16 %v1519
    %v1531 = vunpack.c.l.b16 %v1520
    %v1532 = vpack.c.b16 %v1529, %v1528
    %v1533 = vpack.c.b16 %v1531, %v1530
    %v1537 = vsel %vm136, %v1523, 0
    %1539 = vmatprep.subr.bf16.mxu0 0
    %1540 = vmatpush1.bf16.msra.mxu0 0
    %1541 = vmatprep.subr.bf16.mxu0 0
    %1542 = vmatpush1.bf16.msra.mxu0 0
    %1543 = vmatprep.subr.bf16.mxu0 0
    %1544 = vmatpush1.bf16.msra.mxu0 0
    %1545 = vmatprep.subr.bf16.mxu0 0
    %1546 = vmatpush1.bf16.msra.mxu0 0
    %1547 = vmatprep.subr.bf16.mxu0 0
    %1548 = vmatpush1.bf16.msra.mxu0 0
    %1549 = vmatprep.subr.bf16.mxu0 0
    %1550 = vmatpush1.bf16.msra.mxu0 0
    %1551 = vmatprep.subr.bf16.mxu0 0
    %1552 = vmatpush1.bf16.msra.mxu0 %v1533
    %1553 = vmatprep.subr.bf16.mxu0 0
    %1554 = vmatpush1.bf16.msra.mxu0 %v1532
    %1555 = vmatprep.subr.bf16.mxu0 0
    %1556 = vmatpush2.bf16.msra.mxu0 0
    %1557 = vmatprep.subr.bf16.mxu0 0
    %1558 = vmatpush2.bf16.msra.mxu0 0
    %1559 = vmatprep.subr.bf16.mxu0 0
    %1560 = vmatpush2.bf16.msra.mxu0 0
    %1561 = vmatprep.subr.bf16.mxu0 0
    %1562 = vmatpush2.bf16.msra.mxu0 0
    %1563 = vmatprep.subr.bf16.mxu0 0
    %1564 = vmatpush2.bf16.msra.mxu0 0
    %1565 = vmatprep.subr.bf16.mxu0 0
    %1566 = vmatpush2.bf16.msra.mxu0 0
    %1567 = vmatprep.subr.bf16.mxu0 0
    %1568 = vmatpush2.bf16.msra.mxu0 0
    %1569 = vmatprep.subr.bf16.mxu0 0
    %1570 = vmatpush2.bf16.msra.mxu0 0
    %1571 = vmatprep.mubr.bf16.mxu0 0
    %1572 = vmatmul.mubr.bf16.gmra.mxu0 %v1537
    %v1573 = vpop.f32.mrf.mxu0
    %v1574 = vadd.f32 %v324, %v1573
    %v1575 = vpop.f32.mrf.mxu0
    %v1576 = vpop.f32.mrf.mxu0
    %v1577 = vpop.f32.mrf.mxu0
    %1578 = vdwg.mxu0
    %v1579 = vld [vmem:[%s384] sm:$0xf]
    %v1580 = vld [vmem:[%s384 + $0x4] sm:$0xf]
    %v1581 = vld [vmem:[%s384 + $0x8] sm:$0xf]
    %v1582 = vld [vmem:[%s384 + $0xc] sm:$0xf]
    %v1583 = vpack.c.bf16 %v1427, %v1427
    %1585 = vrot.lane.b32.xlu0 %v1583, 96
    %v1586 = vpop.permute.xlu0 %1585
    %v1591 = vunpack.c.l.b16 %v1579
    %v1592 = vunpack.c.l.b16 %v1580
    %v1593 = vunpack.c.l.b16 %v1581
    %v1594 = vunpack.c.l.b16 %v1582
    %v1595 = vpack.c.b16 %v1592, %v1591
    %v1596 = vpack.c.b16 %v1594, %v1593
    %v1600 = vsel %vm136, %v1586, 0
    %1602 = vmatprep.subr.bf16.mxu0 0
    %1603 = vmatpush1.bf16.msra.mxu0 0
    %1604 = vmatprep.subr.bf16.mxu0 0
    %1605 = vmatpush1.bf16.msra.mxu0 0
    %1606 = vmatprep.subr.bf16.mxu0 0
    %1607 = vmatpush1.bf16.msra.mxu0 0
    %1608 = vmatprep.subr.bf16.mxu0 0
    %1609 = vmatpush1.bf16.msra.mxu0 0
    %1610 = vmatprep.subr.bf16.mxu0 0
    %1611 = vmatpush1.bf16.msra.mxu0 0
    %1612 = vmatprep.subr.bf16.mxu0 0
    %1613 = vmatpush1.bf16.msra.mxu0 0
    %1614 = vmatprep.subr.bf16.mxu0 0
    %1615 = vmatpush1.bf16.msra.mxu0 %v1596
    %1616 = vmatprep.subr.bf16.mxu0 0
    %1617 = vmatpush1.bf16.msra.mxu0 %v1595
    %1618 = vmatprep.subr.bf16.mxu0 0
    %1619 = vmatpush2.bf16.msra.mxu0 0
    %1620 = vmatprep.subr.bf16.mxu0 0
    %1621 = vmatpush2.bf16.msra.mxu0 0
    %1622 = vmatprep.subr.bf16.mxu0 0
    %1623 = vmatpush2.bf16.msra.mxu0 0
    %1624 = vmatprep.subr.bf16.mxu0 0
    %1625 = vmatpush2.bf16.msra.mxu0 0
    %1626 = vmatprep.subr.bf16.mxu0 0
    %1627 = vmatpush2.bf16.msra.mxu0 0
    %1628 = vmatprep.subr.bf16.mxu0 0
    %1629 = vmatpush2.bf16.msra.mxu0 0
    %1630 = vmatprep.subr.bf16.mxu0 0
    %1631 = vmatpush2.bf16.msra.mxu0 0
    %1632 = vmatprep.subr.bf16.mxu0 0
    %1633 = vmatpush2.bf16.msra.mxu0 0
    %1634 = vmatprep.mubr.bf16.mxu0 0
    %1635 = vmatmul.mubr.bf16.gmra.mxu0 %v1600
    %v1636 = vpop.f32.mrf.mxu0
    %v1637 = vadd.f32 %v393, %v1636
    %v1638 = vpop.f32.mrf.mxu0
    %v1639 = vpop.f32.mrf.mxu0
    %v1640 = vpop.f32.mrf.mxu0
    %1641 = vdwg.mxu0
    %v1642 = vadd.f32 %v1574, %v1637
    %v1643 = vsub.f32 0.0, %v1642
    %v1644 = vmul.f32 %v1643, 1.442695
    %v1645 = vpow.pop %v1644
    %v1646 = vadd.f32 %v1645, 1.0
    %v1647 = vrcp.pop %v1646
    %1649 = vrot.lane.b32.xlu0 %v1637, 64
    %v1650 = vpop.permute.xlu0 %1649
    %v1652 = vmul.f32 %v1647, %v1650
    %1654 = vrot.lane.b32.xlu0 %v1652, 64
    %v1655 = vpop.permute.xlu0 %1654
    %v1657 = vadd.f32 %v1574, %v1655
    %v1658 = vtanh.pop %v1657
    %v1659 = vsub.f32 1.0, %v1647
    %1661 = vrot.lane.b32.xlu0 %v1658, 96
    %v1662 = vpop.permute.xlu0 %1661
    %v1664 = vmul.f32 %v1659, %v1662
    %v1665 = vmul.f32 %v1647, %v1427
    %v1666 = vadd.f32 %v1664, %v1665
    %1668 = vrot.lane.b32.xlu0 %v1666, 96
    %v1669 = vpop.permute.xlu0 %1668
    %1671 = vst.msk [vmem:[%s1433] sm:$0xff] %vm136, %v1669
    %s1672 = scalar_lea.vmem [#allocation2], 48
    %v1673 = vld [vmem:[%s1672] sm:$0xff]
    %v1674 = vld [vmem:[#allocation6] sm:$0xf]
    %v1675 = vld [vmem:[#allocation6 + $0x4] sm:$0xf]
    %v1676 = vld [vmem:[#allocation6 + $0x8] sm:$0xf]
    %v1677 = vld [vmem:[#allocation6 + $0xc] sm:$0xf]
    %v1682 = vunpack.c.l.b16 %v1674
    %v1683 = vunpack.c.l.b16 %v1675
    %v1684 = vunpack.c.l.b16 %v1676
    %v1685 = vunpack.c.l.b16 %v1677
    %v1686 = vpack.c.b16 %v1683, %v1682
    %v1687 = vpack.c.b16 %v1685, %v1684
    %1690 = vmatprep.subr.bf16.mxu0 0
    %1691 = vmatpush1.bf16.msra.mxu0 0
    %1692 = vmatprep.subr.bf16.mxu0 0
    %1693 = vmatpush1.bf16.msra.mxu0 0
    %1694 = vmatprep.subr.bf16.mxu0 0
    %1695 = vmatpush1.bf16.msra.mxu0 0
    %1696 = vmatprep.subr.bf16.mxu0 0
    %1697 = vmatpush1.bf16.msra.mxu0 0
    %1698 = vmatprep.subr.bf16.mxu0 0
    %1699 = vmatpush1.bf16.msra.mxu0 0
    %1700 = vmatprep.subr.bf16.mxu0 0
    %1701 = vmatpush1.bf16.msra.mxu0 0
    %1702 = vmatprep.subr.bf16.mxu0 0
    %1703 = vmatpush1.bf16.msra.mxu0 %v1687
    %1704 = vmatprep.subr.bf16.mxu0 0
    %1705 = vmatpush1.bf16.msra.mxu0 %v1686
    %1706 = vmatprep.subr.bf16.mxu0 0
    %1707 = vmatpush2.bf16.msra.mxu0 0
    %1708 = vmatprep.subr.bf16.mxu0 0
    %1709 = vmatpush2.bf16.msra.mxu0 0
    %1710 = vmatprep.subr.bf16.mxu0 0
    %1711 = vmatpush2.bf16.msra.mxu0 0
    %1712 = vmatprep.subr.bf16.mxu0 0
    %1713 = vmatpush2.bf16.msra.mxu0 0
    %1714 = vmatprep.subr.bf16.mxu0 0
    %1715 = vmatpush2.bf16.msra.mxu0 0
    %1716 = vmatprep.subr.bf16.mxu0 0
    %1717 = vmatpush2.bf16.msra.mxu0 0
    %1718 = vmatprep.subr.bf16.mxu0 0
    %1719 = vmatpush2.bf16.msra.mxu0 0
    %1720 = vmatprep.subr.bf16.mxu0 0
    %1721 = vmatpush2.bf16.msra.mxu0 0
    %1722 = vmatprep.mubr.bf16.mxu0 0
    %1723 = vmatmul.mubr.bf16.gmra.mxu0 %v1537
    %v1724 = vpop.f32.mrf.mxu0
    %v1725 = vadd.f32 %v232, %v1724
    %v1726 = vpop.f32.mrf.mxu0
    %v1727 = vpop.f32.mrf.mxu0
    %v1728 = vpop.f32.mrf.mxu0
    %1729 = vdwg.mxu0
    %v1730 = vadd.f32 %v1673, %v1725
    %v1731 = vsub.f32 0.0, %v1730
    %v1732 = vmul.f32 %v1731, 1.442695
    %v1733 = vpow.pop %v1732
    %v1734 = vadd.f32 %v1733, 1.0
    %v1735 = vrcp.pop %v1734
    %1737 = vrot.lane.b32.xlu0 %v1725, 64
    %v1738 = vpop.permute.xlu0 %1737
    %v1740 = vmul.f32 %v1735, %v1738
    %1742 = vrot.lane.b32.xlu0 %v1740, 64
    %v1743 = vpop.permute.xlu0 %1742
    %v1745 = vadd.f32 %v1673, %v1743
    %v1746 = vtanh.pop %v1745
    %v1747 = vsub.f32 1.0, %v1735
    %1749 = vrot.lane.b32.xlu0 %v1746, 96
    %v1750 = vpop.permute.xlu0 %1749
    %v1752 = vmul.f32 %v1747, %v1750
    %v1753 = vmul.f32 %v1735, %v1515
    %v1754 = vadd.f32 %v1752, %v1753
    %v1755 = vpack.c.bf16 %v1754, %v1754
    %v1756 = vld [vmem:[%s315] sm:$0xf]
    %v1757 = vld [vmem:[%s315 + $0x4] sm:$0xf]
    %v1758 = vld [vmem:[%s315 + $0x8] sm:$0xf]
    %v1759 = vld [vmem:[%s315 + $0xc] sm:$0xf]
    %1761 = vrot.lane.b32.xlu0 %v1755, 96
    %v1762 = vpop.permute.xlu0 %1761
    %v1767 = vunpack.c.l.b16 %v1756
    %v1768 = vunpack.c.l.b16 %v1757
    %v1769 = vunpack.c.l.b16 %v1758
    %v1770 = vunpack.c.l.b16 %v1759
    %v1771 = vpack.c.b16 %v1768, %v1767
    %v1772 = vpack.c.b16 %v1770, %v1769
    %v1776 = vsel %vm136, %v1762, 0
    %1778 = vmatprep.subr.bf16.mxu0 0
    %1779 = vmatpush1.bf16.msra.mxu0 0
    %1780 = vmatprep.subr.bf16.mxu0 0
    %1781 = vmatpush1.bf16.msra.mxu0 0
    %1782 = vmatprep.subr.bf16.mxu0 0
    %1783 = vmatpush1.bf16.msra.mxu0 0
    %1784 = vmatprep.subr.bf16.mxu0 0
    %1785 = vmatpush1.bf16.msra.mxu0 0
    %1786 = vmatprep.subr.bf16.mxu0 0
    %1787 = vmatpush1.bf16.msra.mxu0 0
    %1788 = vmatprep.subr.bf16.mxu0 0
    %1789 = vmatpush1.bf16.msra.mxu0 0
    %1790 = vmatprep.subr.bf16.mxu0 0
    %1791 = vmatpush1.bf16.msra.mxu0 %v1772
    %1792 = vmatprep.subr.bf16.mxu0 0
    %1793 = vmatpush1.bf16.msra.mxu0 %v1771
    %1794 = vmatprep.subr.bf16.mxu0 0
    %1795 = vmatpush2.bf16.msra.mxu0 0
    %1796 = vmatprep.subr.bf16.mxu0 0
    %1797 = vmatpush2.bf16.msra.mxu0 0
    %1798 = vmatprep.subr.bf16.mxu0 0
    %1799 = vmatpush2.bf16.msra.mxu0 0
    %1800 = vmatprep.subr.bf16.mxu0 0
    %1801 = vmatpush2.bf16.msra.mxu0 0
    %1802 = vmatprep.subr.bf16.mxu0 0
    %1803 = vmatpush2.bf16.msra.mxu0 0
    %1804 = vmatprep.subr.bf16.mxu0 0
    %1805 = vmatpush2.bf16.msra.mxu0 0
    %1806 = vmatprep.subr.bf16.mxu0 0
    %1807 = vmatpush2.bf16.msra.mxu0 0
    %1808 = vmatprep.subr.bf16.mxu0 0
    %1809 = vmatpush2.bf16.msra.mxu0 0
    %1810 = vmatprep.mubr.bf16.mxu0 0
    %1811 = vmatmul.mubr.bf16.gmra.mxu0 %v1776
    %v1812 = vpop.f32.mrf.mxu0
    %v1813 = vadd.f32 %v324, %v1812
    %v1814 = vpop.f32.mrf.mxu0
    %v1815 = vpop.f32.mrf.mxu0
    %v1816 = vpop.f32.mrf.mxu0
    %1817 = vdwg.mxu0
    %v1818 = vld [vmem:[%s384] sm:$0xf]
    %v1819 = vld [vmem:[%s384 + $0x4] sm:$0xf]
    %v1820 = vld [vmem:[%s384 + $0x8] sm:$0xf]
    %v1821 = vld [vmem:[%s384 + $0xc] sm:$0xf]
    %v1822 = vpack.c.bf16 %v1666, %v1666
    %1824 = vrot.lane.b32.xlu0 %v1822, 96
    %v1825 = vpop.permute.xlu0 %1824
    %v1830 = vunpack.c.l.b16 %v1818
    %v1831 = vunpack.c.l.b16 %v1819
    %v1832 = vunpack.c.l.b16 %v1820
    %v1833 = vunpack.c.l.b16 %v1821
    %v1834 = vpack.c.b16 %v1831, %v1830
    %v1835 = vpack.c.b16 %v1833, %v1832
    %v1839 = vsel %vm136, %v1825, 0
    %1841 = vmatprep.subr.bf16.mxu0 0
    %1842 = vmatpush1.bf16.msra.mxu0 0
    %1843 = vmatprep.subr.bf16.mxu0 0
    %1844 = vmatpush1.bf16.msra.mxu0 0
    %1845 = vmatprep.subr.bf16.mxu0 0
    %1846 = vmatpush1.bf16.msra.mxu0 0
    %1847 = vmatprep.subr.bf16.mxu0 0
    %1848 = vmatpush1.bf16.msra.mxu0 0
    %1849 = vmatprep.subr.bf16.mxu0 0
    %1850 = vmatpush1.bf16.msra.mxu0 0
    %1851 = vmatprep.subr.bf16.mxu0 0
    %1852 = vmatpush1.bf16.msra.mxu0 0
    %1853 = vmatprep.subr.bf16.mxu0 0
    %1854 = vmatpush1.bf16.msra.mxu0 %v1835
    %1855 = vmatprep.subr.bf16.mxu0 0
    %1856 = vmatpush1.bf16.msra.mxu0 %v1834
    %1857 = vmatprep.subr.bf16.mxu0 0
    %1858 = vmatpush2.bf16.msra.mxu0 0
    %1859 = vmatprep.subr.bf16.mxu0 0
    %1860 = vmatpush2.bf16.msra.mxu0 0
    %1861 = vmatprep.subr.bf16.mxu0 0
    %1862 = vmatpush2.bf16.msra.mxu0 0
    %1863 = vmatprep.subr.bf16.mxu0 0
    %1864 = vmatpush2.bf16.msra.mxu0 0
    %1865 = vmatprep.subr.bf16.mxu0 0
    %1866 = vmatpush2.bf16.msra.mxu0 0
    %1867 = vmatprep.subr.bf16.mxu0 0
    %1868 = vmatpush2.bf16.msra.mxu0 0
    %1869 = vmatprep.subr.bf16.mxu0 0
    %1870 = vmatpush2.bf16.msra.mxu0 0
    %1871 = vmatprep.subr.bf16.mxu0 0
    %1872 = vmatpush2.bf16.msra.mxu0 0
    %1873 = vmatprep.mubr.bf16.mxu0 0
    %1874 = vmatmul.mubr.bf16.gmra.mxu0 %v1839
    %v1875 = vpop.f32.mrf.mxu0
    %v1876 = vadd.f32 %v393, %v1875
    %v1877 = vpop.f32.mrf.mxu0
    %v1878 = vpop.f32.mrf.mxu0
    %v1879 = vpop.f32.mrf.mxu0
    %1880 = vdwg.mxu0
    %v1881 = vadd.f32 %v1813, %v1876
    %v1882 = vsub.f32 0.0, %v1881
    %v1883 = vmul.f32 %v1882, 1.442695
    %v1884 = vpow.pop %v1883
    %v1885 = vadd.f32 %v1884, 1.0
    %v1886 = vrcp.pop %v1885
    %1888 = vrot.lane.b32.xlu0 %v1876, 64
    %v1889 = vpop.permute.xlu0 %1888
    %v1891 = vmul.f32 %v1886, %v1889
    %1893 = vrot.lane.b32.xlu0 %v1891, 64
    %v1894 = vpop.permute.xlu0 %1893
    %v1896 = vadd.f32 %v1813, %v1894
    %v1897 = vtanh.pop %v1896
    %v1898 = vsub.f32 1.0, %v1886
    %1900 = vrot.lane.b32.xlu0 %v1897, 96
    %v1901 = vpop.permute.xlu0 %1900
    %v1903 = vmul.f32 %v1898, %v1901
    %v1904 = vmul.f32 %v1886, %v1666
    %v1905 = vadd.f32 %v1903, %v1904
    %1907 = vrot.lane.b32.xlu0 %v1905, 96
    %v1908 = vpop.permute.xlu0 %1907
    %1910 = vst.msk [vmem:[%s1672] sm:$0xff] %vm136, %v1908
    %s1911 = scalar_lea.vmem [#allocation2], 56
    %v1912 = vld [vmem:[%s1911] sm:$0xff]
    %v1913 = vld [vmem:[#allocation6] sm:$0xf]
    %v1914 = vld [vmem:[#allocation6 + $0x4] sm:$0xf]
    %v1915 = vld [vmem:[#allocation6 + $0x8] sm:$0xf]
    %v1916 = vld [vmem:[#allocation6 + $0xc] sm:$0xf]
    %v1921 = vunpack.c.l.b16 %v1913
    %v1922 = vunpack.c.l.b16 %v1914
    %v1923 = vunpack.c.l.b16 %v1915
    %v1924 = vunpack.c.l.b16 %v1916
    %v1925 = vpack.c.b16 %v1922, %v1921
    %v1926 = vpack.c.b16 %v1924, %v1923
    %1929 = vmatprep.subr.bf16.mxu0 0
    %1930 = vmatpush1.bf16.msra.mxu0 0
    %1931 = vmatprep.subr.bf16.mxu0 0
    %1932 = vmatpush1.bf16.msra.mxu0 0
    %1933 = vmatprep.subr.bf16.mxu0 0
    %1934 = vmatpush1.bf16.msra.mxu0 0
    %1935 = vmatprep.subr.bf16.mxu0 0
    %1936 = vmatpush1.bf16.msra.mxu0 0
    %1937 = vmatprep.subr.bf16.mxu0 0
    %1938 = vmatpush1.bf16.msra.mxu0 0
    %1939 = vmatprep.subr.bf16.mxu0 0
    %1940 = vmatpush1.bf16.msra.mxu0 0
    %1941 = vmatprep.subr.bf16.mxu0 0
    %1942 = vmatpush1.bf16.msra.mxu0 %v1926
    %1943 = vmatprep.subr.bf16.mxu0 0
    %1944 = vmatpush1.bf16.msra.mxu0 %v1925
    %1945 = vmatprep.subr.bf16.mxu0 0
    %1946 = vmatpush2.bf16.msra.mxu0 0
    %1947 = vmatprep.subr.bf16.mxu0 0
    %1948 = vmatpush2.bf16.msra.mxu0 0
    %1949 = vmatprep.subr.bf16.mxu0 0
    %1950 = vmatpush2.bf16.msra.mxu0 0
    %1951 = vmatprep.subr.bf16.mxu0 0
    %1952 = vmatpush2.bf16.msra.mxu0 0
    %1953 = vmatprep.subr.bf16.mxu0 0
    %1954 = vmatpush2.bf16.msra.mxu0 0
    %1955 = vmatprep.subr.bf16.mxu0 0
    %1956 = vmatpush2.bf16.msra.mxu0 0
    %1957 = vmatprep.subr.bf16.mxu0 0
    %1958 = vmatpush2.bf16.msra.mxu0 0
    %1959 = vmatprep.subr.bf16.mxu0 0
    %1960 = vmatpush2.bf16.msra.mxu0 0
    %1961 = vmatprep.mubr.bf16.mxu0 0
    %1962 = vmatmul.mubr.bf16.gmra.mxu0 %v1776
    %v1963 = vpop.f32.mrf.mxu0
    %v1964 = vadd.f32 %v232, %v1963
    %v1965 = vpop.f32.mrf.mxu0
    %v1966 = vpop.f32.mrf.mxu0
    %v1967 = vpop.f32.mrf.mxu0
    %1968 = vdwg.mxu0
    %v1969 = vadd.f32 %v1912, %v1964
    %v1970 = vsub.f32 0.0, %v1969
    %v1971 = vmul.f32 %v1970, 1.442695
    %v1972 = vpow.pop %v1971
    %v1973 = vadd.f32 %v1972, 1.0
    %v1974 = vrcp.pop %v1973
    %1976 = vrot.lane.b32.xlu0 %v1964, 64
    %v1977 = vpop.permute.xlu0 %1976
    %v1979 = vmul.f32 %v1974, %v1977
    %1981 = vrot.lane.b32.xlu0 %v1979, 64
    %v1982 = vpop.permute.xlu0 %1981
    %v1984 = vadd.f32 %v1912, %v1982
    %v1985 = vtanh.pop %v1984
    %v1986 = vsub.f32 1.0, %v1974
    %1988 = vrot.lane.b32.xlu0 %v1985, 96
    %v1989 = vpop.permute.xlu0 %1988
    %v1991 = vmul.f32 %v1986, %v1989
    %v1992 = vmul.f32 %v1974, %v1754
    %v1993 = vadd.f32 %v1991, %v1992
    %v1994 = vpack.c.bf16 %v1993, %v1993
    %v1995 = vld [vmem:[%s315] sm:$0xf]
    %v1996 = vld [vmem:[%s315 + $0x4] sm:$0xf]
    %v1997 = vld [vmem:[%s315 + $0x8] sm:$0xf]
    %v1998 = vld [vmem:[%s315 + $0xc] sm:$0xf]
    %2000 = vrot.lane.b32.xlu0 %v1994, 96
    %v2001 = vpop.permute.xlu0 %2000
    %v2006 = vunpack.c.l.b16 %v1995
    %v2007 = vunpack.c.l.b16 %v1996
    %v2008 = vunpack.c.l.b16 %v1997
    %v2009 = vunpack.c.l.b16 %v1998
    %v2010 = vpack.c.b16 %v2007, %v2006
    %v2011 = vpack.c.b16 %v2009, %v2008
    %v2015 = vsel %vm136, %v2001, 0
    %2017 = vmatprep.subr.bf16.mxu0 0
    %2018 = vmatpush1.bf16.msra.mxu0 0
    %2019 = vmatprep.subr.bf16.mxu0 0
    %2020 = vmatpush1.bf16.msra.mxu0 0
    %2021 = vmatprep.subr.bf16.mxu0 0
    %2022 = vmatpush1.bf16.msra.mxu0 0
    %2023 = vmatprep.subr.bf16.mxu0 0
    %2024 = vmatpush1.bf16.msra.mxu0 0
    %2025 = vmatprep.subr.bf16.mxu0 0
    %2026 = vmatpush1.bf16.msra.mxu0 0
    %2027 = vmatprep.subr.bf16.mxu0 0
    %2028 = vmatpush1.bf16.msra.mxu0 0
    %2029 = vmatprep.subr.bf16.mxu0 0
    %2030 = vmatpush1.bf16.msra.mxu0 %v2011
    %2031 = vmatprep.subr.bf16.mxu0 0
    %2032 = vmatpush1.bf16.msra.mxu0 %v2010
    %2033 = vmatprep.subr.bf16.mxu0 0
    %2034 = vmatpush2.bf16.msra.mxu0 0
    %2035 = vmatprep.subr.bf16.mxu0 0
    %2036 = vmatpush2.bf16.msra.mxu0 0
    %2037 = vmatprep.subr.bf16.mxu0 0
    %2038 = vmatpush2.bf16.msra.mxu0 0
    %2039 = vmatprep.subr.bf16.mxu0 0
    %2040 = vmatpush2.bf16.msra.mxu0 0
    %2041 = vmatprep.subr.bf16.mxu0 0
    %2042 = vmatpush2.bf16.msra.mxu0 0
    %2043 = vmatprep.subr.bf16.mxu0 0
    %2044 = vmatpush2.bf16.msra.mxu0 0
    %2045 = vmatprep.subr.bf16.mxu0 0
    %2046 = vmatpush2.bf16.msra.mxu0 0
    %2047 = vmatprep.subr.bf16.mxu0 0
    %2048 = vmatpush2.bf16.msra.mxu0 0
    %2049 = vmatprep.mubr.bf16.mxu0 0
    %2050 = vmatmul.mubr.bf16.gmra.mxu0 %v2015
    %v2051 = vpop.f32.mrf.mxu0
    %v2052 = vadd.f32 %v324, %v2051
    %v2053 = vpop.f32.mrf.mxu0
    %v2054 = vpop.f32.mrf.mxu0
    %v2055 = vpop.f32.mrf.mxu0
    %2056 = vdwg.mxu0
    %v2057 = vld [vmem:[%s384] sm:$0xf]
    %v2058 = vld [vmem:[%s384 + $0x4] sm:$0xf]
    %v2059 = vld [vmem:[%s384 + $0x8] sm:$0xf]
    %v2060 = vld [vmem:[%s384 + $0xc] sm:$0xf]
    %v2061 = vpack.c.bf16 %v1905, %v1905
    %2063 = vrot.lane.b32.xlu0 %v2061, 96
    %v2064 = vpop.permute.xlu0 %2063
    %v2069 = vunpack.c.l.b16 %v2057
    %v2070 = vunpack.c.l.b16 %v2058
    %v2071 = vunpack.c.l.b16 %v2059
    %v2072 = vunpack.c.l.b16 %v2060
    %v2073 = vpack.c.b16 %v2070, %v2069
    %v2074 = vpack.c.b16 %v2072, %v2071
    %v2078 = vsel %vm136, %v2064, 0
    %2080 = vmatprep.subr.bf16.mxu0 0
    %2081 = vmatpush1.bf16.msra.mxu0 0
    %2082 = vmatprep.subr.bf16.mxu0 0
    %2083 = vmatpush1.bf16.msra.mxu0 0
    %2084 = vmatprep.subr.bf16.mxu0 0
    %2085 = vmatpush1.bf16.msra.mxu0 0
    %2086 = vmatprep.subr.bf16.mxu0 0
    %2087 = vmatpush1.bf16.msra.mxu0 0
    %2088 = vmatprep.subr.bf16.mxu0 0
    %2089 = vmatpush1.bf16.msra.mxu0 0
    %2090 = vmatprep.subr.bf16.mxu0 0
    %2091 = vmatpush1.bf16.msra.mxu0 0
    %2092 = vmatprep.subr.bf16.mxu0 0
    %2093 = vmatpush1.bf16.msra.mxu0 %v2074
    %2094 = vmatprep.subr.bf16.mxu0 0
    %2095 = vmatpush1.bf16.msra.mxu0 %v2073
    %2096 = vmatprep.subr.bf16.mxu0 0
    %2097 = vmatpush2.bf16.msra.mxu0 0
    %2098 = vmatprep.subr.bf16.mxu0 0
    %2099 = vmatpush2.bf16.msra.mxu0 0
    %2100 = vmatprep.subr.bf16.mxu0 0
    %2101 = vmatpush2.bf16.msra.mxu0 0
    %2102 = vmatprep.subr.bf16.mxu0 0
    %2103 = vmatpush2.bf16.msra.mxu0 0
    %2104 = vmatprep.subr.bf16.mxu0 0
    %2105 = vmatpush2.bf16.msra.mxu0 0
    %2106 = vmatprep.subr.bf16.mxu0 0
    %2107 = vmatpush2.bf16.msra.mxu0 0
    %2108 = vmatprep.subr.bf16.mxu0 0
    %2109 = vmatpush2.bf16.msra.mxu0 0
    %2110 = vmatprep.subr.bf16.mxu0 0
    %2111 = vmatpush2.bf16.msra.mxu0 0
    %2112 = vmatprep.mubr.bf16.mxu0 0
    %2113 = vmatmul.mubr.bf16.gmra.mxu0 %v2078
    %v2114 = vpop.f32.mrf.mxu0
    %v2115 = vadd.f32 %v393, %v2114
    %v2116 = vpop.f32.mrf.mxu0
    %v2117 = vpop.f32.mrf.mxu0
    %v2118 = vpop.f32.mrf.mxu0
    %2119 = vdwg.mxu0
    %v2120 = vadd.f32 %v2052, %v2115
    %v2121 = vsub.f32 0.0, %v2120
    %v2122 = vmul.f32 %v2121, 1.442695
    %v2123 = vpow.pop %v2122
    %v2124 = vadd.f32 %v2123, 1.0
    %v2125 = vrcp.pop %v2124
    %2127 = vrot.lane.b32.xlu0 %v2115, 64
    %v2128 = vpop.permute.xlu0 %2127
    %v2130 = vmul.f32 %v2125, %v2128
    %2132 = vrot.lane.b32.xlu0 %v2130, 64
    %v2133 = vpop.permute.xlu0 %2132
    %v2135 = vadd.f32 %v2052, %v2133
    %v2136 = vtanh.pop %v2135
    %v2137 = vsub.f32 1.0, %v2125
    %2139 = vrot.lane.b32.xlu0 %v2136, 96
    %v2140 = vpop.permute.xlu0 %2139
    %v2142 = vmul.f32 %v2137, %v2140
    %v2143 = vmul.f32 %v2125, %v1905
    %v2144 = vadd.f32 %v2142, %v2143
    %2146 = vrot.lane.b32.xlu0 %v2144, 96
    %v2147 = vpop.permute.xlu0 %2146
    %2149 = vst.msk [vmem:[%s1911] sm:$0xff] %vm136, %v2147
    %v2150 = vld [vmem:[%s1] sm:$0xff]
    %vm2151 = vcmp.gt.s32.totalorder %v2150, 0
    %vm2152 = vcmp.gt.s32.totalorder %v2150, 1
    %vm2153 = vcmp.gt.s32.totalorder %v2150, 2
    %vm2154 = vcmp.gt.s32.totalorder %v2150, 3
    %vm2155 = vcmp.gt.s32.totalorder %v2150, 4
    %vm2156 = vcmp.gt.s32.totalorder %v2150, 5
    %vm2157 = vcmp.gt.s32.totalorder %v2150, 6
    %vm2158 = vcmp.gt.s32.totalorder %v2150, 7
    %v2159 = vld [vmem:[#allocation2] sm:$0xff]
    %v2160 = vld [vmem:[#allocation2 + $0x8] sm:$0xff]
    %v2161 = vld [vmem:[#allocation2 + $0x10] sm:$0xff]
    %v2162 = vld [vmem:[#allocation2 + $0x18] sm:$0xff]
    %v2163 = vld [vmem:[#allocation2 + $0x20] sm:$0xff]
    %v2164 = vld [vmem:[#allocation2 + $0x28] sm:$0xff]
    %v2165 = vld [vmem:[#allocation2 + $0x30] sm:$0xff]
    %v2166 = vld [vmem:[#allocation2 + $0x38] sm:$0xff]
    %v2167 = vsel %vm2151, 1, 0
    %v2168 = vsel %vm2152, 1, 0
    %v2169 = vsel %vm2153, 1, 0
    %v2170 = vsel %vm2154, 1, 0
    %v2171 = vsel %vm2155, 1, 0
    %v2172 = vsel %vm2156, 1, 0
    %v2173 = vsel %vm2157, 1, 0
    %v2174 = vsel %vm2158, 1, 0
    %2175 = vset.pattern.permute.xlu0 0
    %2176 = vperm.xlu0 %2175, %v2167
    %v2177 = vpop.permute.xlu0 %2176
    %2178 = vset.pattern.permute.xlu0 0
    %2179 = vperm.xlu0 %2178, %v2168
    %v2180 = vpop.permute.xlu0 %2179
    %2181 = vset.pattern.permute.xlu0 0
    %2182 = vperm.xlu0 %2181, %v2169
    %v2183 = vpop.permute.xlu0 %2182
    %2184 = vset.pattern.permute.xlu0 0
    %2185 = vperm.xlu0 %2184, %v2170
    %v2186 = vpop.permute.xlu0 %2185
    %2187 = vset.pattern.permute.xlu0 0
    %2188 = vperm.xlu0 %2187, %v2171
    %v2189 = vpop.permute.xlu0 %2188
    %2190 = vset.pattern.permute.xlu0 0
    %2191 = vperm.xlu0 %2190, %v2172
    %v2192 = vpop.permute.xlu0 %2191
    %2193 = vset.pattern.permute.xlu0 0
    %2194 = vperm.xlu0 %2193, %v2173
    %v2195 = vpop.permute.xlu0 %2194
    %2196 = vset.pattern.permute.xlu0 0
    %2197 = vperm.xlu0 %2196, %v2174
    %v2198 = vpop.permute.xlu0 %2197
    %vm2199 = vcmp.eq.s32.totalorder %v2177, 1
    %vm2200 = vcmp.eq.s32.totalorder %v2180, 1
    %vm2201 = vcmp.eq.s32.totalorder %v2183, 1
    %vm2202 = vcmp.eq.s32.totalorder %v2186, 1
    %vm2203 = vcmp.eq.s32.totalorder %v2189, 1
    %vm2204 = vcmp.eq.s32.totalorder %v2192, 1
    %vm2205 = vcmp.eq.s32.totalorder %v2195, 1
    %vm2206 = vcmp.eq.s32.totalorder %v2198, 1
    %v2207 = vsel %vm2199, %v2159, -1.0
    %v2208 = vsel %vm2200, %v2160, -1.0
    %v2209 = vsel %vm2201, %v2161, -1.0
    %v2210 = vsel %vm2202, %v2162, -1.0
    %v2211 = vsel %vm2203, %v2163, -1.0
    %v2212 = vsel %vm2204, %v2164, -1.0
    %v2213 = vsel %vm2205, %v2165, -1.0
    %v2214 = vsel %vm2206, %v2166, -1.0
    %v2215 = vpack.c.bf16 %v2208, %v2207
    %v2216 = vpack.c.bf16 %v2210, %v2209
    %v2217 = vpack.c.bf16 %v2212, %v2211
    %v2218 = vpack.c.bf16 %v2214, %v2213
    %v2219 = vld [vmem:[%s6] sm:$0xf]
    %v2220 = vld [vmem:[%s6 + $0x4] sm:$0xf]
    %v2221 = vld [vmem:[%s6 + $0x8] sm:$0xf]
    %v2222 = vld [vmem:[%s6 + $0xc] sm:$0xf]
    %v2223 = vld [vmem:[%s7] sm:$0x1]
    %v2225 = vlaneseq
    %v2226 = vshrl.u32 %v2225, 7
    %v2227 = vsub.s32 0, %v2226
    %v2228 = vrot.slane %v2223, %v2227
    %v2234 = vunpack.c.l.b16 %v2219
    %v2235 = vunpack.c.l.b16 %v2220
    %v2236 = vunpack.c.l.b16 %v2221
    %v2237 = vunpack.c.l.b16 %v2222
    %v2238 = vpack.c.b16 %v2235, %v2234
    %v2239 = vpack.c.b16 %v2237, %v2236
    %v2243 = vsel %vm136, %v2215, 0
    %v2246 = vsel %vm136, %v2216, 0
    %v2249 = vsel %vm136, %v2217, 0
    %v2252 = vsel %vm136, %v2218, 0
    %2254 = vmatprep.subr.bf16.mxu0 0
    %2255 = vmatpush1.bf16.msra.mxu0 0
    %2256 = vmatprep.subr.bf16.mxu0 0
    %2257 = vmatpush1.bf16.msra.mxu0 0
    %2258 = vmatprep.subr.bf16.mxu0 0
    %2259 = vmatpush1.bf16.msra.mxu0 0
    %2260 = vmatprep.subr.bf16.mxu0 0
    %2261 = vmatpush1.bf16.msra.mxu0 0
    %2262 = vmatprep.subr.bf16.mxu0 0
    %2263 = vmatpush1.bf16.msra.mxu0 0
    %2264 = vmatprep.subr.bf16.mxu0 0
    %2265 = vmatpush1.bf16.msra.mxu0 0
    %2266 = vmatprep.subr.bf16.mxu0 0
    %2267 = vmatpush1.bf16.msra.mxu0 %v2239
    %2268 = vmatprep.subr.bf16.mxu0 0
    %2269 = vmatpush1.bf16.msra.mxu0 %v2238
    %2270 = vmatprep.subr.bf16.mxu0 0
    %2271 = vmatpush2.bf16.msra.mxu0 0
    %2272 = vmatprep.subr.bf16.mxu0 0
    %2273 = vmatpush2.bf16.msra.mxu0 0
    %2274 = vmatprep.subr.bf16.mxu0 0
    %2275 = vmatpush2.bf16.msra.mxu0 0
    %2276 = vmatprep.subr.bf16.mxu0 0
    %2277 = vmatpush2.bf16.msra.mxu0 0
    %2278 = vmatprep.subr.bf16.mxu0 0
    %2279 = vmatpush2.bf16.msra.mxu0 0
    %2280 = vmatprep.subr.bf16.mxu0 0
    %2281 = vmatpush2.bf16.msra.mxu0 0
    %2282 = vmatprep.subr.bf16.mxu0 0
    %2283 = vmatpush2.bf16.msra.mxu0 0
    %2284 = vmatprep.subr.bf16.mxu0 0
    %2285 = vmatpush2.bf16.msra.mxu0 0
    %2286 = vmatprep.mubr.bf16.mxu0 0
    %2287 = vmatmul.mubr.bf16.gmra.mxu0 %v2243
    %v2288 = vpop.f32.mrf.mxu0
    %v2289 = vadd.f32 %v2228, %v2288
    %v2290 = vpop.f32.mrf.mxu0
    %v2291 = vpop.f32.mrf.mxu0
    %v2292 = vadd.f32 %v2228, %v2291
    %v2293 = vpop.f32.mrf.mxu0
    %2294 = vmatprep.mubr.bf16.mxu0 0
    %2295 = vmatmul.mubr.bf16.gmra.mxu0 %v2246
    %v2296 = vpop.f32.mrf.mxu0
    %v2297 = vadd.f32 %v2228, %v2296
    %v2298 = vpop.f32.mrf.mxu0
    %v2299 = vpop.f32.mrf.mxu0
    %v2300 = vadd.f32 %v2228, %v2299
    %v2301 = vpop.f32.mrf.mxu0
    %2302 = vmatprep.mubr.bf16.mxu0 0
    %2303 = vmatmul.mubr.bf16.gmra.mxu0 %v2249
    %v2304 = vpop.f32.mrf.mxu0
    %v2305 = vadd.f32 %v2228, %v2304
    %v2306 = vpop.f32.mrf.mxu0
    %v2307 = vpop.f32.mrf.mxu0
    %v2308 = vadd.f32 %v2228, %v2307
    %v2309 = vpop.f32.mrf.mxu0
    %2310 = vmatprep.mubr.bf16.mxu0 0
    %2311 = vmatmul.mubr.bf16.gmra.mxu0 %v2252
    %v2312 = vpop.f32.mrf.mxu0
    %v2313 = vadd.f32 %v2228, %v2312
    %v2314 = vpop.f32.mrf.mxu0
    %v2315 = vpop.f32.mrf.mxu0
    %v2316 = vadd.f32 %v2228, %v2315
    %v2317 = vpop.f32.mrf.mxu0
    %2318 = vdwg.mxu0
    %vm2319 = vcmask 64512
    %2320 = vst.msk [vmem:[#allocation9] sm:$0xff] %vm2319, %v2289
    %2321 = vst.msk [vmem:[#allocation9 + $0x8] sm:$0xff] %vm2319, %v2292
    %2322 = vst.msk [vmem:[#allocation9 + $0x10] sm:$0xff] %vm2319, %v2297
    %2323 = vst.msk [vmem:[#allocation9 + $0x18] sm:$0xff] %vm2319, %v2300
    %2324 = vst.msk [vmem:[#allocation9 + $0x20] sm:$0xff] %vm2319, %v2305
    %2325 = vst.msk [vmem:[#allocation9 + $0x28] sm:$0xff] %vm2319, %v2308
    %2326 = vst.msk [vmem:[#allocation9 + $0x30] sm:$0xff] %vm2319, %v2313
    %2327 = vst.msk [vmem:[#allocation9 + $0x38] sm:$0xff] %vm2319, %v2316
    // Predicated region
    $region46: #{tpu_custom_call.1} parent=1 // pred_check
      _
    $region47: #{tpu_custom_call.1} parent=1 // pred_check_branch
      %2329 = sbr.rel (0) target = $region49
    $region48: #{tpu_custom_call.1} parent=1 // pred_region
      %s2331 = ssub.s32 1024, 1024
      %2332 = vsyncadd [#allocation5], %s2331
      %s2333 = sshll.u32 [#allocation9], 4
      %s2334 = int_to_ptr.vmem [resolvable:$true] %s2333
      %2339 = dma.vmem_to_hbm [thread:$0]  %s2334, 1024, %s8, [#allocation5], 128, 128, 8
    $region49: #{tpu_custom_call.1} parent=1 // pred_fallthru
      _
    // Predicated region
    $region50: #{tpu_custom_call.1} parent=1 // pred_check
      _
    $region51: #{tpu_custom_call.1} parent=1 // pred_check_branch
      %2341 = sbr.rel (0) target = $region53
    $region52: #{tpu_custom_call.1} parent=1 // pred_region
      %2342 = dma.done [#allocation5], 1024
    $region53: #{tpu_custom_call.1} parent=1 // pred_fallthru
      _
    %2343 = vsyncpa [#allocation4], 1
    %2344 = vsyncpa [#allocation7], 1
    %2345 = vsyncpa [#allocation5], 1

</llo_original>
